<compile_context>
chip_gen: v7x
topology: tpu7x:2x2x1
jax: 0.10.0
libtpu: 0.0.40
codegen_flags: <defaults>
</compile_context>

<pallas_src>
import math
import functools

import numpy as np
import jax
import jax.numpy as jnp
from jax.experimental import pallas as pl
from jax.experimental.pallas import tpu as pltpu


def _round_up(x, m):
    return (x + m - 1) // m * m


def _vmem_capacity_bytes():
    try:
        return int(pltpu.get_tpu_info().vmem_capacity_bytes)
    except Exception:
        return 64 * 1024 * 1024            # conservative (v7x-sized) fallback


def _elementwise_dtype():
    """bf16 elementwise where the VPU supports it (v6e/v7x), f32 elsewhere."""
    try:
        kind = jax.devices()[0].device_kind.lower()
    except Exception:
        return jnp.float32
    if ("v6" in kind) or ("v7" in kind) or ("tpu7" in kind):
        return jnp.bfloat16
    return jnp.float32


# --------------------------------------------------------------------------
# Pallas kernel: one (batch, output-row-tile) per grid step.
#   x_ref : (1, Hx, C, Wx)   bf16  spatially padded image, resident per batch
#   k_ref : (1, K, TP)       bf16  adaptive kernel tile (flat spatial, K=kh*kw)
#   w_ref : (O_p, K*C)       bf16  conv weight, k-major / c-minor
#   b_ref : (O_p, 1)         f32   bias
#   o_ref : (1, O_p, TP)     bf16  output tile (flat spatial)
#   cols_ref : (K*C, TP)     bf16  scratch holding the fused im2col columns
# --------------------------------------------------------------------------
def _pacconv2d_kernel(x_ref, k_ref, w_ref, b_ref, o_ref, cols_ref, *,
                      C, kh, kw, dil, TH, WOP, ew_dtype):
    K = kh * kw
    p = pl.program_id(1)
    r0 = p * TH                         # first output row of this tile
    IH = TH + dil * (kh - 1)            # halo'd input rows needed by the tile

    # ---- fused im2col ----------------------------------------------------
    # Scatter shifted row segments of the resident padded image into the flat
    # (K*C, TH*WOP) column scratch.  Only static-offset VMEM stores are used;
    # the flat lane index is t*WOP + w, matching the flat kernel/output tiles.
    for r in range(IH):
        row = x_ref[0, r0 + r]                                  # (C, Wx)
        for j in range(kw):
            seg = row[:, j * dil:j * dil + WOP]                 # (C, WOP)
            for i in range(kh):
                t = r - i * dil
                if 0 <= t < TH:
                    k = i * kw + j
                    cols_ref[k * C:(k + 1) * C,
                             t * WOP:(t + 1) * WOP] = seg

    # ---- pixel-adaptive reweighting ---------------------------------------
    # in_mul_k  = cols_k * kernel_k              (elementwise, ew_dtype)
    # dominate  = sum_K(in_mul) * recip(sum_K(kernel))     (f32 sums, EUP recip)
    # corrected = in_mul_k + dominate * (1 - kernel_k)
    in_mul = []
    kvals = []
    s_num = None                                                # (C, TP) f32
    s_den = None                                                # (1, TP) f32
    for k in range(K):
        kk = k_ref[0, k:k + 1, :].astype(ew_dtype)              # (1, TP)
        m = cols_ref[k * C:(k + 1) * C, :].astype(ew_dtype) * kk
        in_mul.append(m)
        kvals.append(kk)
        mf = m.astype(jnp.float32)
        kf = kk.astype(jnp.float32)
        s_num = mf if s_num is None else s_num + mf
        s_den = kf if s_den is None else s_den + kf

    inv_den = pl.reciprocal(s_den, approx=True)                 # EUP, ~free
    dominate = (s_num * inv_den).astype(ew_dtype)               # (C, TP)

    # write the corrected columns back into the scratch (all reads above are
    # ordered before these writes), assembling the (K*C, TP) dot RHS in place
    for k in range(K):
        corr = in_mul[k] + dominate * (1.0 - kvals[k])          # (C, TP)
        cols_ref[k * C:(k + 1) * C, :] = corr.astype(cols_ref.dtype)

    # ---- single MXU dot over the fused (K*C) contraction, f32 accumulation
    acc = jnp.dot(w_ref[...], cols_ref[...],
                  preferred_element_type=jnp.float32)           # (O_p, TP)
    o_ref[0] = (acc + b_ref[...]).astype(o_ref.dtype)


def _choose_tile_rows(C, K, O_p, Ho, WOP, kh, kw, dil):
    """Pick TH (output rows per tile, multiple of 8) against a generation-aware
    VMEM budget, capped so Hop padding waste and unroll depth stay bounded."""
    cap = _vmem_capacity_bytes()
    budget = max(cap // 4, 8 * 1024 * 1024)
    max_th = max(_round_up(Ho, 8), 8)
    best = 8
    for th in (8, 16, 24, 32):                 # cap unroll (K*TH scatter stores)
        if th > max_th:
            break
        tp = th * WOP
        hx = _round_up(Ho, th) + dil * (kh - 1)
        wx = WOP + dil * (kw - 1)
        need = (2 * hx * C * wx * 2            # resident bf16 image (2 buffers)
                + 2 * K * tp * 2               # adaptive-kernel tiles (bf16)
                + 2 * O_p * tp * 2             # output tiles (bf16)
                + K * C * tp * 2               # im2col scratch (bf16)
                + 4 * K * C * tp * 4)          # generous headroom for live temps
        if need <= budget:
            best = th
    return best


# --------------------------------------------------------------------------
# Full PacConv2d forward (thin glue + fused Pallas hot path)
# --------------------------------------------------------------------------
def pacconv2d_forward(input_2d, kernel, weight, bias=None, stride=1, padding=0,
                      dilation=1):
    N, C, H, W = input_2d.shape
    O, _, kh, kw = weight.shape
    if stride != 1:
        # TODO(synk): general stride via strided in-kernel row/column slices.
        raise NotImplementedError("Pallas PacConv2d path currently supports stride=1")
    d = int(dilation)
    pad = int(padding)
    K = kh * kw
    Ho = H + 2 * pad - d * (kh - 1)
    Wo = W + 2 * pad - d * (kw - 1)

    ew_dtype = _elementwise_dtype()
    O_p = _round_up(O, 8)                  # sublane-aligned output channels
    WOP = _round_up(Wo, 16)                # TH(%8)*WOP(%16) -> TP % 128 == 0
    TH = _choose_tile_rows(C, K, O_p, Ho, WOP, kh, kw, d)
    Hop = _round_up(Ho, TH)
    TP = TH * WOP
    Pp = Hop * WOP

    # --- glue (single pass each, bf16 first) -------------------------------
    # padded image, channels moved after rows so the in-kernel dynamic row
    # index lands on a leading (untiled) dim:  (N, Hx, C, Wx)
    Hx = Hop + d * (kh - 1)
    Wx = WOP + d * (kw - 1)
    xq = input_2d.astype(jnp.bfloat16).transpose(0, 2, 1, 3)        # (N,H,C,W)
    xq = jnp.pad(xq, ((0, 0), (pad, Hx - H - pad), (0, 0), (pad, Wx - W - pad)))

    # adaptive kernel, K kept at kh*kw (no 9->16 pad in HBM); pad spatial
    # region with 1.0 so padded lanes never divide by zero (cropped later)
    kq = kernel.astype(jnp.bfloat16).reshape(N, K, Ho, Wo)
    kq = jnp.pad(kq, ((0, 0), (0, 0), (0, Hop - Ho), (0, WOP - Wo)),
                 constant_values=1.0)
    kq = kq.reshape(N, K, Pp)

    # weight laid out k-major / c-minor to match the in-kernel column order
    w2 = weight.reshape(O, C, K).transpose(0, 2, 1).reshape(O, K * C)
    w2 = jnp.pad(w2, ((0, O_p - O), (0, 0))).astype(jnp.bfloat16)
    if bias is None:
        bias = jnp.zeros((O,), jnp.float32)
    b2 = jnp.pad(bias.astype(jnp.float32), (0, O_p - O)).reshape(O_p, 1)

    cap = _vmem_capacity_bytes()
    vmem_limit = int(min(max(cap * 3 // 4, 32 * 1024 * 1024), 96 * 1024 * 1024))

    kernel_fn = functools.partial(_pacconv2d_kernel, C=C, kh=kh, kw=kw, dil=d,
                                  TH=TH, WOP=WOP, ew_dtype=ew_dtype)

    out = pl.pallas_call(
        kernel_fn,
        out_shape=jax.ShapeDtypeStruct((N, O_p, Pp), jnp.bfloat16),
        grid_spec=pltpu.PrefetchScalarGridSpec(
            num_scalar_prefetch=0,
            grid=(N, Hop // TH),
            in_specs=[
                # padded image: block index ignores the row-tile axis, so the
                # image is DMA'd once per batch and stays VMEM-resident
                pl.BlockSpec((1, Hx, C, Wx), lambda n, p: (n, 0, 0, 0)),
                pl.BlockSpec((1, K, TP), lambda n, p: (n, 0, p)),
                pl.BlockSpec((O_p, K * C), lambda n, p: (0, 0)),
                pl.BlockSpec((O_p, 1), lambda n, p: (0, 0)),
            ],
            out_specs=pl.BlockSpec((1, O_p, TP), lambda n, p: (n, 0, p)),
            scratch_shapes=[pltpu.VMEM((K * C, TP), jnp.bfloat16)],
        ),
        compiler_params=pltpu.CompilerParams(
            dimension_semantics=("parallel", "parallel"),
            vmem_limit_bytes=vmem_limit),
    )(xq, kq, w2, b2)

    out = out.reshape(N, O_p, Hop, WOP)[:, :O, :Ho, :Wo]
    return out.astype(input_2d.dtype)


# --------------------------------------------------------------------------
# Pure-JAX f32 reference (mirrors pacconv2d_my from the PyTorch module).
# --------------------------------------------------------------------------
def unfold_nchw(x, kh, kw, stride, padding, dilation):
    N, C, H, W = x.shape
    Ho = (H + 2 * padding - dilation * (kh - 1) - 1) // stride + 1
    Wo = (W + 2 * padding - dilation * (kw - 1) - 1) // stride + 1
    xp = jnp.pad(x, ((0, 0), (0, 0), (padding, padding), (padding, padding)))
    patches = []
    for i in range(kh):
        for j in range(kw):
            hs = i * dilation
            ws = j * dilation
            patch = xp[:, :,
                       hs:hs + (Ho - 1) * stride + 1:stride,
                       ws:ws + (Wo - 1) * stride + 1:stride]
            patches.append(patch)
    cols = jnp.stack(patches, axis=2)                   # (N, C, K, Ho, Wo)
    return cols.reshape(N, C, kh, kw, Ho, Wo), Ho, Wo


def pacconv2d_reference(input_2d, kernel, weight, bias, stride=1, padding=0,
                        dilation=1):
    O, _, kh, kw = weight.shape
    cols, Ho, Wo = unfold_nchw(input_2d, kh, kw, stride, padding, dilation)
    in_mul_k = cols * kernel                            # (N,C,kh,kw,Ho,Wo)
    dominate = in_mul_k.sum(axis=(2, 3)) / kernel.sum(axis=(2, 3))
    corrected = in_mul_k + dominate[:, :, None, None] * (1.0 - kernel)
    out = jnp.einsum('ijklmn,ojkl->iomn', corrected, weight)
    return out + bias[None, :, None, None]


if __name__ == "__main__":
    # Module config: PacConv2d(in_channels=4, out_channels=8, kernel_size=3,
    #                          stride=1, padding=1, bias=True, filler='uniform')
    N, C_in, C_out = 2, 4, 8
    kh = kw = 3
    stride, padding, dilation = 1, 1, 1
    H = W = 16

    key = jax.random.PRNGKey(0)
    k_x, k_kern, k_w, k_b = jax.random.split(key, 4)

    # Deterministic "uniform" filler init (same distribution as reset_parameters).
    stdv = 1.0 / math.sqrt(C_in * kh * kw)
    weight = jax.random.uniform(k_w, (C_out, C_in, kh, kw), jnp.float32,
                                minval=-stdv, maxval=stdv)
    bias = jax.random.uniform(k_b, (C_out,), jnp.float32,
                              minval=-stdv, maxval=stdv)

    # Inputs: image + precomputed adaptive kernel (positive, as EdgeKernel2d /
    # gaussian kernels would produce).
    x = jax.random.normal(k_x, (N, C_in, H, W), jnp.float32)
    Ho = (H + 2 * padding - dilation * (kh - 1) - 1) // stride + 1
    Wo = (W + 2 * padding - dilation * (kw - 1) - 1) // stride + 1
    kernel = jax.random.uniform(k_kern, (N, 1, kh, kw, Ho, Wo), jnp.float32,
                                minval=0.1, maxval=1.0)

    out = pacconv2d_forward(x, kernel, weight, bias, stride, padding, dilation)
    out = jax.block_until_ready(out)

    ref = pacconv2d_reference(x, kernel, weight, bias, stride, padding, dilation)
    ref = jax.block_until_ready(ref)

    assert out.shape == (N, C_out, Ho, Wo), out.shape
    # Tolerance loosened vs the f32 reference: bf16 inputs / elementwise /
    # output plus approximate reciprocal (MXU accumulation stays f32).
    np.testing.assert_allclose(np.asarray(out), np.asarray(ref),
                               rtol=2e-2, atol=2e-2)
    print("KERNEL_OK")
</pallas_src>

<mosaic_0001>
module attributes {stable_mosaic.version = 11 : i64} {
  func.func @_pacconv2d_kernel(%arg0: i32, %arg1: i32, %arg2: memref<1x18x4x18xbf16, #tpu.memory_space<vmem>>, %arg3: memref<1x9x256xbf16, #tpu.memory_space<vmem>>, %arg4: memref<8x36xbf16, #tpu.memory_space<vmem>>, %arg5: memref<8x1xf32, #tpu.memory_space<vmem>>, %arg6: memref<1x8x256xbf16, #tpu.memory_space<vmem>>, %arg7: memref<36x256xbf16, #tpu.memory_space<vmem>>) attributes {dimension_semantics = [#tpu.dimension_semantics<parallel>, #tpu.dimension_semantics<parallel>], iteration_bounds = array<i64: 2, 1>, scalar_prefetch = 0 : i64, scratch_operands = 1 : i64, tpu.core_type = #tpu.core_type<tc>, window_params = [{transform_indices = @transform_0, window_bounds = array<i64: 1, 18, 4, 18>}, {transform_indices = @transform_1, window_bounds = array<i64: 1, 9, 256>}, {pipeline_mode = #tpu.pipeline_mode<synchronous>, transform_indices = @transform_2, window_bounds = array<i64: 8, 36>}, {pipeline_mode = #tpu.pipeline_mode<synchronous>, transform_indices = @transform_3, window_bounds = array<i64: 8, 1>}, {transform_indices = @transform_4, window_bounds = array<i64: 1, 8, 256>}]} {
    %c16_i32 = arith.constant 16 : i32
    %0 = arith.muli %arg1, %c16_i32 : i32
    %c0_i32 = arith.constant 0 : i32
    %1 = arith.addi %0, %c0_i32 : i32
    %c0 = arith.constant 0 : index
    %2 = arith.index_cast %1 : i32 to index
    %c0_0 = arith.constant 0 : index
    %c0_1 = arith.constant 0 : index
    %3 = vector.load %arg2[%c0, %2, %c0_0, %c0_1] : memref<1x18x4x18xbf16, #tpu.memory_space<vmem>>, vector<1x1x4x18xbf16>
    %4 = vector.shape_cast %3 : vector<1x1x4x18xbf16> to vector<4x18xbf16>
    %5 = vector.extract_strided_slice %4 {offsets = [0, 0], sizes = [4, 16], strides = [1, 1]} : vector<4x18xbf16> to vector<4x16xbf16>
    %c0_2 = arith.constant 0 : index
    %c0_3 = arith.constant 0 : index
    %6 = vector.load %arg7[%c0_2, %c0_3] : memref<36x256xbf16, #tpu.memory_space<vmem>>, vector<4x16xbf16>
    tpu.vector_store %arg7[%c0_2, %c0_3], %5 {strides = array<i32>} : memref<36x256xbf16, #tpu.memory_space<vmem>>, vector<4x16xbf16>,
    %7 = vector.extract_strided_slice %4 {offsets = [0, 1], sizes = [4, 16], strides = [1, 1]} : vector<4x18xbf16> to vector<4x16xbf16>
    %c4 = arith.constant 4 : index
    %c0_4 = arith.constant 0 : index
    %8 = vector.load %arg7[%c4, %c0_4] : memref<36x256xbf16, #tpu.memory_space<vmem>>, vector<4x16xbf16>
    tpu.vector_store %arg7[%c4, %c0_4], %7 {strides = array<i32>} : memref<36x256xbf16, #tpu.memory_space<vmem>>, vector<4x16xbf16>,
    %9 = vector.extract_strided_slice %4 {offsets = [0, 2], sizes = [4, 16], strides = [1, 1]} : vector<4x18xbf16> to vector<4x16xbf16>
    %c8 = arith.constant 8 : index
    %c0_5 = arith.constant 0 : index
    %10 = vector.load %arg7[%c8, %c0_5] : memref<36x256xbf16, #tpu.memory_space<vmem>>, vector<4x16xbf16>
    tpu.vector_store %arg7[%c8, %c0_5], %9 {strides = array<i32>} : memref<36x256xbf16, #tpu.memory_space<vmem>>, vector<4x16xbf16>,
    %c1_i32 = arith.constant 1 : i32
    %11 = arith.addi %0, %c1_i32 : i32
    %c0_6 = arith.constant 0 : index
    %12 = arith.index_cast %11 : i32 to index
    %c0_7 = arith.constant 0 : index
    %c0_8 = arith.constant 0 : index
    %13 = vector.load %arg2[%c0_6, %12, %c0_7, %c0_8] : memref<1x18x4x18xbf16, #tpu.memory_space<vmem>>, vector<1x1x4x18xbf16>
    %14 = vector.shape_cast %13 : vector<1x1x4x18xbf16> to vector<4x18xbf16>
    %15 = vector.extract_strided_slice %14 {offsets = [0, 0], sizes = [4, 16], strides = [1, 1]} : vector<4x18xbf16> to vector<4x16xbf16>
    %c0_9 = arith.constant 0 : index
    %c16 = arith.constant 16 : index
    %16 = vector.load %arg7[%c0_9, %c16] : memref<36x256xbf16, #tpu.memory_space<vmem>>, vector<4x16xbf16>
    tpu.vector_store %arg7[%c0_9, %c16], %15 {strides = array<i32>} : memref<36x256xbf16, #tpu.memory_space<vmem>>, vector<4x16xbf16>,
    %c12 = arith.constant 12 : index
    %c0_10 = arith.constant 0 : index
    %17 = vector.load %arg7[%c12, %c0_10] : memref<36x256xbf16, #tpu.memory_space<vmem>>, vector<4x16xbf16>
    tpu.vector_store %arg7[%c12, %c0_10], %15 {strides = array<i32>} : memref<36x256xbf16, #tpu.memory_space<vmem>>, vector<4x16xbf16>,
    %18 = vector.extract_strided_slice %14 {offsets = [0, 1], sizes = [4, 16], strides = [1, 1]} : vector<4x18xbf16> to vector<4x16xbf16>
    %c4_11 = arith.constant 4 : index
    %c16_12 = arith.constant 16 : index
    %19 = vector.load %arg7[%c4_11, %c16_12] : memref<36x256xbf16, #tpu.memory_space<vmem>>, vector<4x16xbf16>
    tpu.vector_store %arg7[%c4_11, %c16_12], %18 {strides = array<i32>} : memref<36x256xbf16, #tpu.memory_space<vmem>>, vector<4x16xbf16>,
    %c16_13 = arith.constant 16 : index
    %c0_14 = arith.constant 0 : index
    %20 = vector.load %arg7[%c16_13, %c0_14] : memref<36x256xbf16, #tpu.memory_space<vmem>>, vector<4x16xbf16>
    tpu.vector_store %arg7[%c16_13, %c0_14], %18 {strides = array<i32>} : memref<36x256xbf16, #tpu.memory_space<vmem>>, vector<4x16xbf16>,
    %21 = vector.extract_strided_slice %14 {offsets = [0, 2], sizes = [4, 16], strides = [1, 1]} : vector<4x18xbf16> to vector<4x16xbf16>
    %c8_15 = arith.constant 8 : index
    %c16_16 = arith.constant 16 : index
    %22 = vector.load %arg7[%c8_15, %c16_16] : memref<36x256xbf16, #tpu.memory_space<vmem>>, vector<4x16xbf16>
    tpu.vector_store %arg7[%c8_15, %c16_16], %21 {strides = array<i32>} : memref<36x256xbf16, #tpu.memory_space<vmem>>, vector<4x16xbf16>,
    %c20 = arith.constant 20 : index
    %c0_17 = arith.constant 0 : index
    %23 = vector.load %arg7[%c20, %c0_17] : memref<36x256xbf16, #tpu.memory_space<vmem>>, vector<4x16xbf16>
    tpu.vector_store %arg7[%c20, %c0_17], %21 {strides = array<i32>} : memref<36x256xbf16, #tpu.memory_space<vmem>>, vector<4x16xbf16>,
    %c2_i32 = arith.constant 2 : i32
    %24 = arith.addi %0, %c2_i32 : i32
    %c0_18 = arith.constant 0 : index
    %25 = arith.index_cast %24 : i32 to index
    %c0_19 = arith.constant 0 : index
    %c0_20 = arith.constant 0 : index
    %26 = vector.load %arg2[%c0_18, %25, %c0_19, %c0_20] : memref<1x18x4x18xbf16, #tpu.memory_space<vmem>>, vector<1x1x4x18xbf16>
    %27 = vector.shape_cast %26 : vector<1x1x4x18xbf16> to vector<4x18xbf16>
    %28 = vector.extract_strided_slice %27 {offsets = [0, 0], sizes = [4, 16], strides = [1, 1]} : vector<4x18xbf16> to vector<4x16xbf16>
    %c0_21 = arith.constant 0 : index
    %c32 = arith.constant 32 : index
    %29 = vector.load %arg7[%c0_21, %c32] : memref<36x256xbf16, #tpu.memory_space<vmem>>, vector<4x16xbf16>
    tpu.vector_store %arg7[%c0_21, %c32], %28 {strides = array<i32>} : memref<36x256xbf16, #tpu.memory_space<vmem>>, vector<4x16xbf16>,
    %c12_22 = arith.constant 12 : index
    %c16_23 = arith.constant 16 : index
    %30 = vector.load %arg7[%c12_22, %c16_23] : memref<36x256xbf16, #tpu.memory_space<vmem>>, vector<4x16xbf16>
    tpu.vector_store %arg7[%c12_22, %c16_23], %28 {strides = array<i32>} : memref<36x256xbf16, #tpu.memory_space<vmem>>, vector<4x16xbf16>,
    %c24 = arith.constant 24 : index
    %c0_24 = arith.constant 0 : index
    %31 = vector.load %arg7[%c24, %c0_24] : memref<36x256xbf16, #tpu.memory_space<vmem>>, vector<4x16xbf16>
    tpu.vector_store %arg7[%c24, %c0_24], %28 {strides = array<i32>} : memref<36x256xbf16, #tpu.memory_space<vmem>>, vector<4x16xbf16>,
    %32 = vector.extract_strided_slice %27 {offsets = [0, 1], sizes = [4, 16], strides = [1, 1]} : vector<4x18xbf16> to vector<4x16xbf16>
    %c4_25 = arith.constant 4 : index
    %c32_26 = arith.constant 32 : index
    %33 = vector.load %arg7[%c4_25, %c32_26] : memref<36x256xbf16, #tpu.memory_space<vmem>>, vector<4x16xbf16>
    tpu.vector_store %arg7[%c4_25, %c32_26], %32 {strides = array<i32>} : memref<36x256xbf16, #tpu.memory_space<vmem>>, vector<4x16xbf16>,
    %c16_27 = arith.constant 16 : index
    %c16_28 = arith.constant 16 : index
    %34 = vector.load %arg7[%c16_27, %c16_28] : memref<36x256xbf16, #tpu.memory_space<vmem>>, vector<4x16xbf16>
    tpu.vector_store %arg7[%c16_27, %c16_28], %32 {strides = array<i32>} : memref<36x256xbf16, #tpu.memory_space<vmem>>, vector<4x16xbf16>,
    %c28 = arith.constant 28 : index
    %c0_29 = arith.constant 0 : index
    %35 = vector.load %arg7[%c28, %c0_29] : memref<36x256xbf16, #tpu.memory_space<vmem>>, vector<4x16xbf16>
    tpu.vector_store %arg7[%c28, %c0_29], %32 {strides = array<i32>} : memref<36x256xbf16, #tpu.memory_space<vmem>>, vector<4x16xbf16>,
    %36 = vector.extract_strided_slice %27 {offsets = [0, 2], sizes = [4, 16], strides = [1, 1]} : vector<4x18xbf16> to vector<4x16xbf16>
    %c8_30 = arith.constant 8 : index
    %c32_31 = arith.constant 32 : index
    %37 = vector.load %arg7[%c8_30, %c32_31] : memref<36x256xbf16, #tpu.memory_space<vmem>>, vector<4x16xbf16>
    tpu.vector_store %arg7[%c8_30, %c32_31], %36 {strides = array<i32>} : memref<36x256xbf16, #tpu.memory_space<vmem>>, vector<4x16xbf16>,
    %c20_32 = arith.constant 20 : index
    %c16_33 = arith.constant 16 : index
    %38 = vector.load %arg7[%c20_32, %c16_33] : memref<36x256xbf16, #tpu.memory_space<vmem>>, vector<4x16xbf16>
    tpu.vector_store %arg7[%c20_32, %c16_33], %36 {strides = array<i32>} : memref<36x256xbf16, #tpu.memory_space<vmem>>, vector<4x16xbf16>,
    %c32_34 = arith.constant 32 : index
    %c0_35 = arith.constant 0 : index
    %39 = vector.load %arg7[%c32_34, %c0_35] : memref<36x256xbf16, #tpu.memory_space<vmem>>, vector<4x16xbf16>
    tpu.vector_store %arg7[%c32_34, %c0_35], %36 {strides = array<i32>} : memref<36x256xbf16, #tpu.memory_space<vmem>>, vector<4x16xbf16>,
    %c3_i32 = arith.constant 3 : i32
    %40 = arith.addi %0, %c3_i32 : i32
    %c0_36 = arith.constant 0 : index
    %41 = arith.index_cast %40 : i32 to index
    %c0_37 = arith.constant 0 : index
    %c0_38 = arith.constant 0 : index
    %42 = vector.load %arg2[%c0_36, %41, %c0_37, %c0_38] : memref<1x18x4x18xbf16, #tpu.memory_space<vmem>>, vector<1x1x4x18xbf16>
    %43 = vector.shape_cast %42 : vector<1x1x4x18xbf16> to vector<4x18xbf16>
    %44 = vector.extract_strided_slice %43 {offsets = [0, 0], sizes = [4, 16], strides = [1, 1]} : vector<4x18xbf16> to vector<4x16xbf16>
    %c0_39 = arith.constant 0 : index
    %c48 = arith.constant 48 : index
    %45 = vector.load %arg7[%c0_39, %c48] : memref<36x256xbf16, #tpu.memory_space<vmem>>, vector<4x16xbf16>
    tpu.vector_store %arg7[%c0_39, %c48], %44 {strides = array<i32>} : memref<36x256xbf16, #tpu.memory_space<vmem>>, vector<4x16xbf16>,
    %c12_40 = arith.constant 12 : index
    %c32_41 = arith.constant 32 : index
    %46 = vector.load %arg7[%c12_40, %c32_41] : memref<36x256xbf16, #tpu.memory_space<vmem>>, vector<4x16xbf16>
    tpu.vector_store %arg7[%c12_40, %c32_41], %44 {strides = array<i32>} : memref<36x256xbf16, #tpu.memory_space<vmem>>, vector<4x16xbf16>,
    %c24_42 = arith.constant 24 : index
    %c16_43 = arith.constant 16 : index
    %47 = vector.load %arg7[%c24_42, %c16_43] : memref<36x256xbf16, #tpu.memory_space<vmem>>, vector<4x16xbf16>
    tpu.vector_store %arg7[%c24_42, %c16_43], %44 {strides = array<i32>} : memref<36x256xbf16, #tpu.memory_space<vmem>>, vector<4x16xbf16>,
    %48 = vector.extract_strided_slice %43 {offsets = [0, 1], sizes = [4, 16], strides = [1, 1]} : vector<4x18xbf16> to vector<4x16xbf16>
    %c4_44 = arith.constant 4 : index
    %c48_45 = arith.constant 48 : index
    %49 = vector.load %arg7[%c4_44, %c48_45] : memref<36x256xbf16, #tpu.memory_space<vmem>>, vector<4x16xbf16>
    tpu.vector_store %arg7[%c4_44, %c48_45], %48 {strides = array<i32>} : memref<36x256xbf16, #tpu.memory_space<vmem>>, vector<4x16xbf16>,
    %c16_46 = arith.constant 16 : index
    %c32_47 = arith.constant 32 : index
    %50 = vector.load %arg7[%c16_46, %c32_47] : memref<36x256xbf16, #tpu.memory_space<vmem>>, vector<4x16xbf16>
    tpu.vector_store %arg7[%c16_46, %c32_47], %48 {strides = array<i32>} : memref<36x256xbf16, #tpu.memory_space<vmem>>, vector<4x16xbf16>,
    %c28_48 = arith.constant 28 : index
    %c16_49 = arith.constant 16 : index
    %51 = vector.load %arg7[%c28_48, %c16_49] : memref<36x256xbf16, #tpu.memory_space<vmem>>, vector<4x16xbf16>
    tpu.vector_store %arg7[%c28_48, %c16_49], %48 {strides = array<i32>} : memref<36x256xbf16, #tpu.memory_space<vmem>>, vector<4x16xbf16>,
    %52 = vector.extract_strided_slice %43 {offsets = [0, 2], sizes = [4, 16], strides = [1, 1]} : vector<4x18xbf16> to vector<4x16xbf16>
    %c8_50 = arith.constant 8 : index
    %c48_51 = arith.constant 48 : index
    %53 = vector.load %arg7[%c8_50, %c48_51] : memref<36x256xbf16, #tpu.memory_space<vmem>>, vector<4x16xbf16>
    tpu.vector_store %arg7[%c8_50, %c48_51], %52 {strides = array<i32>} : memref<36x256xbf16, #tpu.memory_space<vmem>>, vector<4x16xbf16>,
    %c20_52 = arith.constant 20 : index
    %c32_53 = arith.constant 32 : index
    %54 = vector.load %arg7[%c20_52, %c32_53] : memref<36x256xbf16, #tpu.memory_space<vmem>>, vector<4x16xbf16>
    tpu.vector_store %arg7[%c20_52, %c32_53], %52 {strides = array<i32>} : memref<36x256xbf16, #tpu.memory_space<vmem>>, vector<4x16xbf16>,
    %c32_54 = arith.constant 32 : index
    %c16_55 = arith.constant 16 : index
    %55 = vector.load %arg7[%c32_54, %c16_55] : memref<36x256xbf16, #tpu.memory_space<vmem>>, vector<4x16xbf16>
    tpu.vector_store %arg7[%c32_54, %c16_55], %52 {strides = array<i32>} : memref<36x256xbf16, #tpu.memory_space<vmem>>, vector<4x16xbf16>,
    %c4_i32 = arith.constant 4 : i32
    %56 = arith.addi %0, %c4_i32 : i32
    %c0_56 = arith.constant 0 : index
    %57 = arith.index_cast %56 : i32 to index
    %c0_57 = arith.constant 0 : index
    %c0_58 = arith.constant 0 : index
    %58 = vector.load %arg2[%c0_56, %57, %c0_57, %c0_58] : memref<1x18x4x18xbf16, #tpu.memory_space<vmem>>, vector<1x1x4x18xbf16>
    %59 = vector.shape_cast %58 : vector<1x1x4x18xbf16> to vector<4x18xbf16>
    %60 = vector.extract_strided_slice %59 {offsets = [0, 0], sizes = [4, 16], strides = [1, 1]} : vector<4x18xbf16> to vector<4x16xbf16>
    %c0_59 = arith.constant 0 : index
    %c64 = arith.constant 64 : index
    %61 = vector.load %arg7[%c0_59, %c64] : memref<36x256xbf16, #tpu.memory_space<vmem>>, vector<4x16xbf16>
    tpu.vector_store %arg7[%c0_59, %c64], %60 {strides = array<i32>} : memref<36x256xbf16, #tpu.memory_space<vmem>>, vector<4x16xbf16>,
    %c12_60 = arith.constant 12 : index
    %c48_61 = arith.constant 48 : index
    %62 = vector.load %arg7[%c12_60, %c48_61] : memref<36x256xbf16, #tpu.memory_space<vmem>>, vector<4x16xbf16>
    tpu.vector_store %arg7[%c12_60, %c48_61], %60 {strides = array<i32>} : memref<36x256xbf16, #tpu.memory_space<vmem>>, vector<4x16xbf16>,
    %c24_62 = arith.constant 24 : index
    %c32_63 = arith.constant 32 : index
    %63 = vector.load %arg7[%c24_62, %c32_63] : memref<36x256xbf16, #tpu.memory_space<vmem>>, vector<4x16xbf16>
    tpu.vector_store %arg7[%c24_62, %c32_63], %60 {strides = array<i32>} : memref<36x256xbf16, #tpu.memory_space<vmem>>, vector<4x16xbf16>,
    %64 = vector.extract_strided_slice %59 {offsets = [0, 1], sizes = [4, 16], strides = [1, 1]} : vector<4x18xbf16> to vector<4x16xbf16>
    %c4_64 = arith.constant 4 : index
    %c64_65 = arith.constant 64 : index
    %65 = vector.load %arg7[%c4_64, %c64_65] : memref<36x256xbf16, #tpu.memory_space<vmem>>, vector<4x16xbf16>
    tpu.vector_store %arg7[%c4_64, %c64_65], %64 {strides = array<i32>} : memref<36x256xbf16, #tpu.memory_space<vmem>>, vector<4x16xbf16>,
    %c16_66 = arith.constant 16 : index
    %c48_67 = arith.constant 48 : index
    %66 = vector.load %arg7[%c16_66, %c48_67] : memref<36x256xbf16, #tpu.memory_space<vmem>>, vector<4x16xbf16>
    tpu.vector_store %arg7[%c16_66, %c48_67], %64 {strides = array<i32>} : memref<36x256xbf16, #tpu.memory_space<vmem>>, vector<4x16xbf16>,
    %c28_68 = arith.constant 28 : index
    %c32_69 = arith.constant 32 : index
    %67 = vector.load %arg7[%c28_68, %c32_69] : memref<36x256xbf16, #tpu.memory_space<vmem>>, vector<4x16xbf16>
    tpu.vector_store %arg7[%c28_68, %c32_69], %64 {strides = array<i32>} : memref<36x256xbf16, #tpu.memory_space<vmem>>, vector<4x16xbf16>,
    %68 = vector.extract_strided_slice %59 {offsets = [0, 2], sizes = [4, 16], strides = [1, 1]} : vector<4x18xbf16> to vector<4x16xbf16>
    %c8_70 = arith.constant 8 : index
    %c64_71 = arith.constant 64 : index
    %69 = vector.load %arg7[%c8_70, %c64_71] : memref<36x256xbf16, #tpu.memory_space<vmem>>, vector<4x16xbf16>
    tpu.vector_store %arg7[%c8_70, %c64_71], %68 {strides = array<i32>} : memref<36x256xbf16, #tpu.memory_space<vmem>>, vector<4x16xbf16>,
    %c20_72 = arith.constant 20 : index
    %c48_73 = arith.constant 48 : index
    %70 = vector.load %arg7[%c20_72, %c48_73] : memref<36x256xbf16, #tpu.memory_space<vmem>>, vector<4x16xbf16>
    tpu.vector_store %arg7[%c20_72, %c48_73], %68 {strides = array<i32>} : memref<36x256xbf16, #tpu.memory_space<vmem>>, vector<4x16xbf16>,
    %c32_74 = arith.constant 32 : index
    %c32_75 = arith.constant 32 : index
    %71 = vector.load %arg7[%c32_74, %c32_75] : memref<36x256xbf16, #tpu.memory_space<vmem>>, vector<4x16xbf16>
    tpu.vector_store %arg7[%c32_74, %c32_75], %68 {strides = array<i32>} : memref<36x256xbf16, #tpu.memory_space<vmem>>, vector<4x16xbf16>,
    %c5_i32 = arith.constant 5 : i32
    %72 = arith.addi %0, %c5_i32 : i32
    %c0_76 = arith.constant 0 : index
    %73 = arith.index_cast %72 : i32 to index
    %c0_77 = arith.constant 0 : index
    %c0_78 = arith.constant 0 : index
    %74 = vector.load %arg2[%c0_76, %73, %c0_77, %c0_78] : memref<1x18x4x18xbf16, #tpu.memory_space<vmem>>, vector<1x1x4x18xbf16>
    %75 = vector.shape_cast %74 : vector<1x1x4x18xbf16> to vector<4x18xbf16>
    %76 = vector.extract_strided_slice %75 {offsets = [0, 0], sizes = [4, 16], strides = [1, 1]} : vector<4x18xbf16> to vector<4x16xbf16>
    %c0_79 = arith.constant 0 : index
    %c80 = arith.constant 80 : index
    %77 = vector.load %arg7[%c0_79, %c80] : memref<36x256xbf16, #tpu.memory_space<vmem>>, vector<4x16xbf16>
    tpu.vector_store %arg7[%c0_79, %c80], %76 {strides = array<i32>} : memref<36x256xbf16, #tpu.memory_space<vmem>>, vector<4x16xbf16>,
    %c12_80 = arith.constant 12 : index
    %c64_81 = arith.constant 64 : index
    %78 = vector.load %arg7[%c12_80, %c64_81] : memref<36x256xbf16, #tpu.memory_space<vmem>>, vector<4x16xbf16>
    tpu.vector_store %arg7[%c12_80, %c64_81], %76 {strides = array<i32>} : memref<36x256xbf16, #tpu.memory_space<vmem>>, vector<4x16xbf16>,
    %c24_82 = arith.constant 24 : index
    %c48_83 = arith.constant 48 : index
    %79 = vector.load %arg7[%c24_82, %c48_83] : memref<36x256xbf16, #tpu.memory_space<vmem>>, vector<4x16xbf16>
    tpu.vector_store %arg7[%c24_82, %c48_83], %76 {strides = array<i32>} : memref<36x256xbf16, #tpu.memory_space<vmem>>, vector<4x16xbf16>,
    %80 = vector.extract_strided_slice %75 {offsets = [0, 1], sizes = [4, 16], strides = [1, 1]} : vector<4x18xbf16> to vector<4x16xbf16>
    %c4_84 = arith.constant 4 : index
    %c80_85 = arith.constant 80 : index
    %81 = vector.load %arg7[%c4_84, %c80_85] : memref<36x256xbf16, #tpu.memory_space<vmem>>, vector<4x16xbf16>
    tpu.vector_store %arg7[%c4_84, %c80_85], %80 {strides = array<i32>} : memref<36x256xbf16, #tpu.memory_space<vmem>>, vector<4x16xbf16>,
    %c16_86 = arith.constant 16 : index
    %c64_87 = arith.constant 64 : index
    %82 = vector.load %arg7[%c16_86, %c64_87] : memref<36x256xbf16, #tpu.memory_space<vmem>>, vector<4x16xbf16>
    tpu.vector_store %arg7[%c16_86, %c64_87], %80 {strides = array<i32>} : memref<36x256xbf16, #tpu.memory_space<vmem>>, vector<4x16xbf16>,
    %c28_88 = arith.constant 28 : index
    %c48_89 = arith.constant 48 : index
    %83 = vector.load %arg7[%c28_88, %c48_89] : memref<36x256xbf16, #tpu.memory_space<vmem>>, vector<4x16xbf16>
    tpu.vector_store %arg7[%c28_88, %c48_89], %80 {strides = array<i32>} : memref<36x256xbf16, #tpu.memory_space<vmem>>, vector<4x16xbf16>,
    %84 = vector.extract_strided_slice %75 {offsets = [0, 2], sizes = [4, 16], strides = [1, 1]} : vector<4x18xbf16> to vector<4x16xbf16>
    %c8_90 = arith.constant 8 : index
    %c80_91 = arith.constant 80 : index
    %85 = vector.load %arg7[%c8_90, %c80_91] : memref<36x256xbf16, #tpu.memory_space<vmem>>, vector<4x16xbf16>
    tpu.vector_store %arg7[%c8_90, %c80_91], %84 {strides = array<i32>} : memref<36x256xbf16, #tpu.memory_space<vmem>>, vector<4x16xbf16>,
    %c20_92 = arith.constant 20 : index
    %c64_93 = arith.constant 64 : index
    %86 = vector.load %arg7[%c20_92, %c64_93] : memref<36x256xbf16, #tpu.memory_space<vmem>>, vector<4x16xbf16>
    tpu.vector_store %arg7[%c20_92, %c64_93], %84 {strides = array<i32>} : memref<36x256xbf16, #tpu.memory_space<vmem>>, vector<4x16xbf16>,
    %c32_94 = arith.constant 32 : index
    %c48_95 = arith.constant 48 : index
    %87 = vector.load %arg7[%c32_94, %c48_95] : memref<36x256xbf16, #tpu.memory_space<vmem>>, vector<4x16xbf16>
    tpu.vector_store %arg7[%c32_94, %c48_95], %84 {strides = array<i32>} : memref<36x256xbf16, #tpu.memory_space<vmem>>, vector<4x16xbf16>,
    %c6_i32 = arith.constant 6 : i32
    %88 = arith.addi %0, %c6_i32 : i32
    %c0_96 = arith.constant 0 : index
    %89 = arith.index_cast %88 : i32 to index
    %c0_97 = arith.constant 0 : index
    %c0_98 = arith.constant 0 : index
    %90 = vector.load %arg2[%c0_96, %89, %c0_97, %c0_98] : memref<1x18x4x18xbf16, #tpu.memory_space<vmem>>, vector<1x1x4x18xbf16>
    %91 = vector.shape_cast %90 : vector<1x1x4x18xbf16> to vector<4x18xbf16>
    %92 = vector.extract_strided_slice %91 {offsets = [0, 0], sizes = [4, 16], strides = [1, 1]} : vector<4x18xbf16> to vector<4x16xbf16>
    %c0_99 = arith.constant 0 : index
    %c96 = arith.constant 96 : index
    %93 = vector.load %arg7[%c0_99, %c96] : memref<36x256xbf16, #tpu.memory_space<vmem>>, vector<4x16xbf16>
    tpu.vector_store %arg7[%c0_99, %c96], %92 {strides = array<i32>} : memref<36x256xbf16, #tpu.memory_space<vmem>>, vector<4x16xbf16>,
    %c12_100 = arith.constant 12 : index
    %c80_101 = arith.constant 80 : index
    %94 = vector.load %arg7[%c12_100, %c80_101] : memref<36x256xbf16, #tpu.memory_space<vmem>>, vector<4x16xbf16>
    tpu.vector_store %arg7[%c12_100, %c80_101], %92 {strides = array<i32>} : memref<36x256xbf16, #tpu.memory_space<vmem>>, vector<4x16xbf16>,
    %c24_102 = arith.constant 24 : index
    %c64_103 = arith.constant 64 : index
    %95 = vector.load %arg7[%c24_102, %c64_103] : memref<36x256xbf16, #tpu.memory_space<vmem>>, vector<4x16xbf16>
    tpu.vector_store %arg7[%c24_102, %c64_103], %92 {strides = array<i32>} : memref<36x256xbf16, #tpu.memory_space<vmem>>, vector<4x16xbf16>,
    %96 = vector.extract_strided_slice %91 {offsets = [0, 1], sizes = [4, 16], strides = [1, 1]} : vector<4x18xbf16> to vector<4x16xbf16>
    %c4_104 = arith.constant 4 : index
    %c96_105 = arith.constant 96 : index
    %97 = vector.load %arg7[%c4_104, %c96_105] : memref<36x256xbf16, #tpu.memory_space<vmem>>, vector<4x16xbf16>
    tpu.vector_store %arg7[%c4_104, %c96_105], %96 {strides = array<i32>} : memref<36x256xbf16, #tpu.memory_space<vmem>>, vector<4x16xbf16>,
    %c16_106 = arith.constant 16 : index
    %c80_107 = arith.constant 80 : index
    %98 = vector.load %arg7[%c16_106, %c80_107] : memref<36x256xbf16, #tpu.memory_space<vmem>>, vector<4x16xbf16>
    tpu.vector_store %arg7[%c16_106, %c80_107], %96 {strides = array<i32>} : memref<36x256xbf16, #tpu.memory_space<vmem>>, vector<4x16xbf16>,
    %c28_108 = arith.constant 28 : index
    %c64_109 = arith.constant 64 : index
    %99 = vector.load %arg7[%c28_108, %c64_109] : memref<36x256xbf16, #tpu.memory_space<vmem>>, vector<4x16xbf16>
    tpu.vector_store %arg7[%c28_108, %c64_109], %96 {strides = array<i32>} : memref<36x256xbf16, #tpu.memory_space<vmem>>, vector<4x16xbf16>,
    %100 = vector.extract_strided_slice %91 {offsets = [0, 2], sizes = [4, 16], strides = [1, 1]} : vector<4x18xbf16> to vector<4x16xbf16>
    %c8_110 = arith.constant 8 : index
    %c96_111 = arith.constant 96 : index
    %101 = vector.load %arg7[%c8_110, %c96_111] : memref<36x256xbf16, #tpu.memory_space<vmem>>, vector<4x16xbf16>
    tpu.vector_store %arg7[%c8_110, %c96_111], %100 {strides = array<i32>} : memref<36x256xbf16, #tpu.memory_space<vmem>>, vector<4x16xbf16>,
    %c20_112 = arith.constant 20 : index
    %c80_113 = arith.constant 80 : index
    %102 = vector.load %arg7[%c20_112, %c80_113] : memref<36x256xbf16, #tpu.memory_space<vmem>>, vector<4x16xbf16>
    tpu.vector_store %arg7[%c20_112, %c80_113], %100 {strides = array<i32>} : memref<36x256xbf16, #tpu.memory_space<vmem>>, vector<4x16xbf16>,
    %c32_114 = arith.constant 32 : index
    %c64_115 = arith.constant 64 : index
    %103 = vector.load %arg7[%c32_114, %c64_115] : memref<36x256xbf16, #tpu.memory_space<vmem>>, vector<4x16xbf16>
    tpu.vector_store %arg7[%c32_114, %c64_115], %100 {strides = array<i32>} : memref<36x256xbf16, #tpu.memory_space<vmem>>, vector<4x16xbf16>,
    %c7_i32 = arith.constant 7 : i32
    %104 = arith.addi %0, %c7_i32 : i32
    %c0_116 = arith.constant 0 : index
    %105 = arith.index_cast %104 : i32 to index
    %c0_117 = arith.constant 0 : index
    %c0_118 = arith.constant 0 : index
    %106 = vector.load %arg2[%c0_116, %105, %c0_117, %c0_118] : memref<1x18x4x18xbf16, #tpu.memory_space<vmem>>, vector<1x1x4x18xbf16>
    %107 = vector.shape_cast %106 : vector<1x1x4x18xbf16> to vector<4x18xbf16>
    %108 = vector.extract_strided_slice %107 {offsets = [0, 0], sizes = [4, 16], strides = [1, 1]} : vector<4x18xbf16> to vector<4x16xbf16>
    %c0_119 = arith.constant 0 : index
    %c112 = arith.constant 112 : index
    %109 = vector.load %arg7[%c0_119, %c112] : memref<36x256xbf16, #tpu.memory_space<vmem>>, vector<4x16xbf16>
    tpu.vector_store %arg7[%c0_119, %c112], %108 {strides = array<i32>} : memref<36x256xbf16, #tpu.memory_space<vmem>>, vector<4x16xbf16>,
    %c12_120 = arith.constant 12 : index
    %c96_121 = arith.constant 96 : index
    %110 = vector.load %arg7[%c12_120, %c96_121] : memref<36x256xbf16, #tpu.memory_space<vmem>>, vector<4x16xbf16>
    tpu.vector_store %arg7[%c12_120, %c96_121], %108 {strides = array<i32>} : memref<36x256xbf16, #tpu.memory_space<vmem>>, vector<4x16xbf16>,
    %c24_122 = arith.constant 24 : index
    %c80_123 = arith.constant 80 : index
    %111 = vector.load %arg7[%c24_122, %c80_123] : memref<36x256xbf16, #tpu.memory_space<vmem>>, vector<4x16xbf16>
    tpu.vector_store %arg7[%c24_122, %c80_123], %108 {strides = array<i32>} : memref<36x256xbf16, #tpu.memory_space<vmem>>, vector<4x16xbf16>,
    %112 = vector.extract_strided_slice %107 {offsets = [0, 1], sizes = [4, 16], strides = [1, 1]} : vector<4x18xbf16> to vector<4x16xbf16>
    %c4_124 = arith.constant 4 : index
    %c112_125 = arith.constant 112 : index
    %113 = vector.load %arg7[%c4_124, %c112_125] : memref<36x256xbf16, #tpu.memory_space<vmem>>, vector<4x16xbf16>
    tpu.vector_store %arg7[%c4_124, %c112_125], %112 {strides = array<i32>} : memref<36x256xbf16, #tpu.memory_space<vmem>>, vector<4x16xbf16>,
    %c16_126 = arith.constant 16 : index
    %c96_127 = arith.constant 96 : index
    %114 = vector.load %arg7[%c16_126, %c96_127] : memref<36x256xbf16, #tpu.memory_space<vmem>>, vector<4x16xbf16>
    tpu.vector_store %arg7[%c16_126, %c96_127], %112 {strides = array<i32>} : memref<36x256xbf16, #tpu.memory_space<vmem>>, vector<4x16xbf16>,
    %c28_128 = arith.constant 28 : index
    %c80_129 = arith.constant 80 : index
    %115 = vector.load %arg7[%c28_128, %c80_129] : memref<36x256xbf16, #tpu.memory_space<vmem>>, vector<4x16xbf16>
    tpu.vector_store %arg7[%c28_128, %c80_129], %112 {strides = array<i32>} : memref<36x256xbf16, #tpu.memory_space<vmem>>, vector<4x16xbf16>,
    %116 = vector.extract_strided_slice %107 {offsets = [0, 2], sizes = [4, 16], strides = [1, 1]} : vector<4x18xbf16> to vector<4x16xbf16>
    %c8_130 = arith.constant 8 : index
    %c112_131 = arith.constant 112 : index
    %117 = vector.load %arg7[%c8_130, %c112_131] : memref<36x256xbf16, #tpu.memory_space<vmem>>, vector<4x16xbf16>
    tpu.vector_store %arg7[%c8_130, %c112_131], %116 {strides = array<i32>} : memref<36x256xbf16, #tpu.memory_space<vmem>>, vector<4x16xbf16>,
    %c20_132 = arith.constant 20 : index
    %c96_133 = arith.constant 96 : index
    %118 = vector.load %arg7[%c20_132, %c96_133] : memref<36x256xbf16, #tpu.memory_space<vmem>>, vector<4x16xbf16>
    tpu.vector_store %arg7[%c20_132, %c96_133], %116 {strides = array<i32>} : memref<36x256xbf16, #tpu.memory_space<vmem>>, vector<4x16xbf16>,
    %c32_134 = arith.constant 32 : index
    %c80_135 = arith.constant 80 : index
    %119 = vector.load %arg7[%c32_134, %c80_135] : memref<36x256xbf16, #tpu.memory_space<vmem>>, vector<4x16xbf16>
    tpu.vector_store %arg7[%c32_134, %c80_135], %116 {strides = array<i32>} : memref<36x256xbf16, #tpu.memory_space<vmem>>, vector<4x16xbf16>,
    %c8_i32 = arith.constant 8 : i32
    %120 = arith.addi %0, %c8_i32 : i32
    %c0_136 = arith.constant 0 : index
    %121 = arith.index_cast %120 : i32 to index
    %c0_137 = arith.constant 0 : index
    %c0_138 = arith.constant 0 : index
    %122 = vector.load %arg2[%c0_136, %121, %c0_137, %c0_138] : memref<1x18x4x18xbf16, #tpu.memory_space<vmem>>, vector<1x1x4x18xbf16>
    %123 = vector.shape_cast %122 : vector<1x1x4x18xbf16> to vector<4x18xbf16>
    %124 = vector.extract_strided_slice %123 {offsets = [0, 0], sizes = [4, 16], strides = [1, 1]} : vector<4x18xbf16> to vector<4x16xbf16>
    %c0_139 = arith.constant 0 : index
    %c128 = arith.constant 128 : index
    %125 = vector.load %arg7[%c0_139, %c128] : memref<36x256xbf16, #tpu.memory_space<vmem>>, vector<4x16xbf16>
    tpu.vector_store %arg7[%c0_139, %c128], %124 {strides = array<i32>} : memref<36x256xbf16, #tpu.memory_space<vmem>>, vector<4x16xbf16>,
    %c12_140 = arith.constant 12 : index
    %c112_141 = arith.constant 112 : index
    %126 = vector.load %arg7[%c12_140, %c112_141] : memref<36x256xbf16, #tpu.memory_space<vmem>>, vector<4x16xbf16>
    tpu.vector_store %arg7[%c12_140, %c112_141], %124 {strides = array<i32>} : memref<36x256xbf16, #tpu.memory_space<vmem>>, vector<4x16xbf16>,
    %c24_142 = arith.constant 24 : index
    %c96_143 = arith.constant 96 : index
    %127 = vector.load %arg7[%c24_142, %c96_143] : memref<36x256xbf16, #tpu.memory_space<vmem>>, vector<4x16xbf16>
    tpu.vector_store %arg7[%c24_142, %c96_143], %124 {strides = array<i32>} : memref<36x256xbf16, #tpu.memory_space<vmem>>, vector<4x16xbf16>,
    %128 = vector.extract_strided_slice %123 {offsets = [0, 1], sizes = [4, 16], strides = [1, 1]} : vector<4x18xbf16> to vector<4x16xbf16>
    %c4_144 = arith.constant 4 : index
    %c128_145 = arith.constant 128 : index
    %129 = vector.load %arg7[%c4_144, %c128_145] : memref<36x256xbf16, #tpu.memory_space<vmem>>, vector<4x16xbf16>
    tpu.vector_store %arg7[%c4_144, %c128_145], %128 {strides = array<i32>} : memref<36x256xbf16, #tpu.memory_space<vmem>>, vector<4x16xbf16>,
    %c16_146 = arith.constant 16 : index
    %c112_147 = arith.constant 112 : index
    %130 = vector.load %arg7[%c16_146, %c112_147] : memref<36x256xbf16, #tpu.memory_space<vmem>>, vector<4x16xbf16>
    tpu.vector_store %arg7[%c16_146, %c112_147], %128 {strides = array<i32>} : memref<36x256xbf16, #tpu.memory_space<vmem>>, vector<4x16xbf16>,
    %c28_148 = arith.constant 28 : index
    %c96_149 = arith.constant 96 : index
    %131 = vector.load %arg7[%c28_148, %c96_149] : memref<36x256xbf16, #tpu.memory_space<vmem>>, vector<4x16xbf16>
    tpu.vector_store %arg7[%c28_148, %c96_149], %128 {strides = array<i32>} : memref<36x256xbf16, #tpu.memory_space<vmem>>, vector<4x16xbf16>,
    %132 = vector.extract_strided_slice %123 {offsets = [0, 2], sizes = [4, 16], strides = [1, 1]} : vector<4x18xbf16> to vector<4x16xbf16>
    %c8_150 = arith.constant 8 : index
    %c128_151 = arith.constant 128 : index
    %133 = vector.load %arg7[%c8_150, %c128_151] : memref<36x256xbf16, #tpu.memory_space<vmem>>, vector<4x16xbf16>
    tpu.vector_store %arg7[%c8_150, %c128_151], %132 {strides = array<i32>} : memref<36x256xbf16, #tpu.memory_space<vmem>>, vector<4x16xbf16>,
    %c20_152 = arith.constant 20 : index
    %c112_153 = arith.constant 112 : index
    %134 = vector.load %arg7[%c20_152, %c112_153] : memref<36x256xbf16, #tpu.memory_space<vmem>>, vector<4x16xbf16>
    tpu.vector_store %arg7[%c20_152, %c112_153], %132 {strides = array<i32>} : memref<36x256xbf16, #tpu.memory_space<vmem>>, vector<4x16xbf16>,
    %c32_154 = arith.constant 32 : index
    %c96_155 = arith.constant 96 : index
    %135 = vector.load %arg7[%c32_154, %c96_155] : memref<36x256xbf16, #tpu.memory_space<vmem>>, vector<4x16xbf16>
    tpu.vector_store %arg7[%c32_154, %c96_155], %132 {strides = array<i32>} : memref<36x256xbf16, #tpu.memory_space<vmem>>, vector<4x16xbf16>,
    %c9_i32 = arith.constant 9 : i32
    %136 = arith.addi %0, %c9_i32 : i32
    %c0_156 = arith.constant 0 : index
    %137 = arith.index_cast %136 : i32 to index
    %c0_157 = arith.constant 0 : index
    %c0_158 = arith.constant 0 : index
    %138 = vector.load %arg2[%c0_156, %137, %c0_157, %c0_158] : memref<1x18x4x18xbf16, #tpu.memory_space<vmem>>, vector<1x1x4x18xbf16>
    %139 = vector.shape_cast %138 : vector<1x1x4x18xbf16> to vector<4x18xbf16>
    %140 = vector.extract_strided_slice %139 {offsets = [0, 0], sizes = [4, 16], strides = [1, 1]} : vector<4x18xbf16> to vector<4x16xbf16>
    %c0_159 = arith.constant 0 : index
    %c144 = arith.constant 144 : index
    %141 = vector.load %arg7[%c0_159, %c144] : memref<36x256xbf16, #tpu.memory_space<vmem>>, vector<4x16xbf16>
    tpu.vector_store %arg7[%c0_159, %c144], %140 {strides = array<i32>} : memref<36x256xbf16, #tpu.memory_space<vmem>>, vector<4x16xbf16>,
    %c12_160 = arith.constant 12 : index
    %c128_161 = arith.constant 128 : index
    %142 = vector.load %arg7[%c12_160, %c128_161] : memref<36x256xbf16, #tpu.memory_space<vmem>>, vector<4x16xbf16>
    tpu.vector_store %arg7[%c12_160, %c128_161], %140 {strides = array<i32>} : memref<36x256xbf16, #tpu.memory_space<vmem>>, vector<4x16xbf16>,
    %c24_162 = arith.constant 24 : index
    %c112_163 = arith.constant 112 : index
    %143 = vector.load %arg7[%c24_162, %c112_163] : memref<36x256xbf16, #tpu.memory_space<vmem>>, vector<4x16xbf16>
    tpu.vector_store %arg7[%c24_162, %c112_163], %140 {strides = array<i32>} : memref<36x256xbf16, #tpu.memory_space<vmem>>, vector<4x16xbf16>,
    %144 = vector.extract_strided_slice %139 {offsets = [0, 1], sizes = [4, 16], strides = [1, 1]} : vector<4x18xbf16> to vector<4x16xbf16>
    %c4_164 = arith.constant 4 : index
    %c144_165 = arith.constant 144 : index
    %145 = vector.load %arg7[%c4_164, %c144_165] : memref<36x256xbf16, #tpu.memory_space<vmem>>, vector<4x16xbf16>
    tpu.vector_store %arg7[%c4_164, %c144_165], %144 {strides = array<i32>} : memref<36x256xbf16, #tpu.memory_space<vmem>>, vector<4x16xbf16>,
    %c16_166 = arith.constant 16 : index
    %c128_167 = arith.constant 128 : index
    %146 = vector.load %arg7[%c16_166, %c128_167] : memref<36x256xbf16, #tpu.memory_space<vmem>>, vector<4x16xbf16>
    tpu.vector_store %arg7[%c16_166, %c128_167], %144 {strides = array<i32>} : memref<36x256xbf16, #tpu.memory_space<vmem>>, vector<4x16xbf16>,
    %c28_168 = arith.constant 28 : index
    %c112_169 = arith.constant 112 : index
    %147 = vector.load %arg7[%c28_168, %c112_169] : memref<36x256xbf16, #tpu.memory_space<vmem>>, vector<4x16xbf16>
    tpu.vector_store %arg7[%c28_168, %c112_169], %144 {strides = array<i32>} : memref<36x256xbf16, #tpu.memory_space<vmem>>, vector<4x16xbf16>,
    %148 = vector.extract_strided_slice %139 {offsets = [0, 2], sizes = [4, 16], strides = [1, 1]} : vector<4x18xbf16> to vector<4x16xbf16>
    %c8_170 = arith.constant 8 : index
    %c144_171 = arith.constant 144 : index
    %149 = vector.load %arg7[%c8_170, %c144_171] : memref<36x256xbf16, #tpu.memory_space<vmem>>, vector<4x16xbf16>
    tpu.vector_store %arg7[%c8_170, %c144_171], %148 {strides = array<i32>} : memref<36x256xbf16, #tpu.memory_space<vmem>>, vector<4x16xbf16>,
    %c20_172 = arith.constant 20 : index
    %c128_173 = arith.constant 128 : index
    %150 = vector.load %arg7[%c20_172, %c128_173] : memref<36x256xbf16, #tpu.memory_space<vmem>>, vector<4x16xbf16>
    tpu.vector_store %arg7[%c20_172, %c128_173], %148 {strides = array<i32>} : memref<36x256xbf16, #tpu.memory_space<vmem>>, vector<4x16xbf16>,
    %c32_174 = arith.constant 32 : index
    %c112_175 = arith.constant 112 : index
    %151 = vector.load %arg7[%c32_174, %c112_175] : memref<36x256xbf16, #tpu.memory_space<vmem>>, vector<4x16xbf16>
    tpu.vector_store %arg7[%c32_174, %c112_175], %148 {strides = array<i32>} : memref<36x256xbf16, #tpu.memory_space<vmem>>, vector<4x16xbf16>,
    %c10_i32 = arith.constant 10 : i32
    %152 = arith.addi %0, %c10_i32 : i32
    %c0_176 = arith.constant 0 : index
    %153 = arith.index_cast %152 : i32 to index
    %c0_177 = arith.constant 0 : index
    %c0_178 = arith.constant 0 : index
    %154 = vector.load %arg2[%c0_176, %153, %c0_177, %c0_178] : memref<1x18x4x18xbf16, #tpu.memory_space<vmem>>, vector<1x1x4x18xbf16>
    %155 = vector.shape_cast %154 : vector<1x1x4x18xbf16> to vector<4x18xbf16>
    %156 = vector.extract_strided_slice %155 {offsets = [0, 0], sizes = [4, 16], strides = [1, 1]} : vector<4x18xbf16> to vector<4x16xbf16>
    %c0_179 = arith.constant 0 : index
    %c160 = arith.constant 160 : index
    %157 = vector.load %arg7[%c0_179, %c160] : memref<36x256xbf16, #tpu.memory_space<vmem>>, vector<4x16xbf16>
    tpu.vector_store %arg7[%c0_179, %c160], %156 {strides = array<i32>} : memref<36x256xbf16, #tpu.memory_space<vmem>>, vector<4x16xbf16>,
    %c12_180 = arith.constant 12 : index
    %c144_181 = arith.constant 144 : index
    %158 = vector.load %arg7[%c12_180, %c144_181] : memref<36x256xbf16, #tpu.memory_space<vmem>>, vector<4x16xbf16>
    tpu.vector_store %arg7[%c12_180, %c144_181], %156 {strides = array<i32>} : memref<36x256xbf16, #tpu.memory_space<vmem>>, vector<4x16xbf16>,
    %c24_182 = arith.constant 24 : index
    %c128_183 = arith.constant 128 : index
    %159 = vector.load %arg7[%c24_182, %c128_183] : memref<36x256xbf16, #tpu.memory_space<vmem>>, vector<4x16xbf16>
    tpu.vector_store %arg7[%c24_182, %c128_183], %156 {strides = array<i32>} : memref<36x256xbf16, #tpu.memory_space<vmem>>, vector<4x16xbf16>,
    %160 = vector.extract_strided_slice %155 {offsets = [0, 1], sizes = [4, 16], strides = [1, 1]} : vector<4x18xbf16> to vector<4x16xbf16>
    %c4_184 = arith.constant 4 : index
    %c160_185 = arith.constant 160 : index
    %161 = vector.load %arg7[%c4_184, %c160_185] : memref<36x256xbf16, #tpu.memory_space<vmem>>, vector<4x16xbf16>
    tpu.vector_store %arg7[%c4_184, %c160_185], %160 {strides = array<i32>} : memref<36x256xbf16, #tpu.memory_space<vmem>>, vector<4x16xbf16>,
    %c16_186 = arith.constant 16 : index
    %c144_187 = arith.constant 144 : index
    %162 = vector.load %arg7[%c16_186, %c144_187] : memref<36x256xbf16, #tpu.memory_space<vmem>>, vector<4x16xbf16>
    tpu.vector_store %arg7[%c16_186, %c144_187], %160 {strides = array<i32>} : memref<36x256xbf16, #tpu.memory_space<vmem>>, vector<4x16xbf16>,
    %c28_188 = arith.constant 28 : index
    %c128_189 = arith.constant 128 : index
    %163 = vector.load %arg7[%c28_188, %c128_189] : memref<36x256xbf16, #tpu.memory_space<vmem>>, vector<4x16xbf16>
    tpu.vector_store %arg7[%c28_188, %c128_189], %160 {strides = array<i32>} : memref<36x256xbf16, #tpu.memory_space<vmem>>, vector<4x16xbf16>,
    %164 = vector.extract_strided_slice %155 {offsets = [0, 2], sizes = [4, 16], strides = [1, 1]} : vector<4x18xbf16> to vector<4x16xbf16>
    %c8_190 = arith.constant 8 : index
    %c160_191 = arith.constant 160 : index
    %165 = vector.load %arg7[%c8_190, %c160_191] : memref<36x256xbf16, #tpu.memory_space<vmem>>, vector<4x16xbf16>
    tpu.vector_store %arg7[%c8_190, %c160_191], %164 {strides = array<i32>} : memref<36x256xbf16, #tpu.memory_space<vmem>>, vector<4x16xbf16>,
    %c20_192 = arith.constant 20 : index
    %c144_193 = arith.constant 144 : index
    %166 = vector.load %arg7[%c20_192, %c144_193] : memref<36x256xbf16, #tpu.memory_space<vmem>>, vector<4x16xbf16>
    tpu.vector_store %arg7[%c20_192, %c144_193], %164 {strides = array<i32>} : memref<36x256xbf16, #tpu.memory_space<vmem>>, vector<4x16xbf16>,
    %c32_194 = arith.constant 32 : index
    %c128_195 = arith.constant 128 : index
    %167 = vector.load %arg7[%c32_194, %c128_195] : memref<36x256xbf16, #tpu.memory_space<vmem>>, vector<4x16xbf16>
    tpu.vector_store %arg7[%c32_194, %c128_195], %164 {strides = array<i32>} : memref<36x256xbf16, #tpu.memory_space<vmem>>, vector<4x16xbf16>,
    %c11_i32 = arith.constant 11 : i32
    %168 = arith.addi %0, %c11_i32 : i32
    %c0_196 = arith.constant 0 : index
    %169 = arith.index_cast %168 : i32 to index
    %c0_197 = arith.constant 0 : index
    %c0_198 = arith.constant 0 : index
    %170 = vector.load %arg2[%c0_196, %169, %c0_197, %c0_198] : memref<1x18x4x18xbf16, #tpu.memory_space<vmem>>, vector<1x1x4x18xbf16>
    %171 = vector.shape_cast %170 : vector<1x1x4x18xbf16> to vector<4x18xbf16>
    %172 = vector.extract_strided_slice %171 {offsets = [0, 0], sizes = [4, 16], strides = [1, 1]} : vector<4x18xbf16> to vector<4x16xbf16>
    %c0_199 = arith.constant 0 : index
    %c176 = arith.constant 176 : index
    %173 = vector.load %arg7[%c0_199, %c176] : memref<36x256xbf16, #tpu.memory_space<vmem>>, vector<4x16xbf16>
    tpu.vector_store %arg7[%c0_199, %c176], %172 {strides = array<i32>} : memref<36x256xbf16, #tpu.memory_space<vmem>>, vector<4x16xbf16>,
    %c12_200 = arith.constant 12 : index
    %c160_201 = arith.constant 160 : index
    %174 = vector.load %arg7[%c12_200, %c160_201] : memref<36x256xbf16, #tpu.memory_space<vmem>>, vector<4x16xbf16>
    tpu.vector_store %arg7[%c12_200, %c160_201], %172 {strides = array<i32>} : memref<36x256xbf16, #tpu.memory_space<vmem>>, vector<4x16xbf16>,
    %c24_202 = arith.constant 24 : index
    %c144_203 = arith.constant 144 : index
    %175 = vector.load %arg7[%c24_202, %c144_203] : memref<36x256xbf16, #tpu.memory_space<vmem>>, vector<4x16xbf16>
    tpu.vector_store %arg7[%c24_202, %c144_203], %172 {strides = array<i32>} : memref<36x256xbf16, #tpu.memory_space<vmem>>, vector<4x16xbf16>,
    %176 = vector.extract_strided_slice %171 {offsets = [0, 1], sizes = [4, 16], strides = [1, 1]} : vector<4x18xbf16> to vector<4x16xbf16>
    %c4_204 = arith.constant 4 : index
    %c176_205 = arith.constant 176 : index
    %177 = vector.load %arg7[%c4_204, %c176_205] : memref<36x256xbf16, #tpu.memory_space<vmem>>, vector<4x16xbf16>
    tpu.vector_store %arg7[%c4_204, %c176_205], %176 {strides = array<i32>} : memref<36x256xbf16, #tpu.memory_space<vmem>>, vector<4x16xbf16>,
    %c16_206 = arith.constant 16 : index
    %c160_207 = arith.constant 160 : index
    %178 = vector.load %arg7[%c16_206, %c160_207] : memref<36x256xbf16, #tpu.memory_space<vmem>>, vector<4x16xbf16>
    tpu.vector_store %arg7[%c16_206, %c160_207], %176 {strides = array<i32>} : memref<36x256xbf16, #tpu.memory_space<vmem>>, vector<4x16xbf16>,
    %c28_208 = arith.constant 28 : index
    %c144_209 = arith.constant 144 : index
    %179 = vector.load %arg7[%c28_208, %c144_209] : memref<36x256xbf16, #tpu.memory_space<vmem>>, vector<4x16xbf16>
    tpu.vector_store %arg7[%c28_208, %c144_209], %176 {strides = array<i32>} : memref<36x256xbf16, #tpu.memory_space<vmem>>, vector<4x16xbf16>,
    %180 = vector.extract_strided_slice %171 {offsets = [0, 2], sizes = [4, 16], strides = [1, 1]} : vector<4x18xbf16> to vector<4x16xbf16>
    %c8_210 = arith.constant 8 : index
    %c176_211 = arith.constant 176 : index
    %181 = vector.load %arg7[%c8_210, %c176_211] : memref<36x256xbf16, #tpu.memory_space<vmem>>, vector<4x16xbf16>
    tpu.vector_store %arg7[%c8_210, %c176_211], %180 {strides = array<i32>} : memref<36x256xbf16, #tpu.memory_space<vmem>>, vector<4x16xbf16>,
    %c20_212 = arith.constant 20 : index
    %c160_213 = arith.constant 160 : index
    %182 = vector.load %arg7[%c20_212, %c160_213] : memref<36x256xbf16, #tpu.memory_space<vmem>>, vector<4x16xbf16>
    tpu.vector_store %arg7[%c20_212, %c160_213], %180 {strides = array<i32>} : memref<36x256xbf16, #tpu.memory_space<vmem>>, vector<4x16xbf16>,
    %c32_214 = arith.constant 32 : index
    %c144_215 = arith.constant 144 : index
    %183 = vector.load %arg7[%c32_214, %c144_215] : memref<36x256xbf16, #tpu.memory_space<vmem>>, vector<4x16xbf16>
    tpu.vector_store %arg7[%c32_214, %c144_215], %180 {strides = array<i32>} : memref<36x256xbf16, #tpu.memory_space<vmem>>, vector<4x16xbf16>,
    %c12_i32 = arith.constant 12 : i32
    %184 = arith.addi %0, %c12_i32 : i32
    %c0_216 = arith.constant 0 : index
    %185 = arith.index_cast %184 : i32 to index
    %c0_217 = arith.constant 0 : index
    %c0_218 = arith.constant 0 : index
    %186 = vector.load %arg2[%c0_216, %185, %c0_217, %c0_218] : memref<1x18x4x18xbf16, #tpu.memory_space<vmem>>, vector<1x1x4x18xbf16>
    %187 = vector.shape_cast %186 : vector<1x1x4x18xbf16> to vector<4x18xbf16>
    %188 = vector.extract_strided_slice %187 {offsets = [0, 0], sizes = [4, 16], strides = [1, 1]} : vector<4x18xbf16> to vector<4x16xbf16>
    %c0_219 = arith.constant 0 : index
    %c192 = arith.constant 192 : index
    %189 = vector.load %arg7[%c0_219, %c192] : memref<36x256xbf16, #tpu.memory_space<vmem>>, vector<4x16xbf16>
    tpu.vector_store %arg7[%c0_219, %c192], %188 {strides = array<i32>} : memref<36x256xbf16, #tpu.memory_space<vmem>>, vector<4x16xbf16>,
    %c12_220 = arith.constant 12 : index
    %c176_221 = arith.constant 176 : index
    %190 = vector.load %arg7[%c12_220, %c176_221] : memref<36x256xbf16, #tpu.memory_space<vmem>>, vector<4x16xbf16>
    tpu.vector_store %arg7[%c12_220, %c176_221], %188 {strides = array<i32>} : memref<36x256xbf16, #tpu.memory_space<vmem>>, vector<4x16xbf16>,
    %c24_222 = arith.constant 24 : index
    %c160_223 = arith.constant 160 : index
    %191 = vector.load %arg7[%c24_222, %c160_223] : memref<36x256xbf16, #tpu.memory_space<vmem>>, vector<4x16xbf16>
    tpu.vector_store %arg7[%c24_222, %c160_223], %188 {strides = array<i32>} : memref<36x256xbf16, #tpu.memory_space<vmem>>, vector<4x16xbf16>,
    %192 = vector.extract_strided_slice %187 {offsets = [0, 1], sizes = [4, 16], strides = [1, 1]} : vector<4x18xbf16> to vector<4x16xbf16>
    %c4_224 = arith.constant 4 : index
    %c192_225 = arith.constant 192 : index
    %193 = vector.load %arg7[%c4_224, %c192_225] : memref<36x256xbf16, #tpu.memory_space<vmem>>, vector<4x16xbf16>
    tpu.vector_store %arg7[%c4_224, %c192_225], %192 {strides = array<i32>} : memref<36x256xbf16, #tpu.memory_space<vmem>>, vector<4x16xbf16>,
    %c16_226 = arith.constant 16 : index
    %c176_227 = arith.constant 176 : index
    %194 = vector.load %arg7[%c16_226, %c176_227] : memref<36x256xbf16, #tpu.memory_space<vmem>>, vector<4x16xbf16>
    tpu.vector_store %arg7[%c16_226, %c176_227], %192 {strides = array<i32>} : memref<36x256xbf16, #tpu.memory_space<vmem>>, vector<4x16xbf16>,
    %c28_228 = arith.constant 28 : index
    %c160_229 = arith.constant 160 : index
    %195 = vector.load %arg7[%c28_228, %c160_229] : memref<36x256xbf16, #tpu.memory_space<vmem>>, vector<4x16xbf16>
    tpu.vector_store %arg7[%c28_228, %c160_229], %192 {strides = array<i32>} : memref<36x256xbf16, #tpu.memory_space<vmem>>, vector<4x16xbf16>,
    %196 = vector.extract_strided_slice %187 {offsets = [0, 2], sizes = [4, 16], strides = [1, 1]} : vector<4x18xbf16> to vector<4x16xbf16>
    %c8_230 = arith.constant 8 : index
    %c192_231 = arith.constant 192 : index
    %197 = vector.load %arg7[%c8_230, %c192_231] : memref<36x256xbf16, #tpu.memory_space<vmem>>, vector<4x16xbf16>
    tpu.vector_store %arg7[%c8_230, %c192_231], %196 {strides = array<i32>} : memref<36x256xbf16, #tpu.memory_space<vmem>>, vector<4x16xbf16>,
    %c20_232 = arith.constant 20 : index
    %c176_233 = arith.constant 176 : index
    %198 = vector.load %arg7[%c20_232, %c176_233] : memref<36x256xbf16, #tpu.memory_space<vmem>>, vector<4x16xbf16>
    tpu.vector_store %arg7[%c20_232, %c176_233], %196 {strides = array<i32>} : memref<36x256xbf16, #tpu.memory_space<vmem>>, vector<4x16xbf16>,
    %c32_234 = arith.constant 32 : index
    %c160_235 = arith.constant 160 : index
    %199 = vector.load %arg7[%c32_234, %c160_235] : memref<36x256xbf16, #tpu.memory_space<vmem>>, vector<4x16xbf16>
    tpu.vector_store %arg7[%c32_234, %c160_235], %196 {strides = array<i32>} : memref<36x256xbf16, #tpu.memory_space<vmem>>, vector<4x16xbf16>,
    %c13_i32 = arith.constant 13 : i32
    %200 = arith.addi %0, %c13_i32 : i32
    %c0_236 = arith.constant 0 : index
    %201 = arith.index_cast %200 : i32 to index
    %c0_237 = arith.constant 0 : index
    %c0_238 = arith.constant 0 : index
    %202 = vector.load %arg2[%c0_236, %201, %c0_237, %c0_238] : memref<1x18x4x18xbf16, #tpu.memory_space<vmem>>, vector<1x1x4x18xbf16>
    %203 = vector.shape_cast %202 : vector<1x1x4x18xbf16> to vector<4x18xbf16>
    %204 = vector.extract_strided_slice %203 {offsets = [0, 0], sizes = [4, 16], strides = [1, 1]} : vector<4x18xbf16> to vector<4x16xbf16>
    %c0_239 = arith.constant 0 : index
    %c208 = arith.constant 208 : index
    %205 = vector.load %arg7[%c0_239, %c208] : memref<36x256xbf16, #tpu.memory_space<vmem>>, vector<4x16xbf16>
    tpu.vector_store %arg7[%c0_239, %c208], %204 {strides = array<i32>} : memref<36x256xbf16, #tpu.memory_space<vmem>>, vector<4x16xbf16>,
    %c12_240 = arith.constant 12 : index
    %c192_241 = arith.constant 192 : index
    %206 = vector.load %arg7[%c12_240, %c192_241] : memref<36x256xbf16, #tpu.memory_space<vmem>>, vector<4x16xbf16>
    tpu.vector_store %arg7[%c12_240, %c192_241], %204 {strides = array<i32>} : memref<36x256xbf16, #tpu.memory_space<vmem>>, vector<4x16xbf16>,
    %c24_242 = arith.constant 24 : index
    %c176_243 = arith.constant 176 : index
    %207 = vector.load %arg7[%c24_242, %c176_243] : memref<36x256xbf16, #tpu.memory_space<vmem>>, vector<4x16xbf16>
    tpu.vector_store %arg7[%c24_242, %c176_243], %204 {strides = array<i32>} : memref<36x256xbf16, #tpu.memory_space<vmem>>, vector<4x16xbf16>,
    %208 = vector.extract_strided_slice %203 {offsets = [0, 1], sizes = [4, 16], strides = [1, 1]} : vector<4x18xbf16> to vector<4x16xbf16>
    %c4_244 = arith.constant 4 : index
    %c208_245 = arith.constant 208 : index
    %209 = vector.load %arg7[%c4_244, %c208_245] : memref<36x256xbf16, #tpu.memory_space<vmem>>, vector<4x16xbf16>
    tpu.vector_store %arg7[%c4_244, %c208_245], %208 {strides = array<i32>} : memref<36x256xbf16, #tpu.memory_space<vmem>>, vector<4x16xbf16>,
    %c16_246 = arith.constant 16 : index
    %c192_247 = arith.constant 192 : index
    %210 = vector.load %arg7[%c16_246, %c192_247] : memref<36x256xbf16, #tpu.memory_space<vmem>>, vector<4x16xbf16>
    tpu.vector_store %arg7[%c16_246, %c192_247], %208 {strides = array<i32>} : memref<36x256xbf16, #tpu.memory_space<vmem>>, vector<4x16xbf16>,
    %c28_248 = arith.constant 28 : index
    %c176_249 = arith.constant 176 : index
    %211 = vector.load %arg7[%c28_248, %c176_249] : memref<36x256xbf16, #tpu.memory_space<vmem>>, vector<4x16xbf16>
    tpu.vector_store %arg7[%c28_248, %c176_249], %208 {strides = array<i32>} : memref<36x256xbf16, #tpu.memory_space<vmem>>, vector<4x16xbf16>,
    %212 = vector.extract_strided_slice %203 {offsets = [0, 2], sizes = [4, 16], strides = [1, 1]} : vector<4x18xbf16> to vector<4x16xbf16>
    %c8_250 = arith.constant 8 : index
    %c208_251 = arith.constant 208 : index
    %213 = vector.load %arg7[%c8_250, %c208_251] : memref<36x256xbf16, #tpu.memory_space<vmem>>, vector<4x16xbf16>
    tpu.vector_store %arg7[%c8_250, %c208_251], %212 {strides = array<i32>} : memref<36x256xbf16, #tpu.memory_space<vmem>>, vector<4x16xbf16>,
    %c20_252 = arith.constant 20 : index
    %c192_253 = arith.constant 192 : index
    %214 = vector.load %arg7[%c20_252, %c192_253] : memref<36x256xbf16, #tpu.memory_space<vmem>>, vector<4x16xbf16>
    tpu.vector_store %arg7[%c20_252, %c192_253], %212 {strides = array<i32>} : memref<36x256xbf16, #tpu.memory_space<vmem>>, vector<4x16xbf16>,
    %c32_254 = arith.constant 32 : index
    %c176_255 = arith.constant 176 : index
    %215 = vector.load %arg7[%c32_254, %c176_255] : memref<36x256xbf16, #tpu.memory_space<vmem>>, vector<4x16xbf16>
    tpu.vector_store %arg7[%c32_254, %c176_255], %212 {strides = array<i32>} : memref<36x256xbf16, #tpu.memory_space<vmem>>, vector<4x16xbf16>,
    %c14_i32 = arith.constant 14 : i32
    %216 = arith.addi %0, %c14_i32 : i32
    %c0_256 = arith.constant 0 : index
    %217 = arith.index_cast %216 : i32 to index
    %c0_257 = arith.constant 0 : index
    %c0_258 = arith.constant 0 : index
    %218 = vector.load %arg2[%c0_256, %217, %c0_257, %c0_258] : memref<1x18x4x18xbf16, #tpu.memory_space<vmem>>, vector<1x1x4x18xbf16>
    %219 = vector.shape_cast %218 : vector<1x1x4x18xbf16> to vector<4x18xbf16>
    %220 = vector.extract_strided_slice %219 {offsets = [0, 0], sizes = [4, 16], strides = [1, 1]} : vector<4x18xbf16> to vector<4x16xbf16>
    %c0_259 = arith.constant 0 : index
    %c224 = arith.constant 224 : index
    %221 = vector.load %arg7[%c0_259, %c224] : memref<36x256xbf16, #tpu.memory_space<vmem>>, vector<4x16xbf16>
    tpu.vector_store %arg7[%c0_259, %c224], %220 {strides = array<i32>} : memref<36x256xbf16, #tpu.memory_space<vmem>>, vector<4x16xbf16>,
    %c12_260 = arith.constant 12 : index
    %c208_261 = arith.constant 208 : index
    %222 = vector.load %arg7[%c12_260, %c208_261] : memref<36x256xbf16, #tpu.memory_space<vmem>>, vector<4x16xbf16>
    tpu.vector_store %arg7[%c12_260, %c208_261], %220 {strides = array<i32>} : memref<36x256xbf16, #tpu.memory_space<vmem>>, vector<4x16xbf16>,
    %c24_262 = arith.constant 24 : index
    %c192_263 = arith.constant 192 : index
    %223 = vector.load %arg7[%c24_262, %c192_263] : memref<36x256xbf16, #tpu.memory_space<vmem>>, vector<4x16xbf16>
    tpu.vector_store %arg7[%c24_262, %c192_263], %220 {strides = array<i32>} : memref<36x256xbf16, #tpu.memory_space<vmem>>, vector<4x16xbf16>,
    %224 = vector.extract_strided_slice %219 {offsets = [0, 1], sizes = [4, 16], strides = [1, 1]} : vector<4x18xbf16> to vector<4x16xbf16>
    %c4_264 = arith.constant 4 : index
    %c224_265 = arith.constant 224 : index
    %225 = vector.load %arg7[%c4_264, %c224_265] : memref<36x256xbf16, #tpu.memory_space<vmem>>, vector<4x16xbf16>
    tpu.vector_store %arg7[%c4_264, %c224_265], %224 {strides = array<i32>} : memref<36x256xbf16, #tpu.memory_space<vmem>>, vector<4x16xbf16>,
    %c16_266 = arith.constant 16 : index
    %c208_267 = arith.constant 208 : index
    %226 = vector.load %arg7[%c16_266, %c208_267] : memref<36x256xbf16, #tpu.memory_space<vmem>>, vector<4x16xbf16>
    tpu.vector_store %arg7[%c16_266, %c208_267], %224 {strides = array<i32>} : memref<36x256xbf16, #tpu.memory_space<vmem>>, vector<4x16xbf16>,
    %c28_268 = arith.constant 28 : index
    %c192_269 = arith.constant 192 : index
    %227 = vector.load %arg7[%c28_268, %c192_269] : memref<36x256xbf16, #tpu.memory_space<vmem>>, vector<4x16xbf16>
    tpu.vector_store %arg7[%c28_268, %c192_269], %224 {strides = array<i32>} : memref<36x256xbf16, #tpu.memory_space<vmem>>, vector<4x16xbf16>,
    %228 = vector.extract_strided_slice %219 {offsets = [0, 2], sizes = [4, 16], strides = [1, 1]} : vector<4x18xbf16> to vector<4x16xbf16>
    %c8_270 = arith.constant 8 : index
    %c224_271 = arith.constant 224 : index
    %229 = vector.load %arg7[%c8_270, %c224_271] : memref<36x256xbf16, #tpu.memory_space<vmem>>, vector<4x16xbf16>
    tpu.vector_store %arg7[%c8_270, %c224_271], %228 {strides = array<i32>} : memref<36x256xbf16, #tpu.memory_space<vmem>>, vector<4x16xbf16>,
    %c20_272 = arith.constant 20 : index
    %c208_273 = arith.constant 208 : index
    %230 = vector.load %arg7[%c20_272, %c208_273] : memref<36x256xbf16, #tpu.memory_space<vmem>>, vector<4x16xbf16>
    tpu.vector_store %arg7[%c20_272, %c208_273], %228 {strides = array<i32>} : memref<36x256xbf16, #tpu.memory_space<vmem>>, vector<4x16xbf16>,
    %c32_274 = arith.constant 32 : index
    %c192_275 = arith.constant 192 : index
    %231 = vector.load %arg7[%c32_274, %c192_275] : memref<36x256xbf16, #tpu.memory_space<vmem>>, vector<4x16xbf16>
    tpu.vector_store %arg7[%c32_274, %c192_275], %228 {strides = array<i32>} : memref<36x256xbf16, #tpu.memory_space<vmem>>, vector<4x16xbf16>,
    %c15_i32 = arith.constant 15 : i32
    %232 = arith.addi %0, %c15_i32 : i32
    %c0_276 = arith.constant 0 : index
    %233 = arith.index_cast %232 : i32 to index
    %c0_277 = arith.constant 0 : index
    %c0_278 = arith.constant 0 : index
    %234 = vector.load %arg2[%c0_276, %233, %c0_277, %c0_278] : memref<1x18x4x18xbf16, #tpu.memory_space<vmem>>, vector<1x1x4x18xbf16>
    %235 = vector.shape_cast %234 : vector<1x1x4x18xbf16> to vector<4x18xbf16>
    %236 = vector.extract_strided_slice %235 {offsets = [0, 0], sizes = [4, 16], strides = [1, 1]} : vector<4x18xbf16> to vector<4x16xbf16>
    %c0_279 = arith.constant 0 : index
    %c240 = arith.constant 240 : index
    %237 = vector.load %arg7[%c0_279, %c240] : memref<36x256xbf16, #tpu.memory_space<vmem>>, vector<4x16xbf16>
    tpu.vector_store %arg7[%c0_279, %c240], %236 {strides = array<i32>} : memref<36x256xbf16, #tpu.memory_space<vmem>>, vector<4x16xbf16>,
    %c12_280 = arith.constant 12 : index
    %c224_281 = arith.constant 224 : index
    %238 = vector.load %arg7[%c12_280, %c224_281] : memref<36x256xbf16, #tpu.memory_space<vmem>>, vector<4x16xbf16>
    tpu.vector_store %arg7[%c12_280, %c224_281], %236 {strides = array<i32>} : memref<36x256xbf16, #tpu.memory_space<vmem>>, vector<4x16xbf16>,
    %c24_282 = arith.constant 24 : index
    %c208_283 = arith.constant 208 : index
    %239 = vector.load %arg7[%c24_282, %c208_283] : memref<36x256xbf16, #tpu.memory_space<vmem>>, vector<4x16xbf16>
    tpu.vector_store %arg7[%c24_282, %c208_283], %236 {strides = array<i32>} : memref<36x256xbf16, #tpu.memory_space<vmem>>, vector<4x16xbf16>,
    %240 = vector.extract_strided_slice %235 {offsets = [0, 1], sizes = [4, 16], strides = [1, 1]} : vector<4x18xbf16> to vector<4x16xbf16>
    %c4_284 = arith.constant 4 : index
    %c240_285 = arith.constant 240 : index
    %241 = vector.load %arg7[%c4_284, %c240_285] : memref<36x256xbf16, #tpu.memory_space<vmem>>, vector<4x16xbf16>
    tpu.vector_store %arg7[%c4_284, %c240_285], %240 {strides = array<i32>} : memref<36x256xbf16, #tpu.memory_space<vmem>>, vector<4x16xbf16>,
    %c16_286 = arith.constant 16 : index
    %c224_287 = arith.constant 224 : index
    %242 = vector.load %arg7[%c16_286, %c224_287] : memref<36x256xbf16, #tpu.memory_space<vmem>>, vector<4x16xbf16>
    tpu.vector_store %arg7[%c16_286, %c224_287], %240 {strides = array<i32>} : memref<36x256xbf16, #tpu.memory_space<vmem>>, vector<4x16xbf16>,
    %c28_288 = arith.constant 28 : index
    %c208_289 = arith.constant 208 : index
    %243 = vector.load %arg7[%c28_288, %c208_289] : memref<36x256xbf16, #tpu.memory_space<vmem>>, vector<4x16xbf16>
    tpu.vector_store %arg7[%c28_288, %c208_289], %240 {strides = array<i32>} : memref<36x256xbf16, #tpu.memory_space<vmem>>, vector<4x16xbf16>,
    %244 = vector.extract_strided_slice %235 {offsets = [0, 2], sizes = [4, 16], strides = [1, 1]} : vector<4x18xbf16> to vector<4x16xbf16>
    %c8_290 = arith.constant 8 : index
    %c240_291 = arith.constant 240 : index
    %245 = vector.load %arg7[%c8_290, %c240_291] : memref<36x256xbf16, #tpu.memory_space<vmem>>, vector<4x16xbf16>
    tpu.vector_store %arg7[%c8_290, %c240_291], %244 {strides = array<i32>} : memref<36x256xbf16, #tpu.memory_space<vmem>>, vector<4x16xbf16>,
    %c20_292 = arith.constant 20 : index
    %c224_293 = arith.constant 224 : index
    %246 = vector.load %arg7[%c20_292, %c224_293] : memref<36x256xbf16, #tpu.memory_space<vmem>>, vector<4x16xbf16>
    tpu.vector_store %arg7[%c20_292, %c224_293], %244 {strides = array<i32>} : memref<36x256xbf16, #tpu.memory_space<vmem>>, vector<4x16xbf16>,
    %c32_294 = arith.constant 32 : index
    %c208_295 = arith.constant 208 : index
    %247 = vector.load %arg7[%c32_294, %c208_295] : memref<36x256xbf16, #tpu.memory_space<vmem>>, vector<4x16xbf16>
    tpu.vector_store %arg7[%c32_294, %c208_295], %244 {strides = array<i32>} : memref<36x256xbf16, #tpu.memory_space<vmem>>, vector<4x16xbf16>,
    %c16_i32_296 = arith.constant 16 : i32
    %248 = arith.addi %0, %c16_i32_296 : i32
    %c0_297 = arith.constant 0 : index
    %249 = arith.index_cast %248 : i32 to index
    %c0_298 = arith.constant 0 : index
    %c0_299 = arith.constant 0 : index
    %250 = vector.load %arg2[%c0_297, %249, %c0_298, %c0_299] : memref<1x18x4x18xbf16, #tpu.memory_space<vmem>>, vector<1x1x4x18xbf16>
    %251 = vector.shape_cast %250 : vector<1x1x4x18xbf16> to vector<4x18xbf16>
    %252 = vector.extract_strided_slice %251 {offsets = [0, 0], sizes = [4, 16], strides = [1, 1]} : vector<4x18xbf16> to vector<4x16xbf16>
    %c12_300 = arith.constant 12 : index
    %c240_301 = arith.constant 240 : index
    %253 = vector.load %arg7[%c12_300, %c240_301] : memref<36x256xbf16, #tpu.memory_space<vmem>>, vector<4x16xbf16>
    tpu.vector_store %arg7[%c12_300, %c240_301], %252 {strides = array<i32>} : memref<36x256xbf16, #tpu.memory_space<vmem>>, vector<4x16xbf16>,
    %c24_302 = arith.constant 24 : index
    %c224_303 = arith.constant 224 : index
    %254 = vector.load %arg7[%c24_302, %c224_303] : memref<36x256xbf16, #tpu.memory_space<vmem>>, vector<4x16xbf16>
    tpu.vector_store %arg7[%c24_302, %c224_303], %252 {strides = array<i32>} : memref<36x256xbf16, #tpu.memory_space<vmem>>, vector<4x16xbf16>,
    %255 = vector.extract_strided_slice %251 {offsets = [0, 1], sizes = [4, 16], strides = [1, 1]} : vector<4x18xbf16> to vector<4x16xbf16>
    %c16_304 = arith.constant 16 : index
    %c240_305 = arith.constant 240 : index
    %256 = vector.load %arg7[%c16_304, %c240_305] : memref<36x256xbf16, #tpu.memory_space<vmem>>, vector<4x16xbf16>
    tpu.vector_store %arg7[%c16_304, %c240_305], %255 {strides = array<i32>} : memref<36x256xbf16, #tpu.memory_space<vmem>>, vector<4x16xbf16>,
    %c28_306 = arith.constant 28 : index
    %c224_307 = arith.constant 224 : index
    %257 = vector.load %arg7[%c28_306, %c224_307] : memref<36x256xbf16, #tpu.memory_space<vmem>>, vector<4x16xbf16>
    tpu.vector_store %arg7[%c28_306, %c224_307], %255 {strides = array<i32>} : memref<36x256xbf16, #tpu.memory_space<vmem>>, vector<4x16xbf16>,
    %258 = vector.extract_strided_slice %251 {offsets = [0, 2], sizes = [4, 16], strides = [1, 1]} : vector<4x18xbf16> to vector<4x16xbf16>
    %c20_308 = arith.constant 20 : index
    %c240_309 = arith.constant 240 : index
    %259 = vector.load %arg7[%c20_308, %c240_309] : memref<36x256xbf16, #tpu.memory_space<vmem>>, vector<4x16xbf16>
    tpu.vector_store %arg7[%c20_308, %c240_309], %258 {strides = array<i32>} : memref<36x256xbf16, #tpu.memory_space<vmem>>, vector<4x16xbf16>,
    %c32_310 = arith.constant 32 : index
    %c224_311 = arith.constant 224 : index
    %260 = vector.load %arg7[%c32_310, %c224_311] : memref<36x256xbf16, #tpu.memory_space<vmem>>, vector<4x16xbf16>
    tpu.vector_store %arg7[%c32_310, %c224_311], %258 {strides = array<i32>} : memref<36x256xbf16, #tpu.memory_space<vmem>>, vector<4x16xbf16>,
    %c17_i32 = arith.constant 17 : i32
    %261 = arith.addi %0, %c17_i32 : i32
    %c0_312 = arith.constant 0 : index
    %262 = arith.index_cast %261 : i32 to index
    %c0_313 = arith.constant 0 : index
    %c0_314 = arith.constant 0 : index
    %263 = vector.load %arg2[%c0_312, %262, %c0_313, %c0_314] : memref<1x18x4x18xbf16, #tpu.memory_space<vmem>>, vector<1x1x4x18xbf16>
    %264 = vector.shape_cast %263 : vector<1x1x4x18xbf16> to vector<4x18xbf16>
    %265 = vector.extract_strided_slice %264 {offsets = [0, 0], sizes = [4, 16], strides = [1, 1]} : vector<4x18xbf16> to vector<4x16xbf16>
    %c24_315 = arith.constant 24 : index
    %c240_316 = arith.constant 240 : index
    %266 = vector.load %arg7[%c24_315, %c240_316] : memref<36x256xbf16, #tpu.memory_space<vmem>>, vector<4x16xbf16>
    tpu.vector_store %arg7[%c24_315, %c240_316], %265 {strides = array<i32>} : memref<36x256xbf16, #tpu.memory_space<vmem>>, vector<4x16xbf16>,
    %267 = vector.extract_strided_slice %264 {offsets = [0, 1], sizes = [4, 16], strides = [1, 1]} : vector<4x18xbf16> to vector<4x16xbf16>
    %c28_317 = arith.constant 28 : index
    %c240_318 = arith.constant 240 : index
    %268 = vector.load %arg7[%c28_317, %c240_318] : memref<36x256xbf16, #tpu.memory_space<vmem>>, vector<4x16xbf16>
    tpu.vector_store %arg7[%c28_317, %c240_318], %267 {strides = array<i32>} : memref<36x256xbf16, #tpu.memory_space<vmem>>, vector<4x16xbf16>,
    %269 = vector.extract_strided_slice %264 {offsets = [0, 2], sizes = [4, 16], strides = [1, 1]} : vector<4x18xbf16> to vector<4x16xbf16>
    %c32_319 = arith.constant 32 : index
    %c240_320 = arith.constant 240 : index
    %270 = vector.load %arg7[%c32_319, %c240_320] : memref<36x256xbf16, #tpu.memory_space<vmem>>, vector<4x16xbf16>
    tpu.vector_store %arg7[%c32_319, %c240_320], %269 {strides = array<i32>} : memref<36x256xbf16, #tpu.memory_space<vmem>>, vector<4x16xbf16>,
    %c0_321 = arith.constant 0 : index
    %c0_322 = arith.constant 0 : index
    %c0_323 = arith.constant 0 : index
    %271 = vector.load %arg3[%c0_321, %c0_322, %c0_323] : memref<1x9x256xbf16, #tpu.memory_space<vmem>>, vector<1x1x256xbf16>
    %272 = vector.shape_cast %271 : vector<1x1x256xbf16> to vector<1x256xbf16>
    %273 = arith.extf %272 : vector<1x256xbf16> to vector<1x256xf32>
    %c0_324 = arith.constant 0 : index
    %c0_325 = arith.constant 0 : index
    %274 = vector.load %arg7[%c0_324, %c0_325] : memref<36x256xbf16, #tpu.memory_space<vmem>>, vector<4x256xbf16>
    %275 = arith.extf %274 : vector<4x256xbf16> to vector<4x256xf32>
    %276 = vector.broadcast %273 : vector<1x256xf32> to vector<4x256xf32>
    %277 = arith.mulf %275, %276 : vector<4x256xf32>
    %c0_326 = arith.constant 0 : index
    %c1 = arith.constant 1 : index
    %c0_327 = arith.constant 0 : index
    %278 = vector.load %arg3[%c0_326, %c1, %c0_327] : memref<1x9x256xbf16, #tpu.memory_space<vmem>>, vector<1x1x256xbf16>
    %279 = vector.shape_cast %278 : vector<1x1x256xbf16> to vector<1x256xbf16>
    %280 = arith.extf %279 : vector<1x256xbf16> to vector<1x256xf32>
    %c4_328 = arith.constant 4 : index
    %c0_329 = arith.constant 0 : index
    %281 = vector.load %arg7[%c4_328, %c0_329] : memref<36x256xbf16, #tpu.memory_space<vmem>>, vector<4x256xbf16>
    %282 = arith.extf %281 : vector<4x256xbf16> to vector<4x256xf32>
    %283 = vector.broadcast %280 : vector<1x256xf32> to vector<4x256xf32>
    %284 = arith.mulf %282, %283 : vector<4x256xf32>
    %285 = arith.addf %277, %284 : vector<4x256xf32>
    %286 = arith.addf %273, %280 : vector<1x256xf32>
    %c0_330 = arith.constant 0 : index
    %c2 = arith.constant 2 : index
    %c0_331 = arith.constant 0 : index
    %287 = vector.load %arg3[%c0_330, %c2, %c0_331] : memref<1x9x256xbf16, #tpu.memory_space<vmem>>, vector<1x1x256xbf16>
    %288 = vector.shape_cast %287 : vector<1x1x256xbf16> to vector<1x256xbf16>
    %289 = arith.extf %288 : vector<1x256xbf16> to vector<1x256xf32>
    %c8_332 = arith.constant 8 : index
    %c0_333 = arith.constant 0 : index
    %290 = vector.load %arg7[%c8_332, %c0_333] : memref<36x256xbf16, #tpu.memory_space<vmem>>, vector<4x256xbf16>
    %291 = arith.extf %290 : vector<4x256xbf16> to vector<4x256xf32>
    %292 = vector.broadcast %289 : vector<1x256xf32> to vector<4x256xf32>
    %293 = arith.mulf %291, %292 : vector<4x256xf32>
    %294 = arith.addf %285, %293 : vector<4x256xf32>
    %295 = arith.addf %286, %289 : vector<1x256xf32>
    %c0_334 = arith.constant 0 : index
    %c3 = arith.constant 3 : index
    %c0_335 = arith.constant 0 : index
    %296 = vector.load %arg3[%c0_334, %c3, %c0_335] : memref<1x9x256xbf16, #tpu.memory_space<vmem>>, vector<1x1x256xbf16>
    %297 = vector.shape_cast %296 : vector<1x1x256xbf16> to vector<1x256xbf16>
    %298 = arith.extf %297 : vector<1x256xbf16> to vector<1x256xf32>
    %c12_336 = arith.constant 12 : index
    %c0_337 = arith.constant 0 : index
    %299 = vector.load %arg7[%c12_336, %c0_337] : memref<36x256xbf16, #tpu.memory_space<vmem>>, vector<4x256xbf16>
    %300 = arith.extf %299 : vector<4x256xbf16> to vector<4x256xf32>
    %301 = vector.broadcast %298 : vector<1x256xf32> to vector<4x256xf32>
    %302 = arith.mulf %300, %301 : vector<4x256xf32>
    %303 = arith.addf %294, %302 : vector<4x256xf32>
    %304 = arith.addf %295, %298 : vector<1x256xf32>
    %c0_338 = arith.constant 0 : index
    %c4_339 = arith.constant 4 : index
    %c0_340 = arith.constant 0 : index
    %305 = vector.load %arg3[%c0_338, %c4_339, %c0_340] : memref<1x9x256xbf16, #tpu.memory_space<vmem>>, vector<1x1x256xbf16>
    %306 = vector.shape_cast %305 : vector<1x1x256xbf16> to vector<1x256xbf16>
    %307 = arith.extf %306 : vector<1x256xbf16> to vector<1x256xf32>
    %c16_341 = arith.constant 16 : index
    %c0_342 = arith.constant 0 : index
    %308 = vector.load %arg7[%c16_341, %c0_342] : memref<36x256xbf16, #tpu.memory_space<vmem>>, vector<4x256xbf16>
    %309 = arith.extf %308 : vector<4x256xbf16> to vector<4x256xf32>
    %310 = vector.broadcast %307 : vector<1x256xf32> to vector<4x256xf32>
    %311 = arith.mulf %309, %310 : vector<4x256xf32>
    %312 = arith.addf %303, %311 : vector<4x256xf32>
    %313 = arith.addf %304, %307 : vector<1x256xf32>
    %c0_343 = arith.constant 0 : index
    %c5 = arith.constant 5 : index
    %c0_344 = arith.constant 0 : index
    %314 = vector.load %arg3[%c0_343, %c5, %c0_344] : memref<1x9x256xbf16, #tpu.memory_space<vmem>>, vector<1x1x256xbf16>
    %315 = vector.shape_cast %314 : vector<1x1x256xbf16> to vector<1x256xbf16>
    %316 = arith.extf %315 : vector<1x256xbf16> to vector<1x256xf32>
    %c20_345 = arith.constant 20 : index
    %c0_346 = arith.constant 0 : index
    %317 = vector.load %arg7[%c20_345, %c0_346] : memref<36x256xbf16, #tpu.memory_space<vmem>>, vector<4x256xbf16>
    %318 = arith.extf %317 : vector<4x256xbf16> to vector<4x256xf32>
    %319 = vector.broadcast %316 : vector<1x256xf32> to vector<4x256xf32>
    %320 = arith.mulf %318, %319 : vector<4x256xf32>
    %321 = arith.addf %312, %320 : vector<4x256xf32>
    %322 = arith.addf %313, %316 : vector<1x256xf32>
    %c0_347 = arith.constant 0 : index
    %c6 = arith.constant 6 : index
    %c0_348 = arith.constant 0 : index
    %323 = vector.load %arg3[%c0_347, %c6, %c0_348] : memref<1x9x256xbf16, #tpu.memory_space<vmem>>, vector<1x1x256xbf16>
    %324 = vector.shape_cast %323 : vector<1x1x256xbf16> to vector<1x256xbf16>
    %325 = arith.extf %324 : vector<1x256xbf16> to vector<1x256xf32>
    %c24_349 = arith.constant 24 : index
    %c0_350 = arith.constant 0 : index
    %326 = vector.load %arg7[%c24_349, %c0_350] : memref<36x256xbf16, #tpu.memory_space<vmem>>, vector<4x256xbf16>
    %327 = arith.extf %326 : vector<4x256xbf16> to vector<4x256xf32>
    %328 = vector.broadcast %325 : vector<1x256xf32> to vector<4x256xf32>
    %329 = arith.mulf %327, %328 : vector<4x256xf32>
    %330 = arith.addf %321, %329 : vector<4x256xf32>
    %331 = arith.addf %322, %325 : vector<1x256xf32>
    %c0_351 = arith.constant 0 : index
    %c7 = arith.constant 7 : index
    %c0_352 = arith.constant 0 : index
    %332 = vector.load %arg3[%c0_351, %c7, %c0_352] : memref<1x9x256xbf16, #tpu.memory_space<vmem>>, vector<1x1x256xbf16>
    %333 = vector.shape_cast %332 : vector<1x1x256xbf16> to vector<1x256xbf16>
    %334 = arith.extf %333 : vector<1x256xbf16> to vector<1x256xf32>
    %c28_353 = arith.constant 28 : index
    %c0_354 = arith.constant 0 : index
    %335 = vector.load %arg7[%c28_353, %c0_354] : memref<36x256xbf16, #tpu.memory_space<vmem>>, vector<4x256xbf16>
    %336 = arith.extf %335 : vector<4x256xbf16> to vector<4x256xf32>
    %337 = vector.broadcast %334 : vector<1x256xf32> to vector<4x256xf32>
    %338 = arith.mulf %336, %337 : vector<4x256xf32>
    %339 = arith.addf %330, %338 : vector<4x256xf32>
    %340 = arith.addf %331, %334 : vector<1x256xf32>
    %c0_355 = arith.constant 0 : index
    %c8_356 = arith.constant 8 : index
    %c0_357 = arith.constant 0 : index
    %341 = vector.load %arg3[%c0_355, %c8_356, %c0_357] : memref<1x9x256xbf16, #tpu.memory_space<vmem>>, vector<1x1x256xbf16>
    %342 = vector.shape_cast %341 : vector<1x1x256xbf16> to vector<1x256xbf16>
    %343 = arith.extf %342 : vector<1x256xbf16> to vector<1x256xf32>
    %c32_358 = arith.constant 32 : index
    %c0_359 = arith.constant 0 : index
    %344 = vector.load %arg7[%c32_358, %c0_359] : memref<36x256xbf16, #tpu.memory_space<vmem>>, vector<4x256xbf16>
    %345 = arith.extf %344 : vector<4x256xbf16> to vector<4x256xf32>
    %346 = vector.broadcast %343 : vector<1x256xf32> to vector<4x256xf32>
    %347 = arith.mulf %345, %346 : vector<4x256xf32>
    %348 = arith.addf %339, %347 : vector<4x256xf32>
    %349 = arith.addf %340, %343 : vector<1x256xf32>
    %350 = tpu.reciprocal %349 {approx = true} : vector<1x256xf32> -> vector<1x256xf32>
    %351 = vector.broadcast %350 : vector<1x256xf32> to vector<4x256xf32>
    %352 = arith.mulf %348, %351 : vector<4x256xf32>
    %cst = arith.constant 1.000000e+00 : f32
    %353 = vector.broadcast %cst : f32 to vector<1x256xf32>
    %354 = arith.subf %353, %273 : vector<1x256xf32>
    %355 = vector.broadcast %354 : vector<1x256xf32> to vector<4x256xf32>
    %356 = arith.mulf %352, %355 : vector<4x256xf32>
    %357 = arith.addf %277, %356 : vector<4x256xf32>
    %358 = arith.truncf %357 : vector<4x256xf32> to vector<4x256xbf16>
    %c0_360 = arith.constant 0 : index
    %c0_361 = arith.constant 0 : index
    %359 = vector.load %arg7[%c0_360, %c0_361] : memref<36x256xbf16, #tpu.memory_space<vmem>>, vector<4x256xbf16>
    tpu.vector_store %arg7[%c0_360, %c0_361], %358 {strides = array<i32>} : memref<36x256xbf16, #tpu.memory_space<vmem>>, vector<4x256xbf16>,
    %cst_362 = arith.constant 1.000000e+00 : f32
    %360 = vector.broadcast %cst_362 : f32 to vector<1x256xf32>
    %361 = arith.subf %360, %280 : vector<1x256xf32>
    %362 = vector.broadcast %361 : vector<1x256xf32> to vector<4x256xf32>
    %363 = arith.mulf %352, %362 : vector<4x256xf32>
    %364 = arith.addf %284, %363 : vector<4x256xf32>
    %365 = arith.truncf %364 : vector<4x256xf32> to vector<4x256xbf16>
    %c4_363 = arith.constant 4 : index
    %c0_364 = arith.constant 0 : index
    %366 = vector.load %arg7[%c4_363, %c0_364] : memref<36x256xbf16, #tpu.memory_space<vmem>>, vector<4x256xbf16>
    tpu.vector_store %arg7[%c4_363, %c0_364], %365 {strides = array<i32>} : memref<36x256xbf16, #tpu.memory_space<vmem>>, vector<4x256xbf16>,
    %cst_365 = arith.constant 1.000000e+00 : f32
    %367 = vector.broadcast %cst_365 : f32 to vector<1x256xf32>
    %368 = arith.subf %367, %289 : vector<1x256xf32>
    %369 = vector.broadcast %368 : vector<1x256xf32> to vector<4x256xf32>
    %370 = arith.mulf %352, %369 : vector<4x256xf32>
    %371 = arith.addf %293, %370 : vector<4x256xf32>
    %372 = arith.truncf %371 : vector<4x256xf32> to vector<4x256xbf16>
    %c8_366 = arith.constant 8 : index
    %c0_367 = arith.constant 0 : index
    %373 = vector.load %arg7[%c8_366, %c0_367] : memref<36x256xbf16, #tpu.memory_space<vmem>>, vector<4x256xbf16>
    tpu.vector_store %arg7[%c8_366, %c0_367], %372 {strides = array<i32>} : memref<36x256xbf16, #tpu.memory_space<vmem>>, vector<4x256xbf16>,
    %cst_368 = arith.constant 1.000000e+00 : f32
    %374 = vector.broadcast %cst_368 : f32 to vector<1x256xf32>
    %375 = arith.subf %374, %298 : vector<1x256xf32>
    %376 = vector.broadcast %375 : vector<1x256xf32> to vector<4x256xf32>
    %377 = arith.mulf %352, %376 : vector<4x256xf32>
    %378 = arith.addf %302, %377 : vector<4x256xf32>
    %379 = arith.truncf %378 : vector<4x256xf32> to vector<4x256xbf16>
    %c12_369 = arith.constant 12 : index
    %c0_370 = arith.constant 0 : index
    %380 = vector.load %arg7[%c12_369, %c0_370] : memref<36x256xbf16, #tpu.memory_space<vmem>>, vector<4x256xbf16>
    tpu.vector_store %arg7[%c12_369, %c0_370], %379 {strides = array<i32>} : memref<36x256xbf16, #tpu.memory_space<vmem>>, vector<4x256xbf16>,
    %cst_371 = arith.constant 1.000000e+00 : f32
    %381 = vector.broadcast %cst_371 : f32 to vector<1x256xf32>
    %382 = arith.subf %381, %307 : vector<1x256xf32>
    %383 = vector.broadcast %382 : vector<1x256xf32> to vector<4x256xf32>
    %384 = arith.mulf %352, %383 : vector<4x256xf32>
    %385 = arith.addf %311, %384 : vector<4x256xf32>
    %386 = arith.truncf %385 : vector<4x256xf32> to vector<4x256xbf16>
    %c16_372 = arith.constant 16 : index
    %c0_373 = arith.constant 0 : index
    %387 = vector.load %arg7[%c16_372, %c0_373] : memref<36x256xbf16, #tpu.memory_space<vmem>>, vector<4x256xbf16>
    tpu.vector_store %arg7[%c16_372, %c0_373], %386 {strides = array<i32>} : memref<36x256xbf16, #tpu.memory_space<vmem>>, vector<4x256xbf16>,
    %cst_374 = arith.constant 1.000000e+00 : f32
    %388 = vector.broadcast %cst_374 : f32 to vector<1x256xf32>
    %389 = arith.subf %388, %316 : vector<1x256xf32>
    %390 = vector.broadcast %389 : vector<1x256xf32> to vector<4x256xf32>
    %391 = arith.mulf %352, %390 : vector<4x256xf32>
    %392 = arith.addf %320, %391 : vector<4x256xf32>
    %393 = arith.truncf %392 : vector<4x256xf32> to vector<4x256xbf16>
    %c20_375 = arith.constant 20 : index
    %c0_376 = arith.constant 0 : index
    %394 = vector.load %arg7[%c20_375, %c0_376] : memref<36x256xbf16, #tpu.memory_space<vmem>>, vector<4x256xbf16>
    tpu.vector_store %arg7[%c20_375, %c0_376], %393 {strides = array<i32>} : memref<36x256xbf16, #tpu.memory_space<vmem>>, vector<4x256xbf16>,
    %cst_377 = arith.constant 1.000000e+00 : f32
    %395 = vector.broadcast %cst_377 : f32 to vector<1x256xf32>
    %396 = arith.subf %395, %325 : vector<1x256xf32>
    %397 = vector.broadcast %396 : vector<1x256xf32> to vector<4x256xf32>
    %398 = arith.mulf %352, %397 : vector<4x256xf32>
    %399 = arith.addf %329, %398 : vector<4x256xf32>
    %400 = arith.truncf %399 : vector<4x256xf32> to vector<4x256xbf16>
    %c24_378 = arith.constant 24 : index
    %c0_379 = arith.constant 0 : index
    %401 = vector.load %arg7[%c24_378, %c0_379] : memref<36x256xbf16, #tpu.memory_space<vmem>>, vector<4x256xbf16>
    tpu.vector_store %arg7[%c24_378, %c0_379], %400 {strides = array<i32>} : memref<36x256xbf16, #tpu.memory_space<vmem>>, vector<4x256xbf16>,
    %cst_380 = arith.constant 1.000000e+00 : f32
    %402 = vector.broadcast %cst_380 : f32 to vector<1x256xf32>
    %403 = arith.subf %402, %334 : vector<1x256xf32>
    %404 = vector.broadcast %403 : vector<1x256xf32> to vector<4x256xf32>
    %405 = arith.mulf %352, %404 : vector<4x256xf32>
    %406 = arith.addf %338, %405 : vector<4x256xf32>
    %407 = arith.truncf %406 : vector<4x256xf32> to vector<4x256xbf16>
    %c28_381 = arith.constant 28 : index
    %c0_382 = arith.constant 0 : index
    %408 = vector.load %arg7[%c28_381, %c0_382] : memref<36x256xbf16, #tpu.memory_space<vmem>>, vector<4x256xbf16>
    tpu.vector_store %arg7[%c28_381, %c0_382], %407 {strides = array<i32>} : memref<36x256xbf16, #tpu.memory_space<vmem>>, vector<4x256xbf16>,
    %cst_383 = arith.constant 1.000000e+00 : f32
    %409 = vector.broadcast %cst_383 : f32 to vector<1x256xf32>
    %410 = arith.subf %409, %343 : vector<1x256xf32>
    %411 = vector.broadcast %410 : vector<1x256xf32> to vector<4x256xf32>
    %412 = arith.mulf %352, %411 : vector<4x256xf32>
    %413 = arith.addf %347, %412 : vector<4x256xf32>
    %414 = arith.truncf %413 : vector<4x256xf32> to vector<4x256xbf16>
    %c32_384 = arith.constant 32 : index
    %c0_385 = arith.constant 0 : index
    %415 = vector.load %arg7[%c32_384, %c0_385] : memref<36x256xbf16, #tpu.memory_space<vmem>>, vector<4x256xbf16>
    tpu.vector_store %arg7[%c32_384, %c0_385], %414 {strides = array<i32>} : memref<36x256xbf16, #tpu.memory_space<vmem>>, vector<4x256xbf16>,
    %c0_386 = arith.constant 0 : index
    %c0_387 = arith.constant 0 : index
    %416 = vector.load %arg4[%c0_386, %c0_387] : memref<8x36xbf16, #tpu.memory_space<vmem>>, vector<8x36xbf16>
    %c0_388 = arith.constant 0 : index
    %c0_389 = arith.constant 0 : index
    %417 = vector.load %arg7[%c0_388, %c0_389] : memref<36x256xbf16, #tpu.memory_space<vmem>>, vector<36x256xbf16>
    %cst_390 = arith.constant dense<0.000000e+00> : vector<8x256xf32>
    %418 = tpu.matmul %416, %417, %cst_390 {dimension_numbers = #tpu.dot_dimension_numbers<[1], [0], [0], [1], [0, 0, 1, 1], [], []>} : vector<8x36xbf16>, vector<36x256xbf16>, vector<8x256xf32> -> vector<8x256xf32>
    %c0_391 = arith.constant 0 : index
    %c0_392 = arith.constant 0 : index
    %419 = vector.load %arg5[%c0_391, %c0_392] : memref<8x1xf32, #tpu.memory_space<vmem>>, vector<8x1xf32>
    %420 = vector.broadcast %419 : vector<8x1xf32> to vector<8x256xf32>
    %421 = arith.addf %418, %420 : vector<8x256xf32>
    %422 = arith.truncf %421 : vector<8x256xf32> to vector<8x256xbf16>
    %c0_393 = arith.constant 0 : index
    %c0_394 = arith.constant 0 : index
    %c0_395 = arith.constant 0 : index
    %423 = vector.load %arg6[%c0_393, %c0_394, %c0_395] : memref<1x8x256xbf16, #tpu.memory_space<vmem>>, vector<1x8x256xbf16>
    %424 = vector.shape_cast %423 : vector<1x8x256xbf16> to vector<8x256xbf16>
    %425 = vector.shape_cast %422 : vector<8x256xbf16> to vector<1x8x256xbf16>
    tpu.vector_store %arg6[%c0_393, %c0_394, %c0_395], %425 {strides = array<i32>} : memref<1x8x256xbf16, #tpu.memory_space<vmem>>, vector<1x8x256xbf16>,
    return
  }
  func.func @transform_0(%arg0: i32, %arg1: i32) -> (i32, i32, i32, i32) {
    %c0_i32 = arith.constant 0 : i32
    %c0_i32_0 = arith.constant 0 : i32
    %c0_i32_1 = arith.constant 0 : i32
    %c0_i32_2 = arith.constant 0 : i32
    return %arg0, %c0_i32, %c0_i32_0, %c0_i32_1 : i32, i32, i32, i32
  }
  func.func @transform_1(%arg0: i32, %arg1: i32) -> (i32, i32, i32) {
    %c0_i32 = arith.constant 0 : i32
    %c0_i32_0 = arith.constant 0 : i32
    return %arg0, %c0_i32, %arg1 : i32, i32, i32
  }
  func.func @transform_2(%arg0: i32, %arg1: i32) -> (i32, i32) {
    %c0_i32 = arith.constant 0 : i32
    %c0_i32_0 = arith.constant 0 : i32
    %c0_i32_1 = arith.constant 0 : i32
    return %c0_i32, %c0_i32_0 : i32, i32
  }
  func.func @transform_3(%arg0: i32, %arg1: i32) -> (i32, i32) {
    %c0_i32 = arith.constant 0 : i32
    %c0_i32_0 = arith.constant 0 : i32
    %c0_i32_1 = arith.constant 0 : i32
    return %c0_i32, %c0_i32_0 : i32, i32
  }
  func.func @transform_4(%arg0: i32, %arg1: i32) -> (i32, i32, i32) {
    %c0_i32 = arith.constant 0 : i32
    %c0_i32_0 = arith.constant 0 : i32
    return %arg0, %c0_i32, %arg1 : i32, i32, i32
  }
}

</mosaic_0001>

<llo_original>
// kernel: tpu_custom_call.1
$region0: #{tpu_custom_call.1}
  #allocation0 [shape = 'u32[]', space=smem, size = 0x4, offset = 0x4, fixed_abs, tag = 'smem constant byte address 0x4 - core index']
  #allocation1 [shape = 'u32[144,128]{1,0:T(1,128)}', space=vmem, size = 0x12000, scoped, tag = 'internal scratch']
  #allocation2 [shape = 'bf16[36,256]{1,0:T(8,128)(2,1)}', space=vmem, size = 0x5000, scoped, tag = 'scratch operand']
  %s0 = inlined_call_operand.hbm [shape: bf16[2,18,4,18], index: 0, kind: input, shape index: {}]
  %s1 = inlined_call_operand.vmem [shape: bf16[2,9,256], index: 1, kind: input, shape index: {}]
  %s2 = inlined_call_operand.vmem [shape: bf16[8,36], index: 2, kind: input, shape index: {}]
  %s3 = inlined_call_operand.vmem [shape: f32[8,1], index: 3, kind: input, shape index: {}]
  %s4 = inlined_call_operand.hbm [shape: bf16[2,8,256], index: 4, kind: output, shape index: {}]
  %s5 = sld [smem:[#allocation0]]
  $region53: #{tpu_custom_call.1} parent=0
    _
  %s7 = ssub.s32 1, %s5
  %s8 = scalar_select 0, %s7, %s5
  $region1: #{tpu_custom_call.1} parent=0
    #allocation3 [shape = 'u8[36864]{0}', space=vmem, size = 0x9000, scoped, tag = 'input window, operand 0']
    #allocation4 [shape = 's32[2]{0}', space=sflag, size = 0x8, scoped, tag = 'scoped memory for tpu_custom_call.1']
    #allocation5 [shape = 's32[2]{0}', space=sflag, size = 0x8, scoped, tag = 'scoped memory for tpu_custom_call.1']
    #allocation6 [shape = 'u8[8192]{0}', space=vmem, size = 0x2000, scoped, tag = 'output window, operand 0']
    %9 = vsyncpa [#allocation4], 0
    %s10 = scalar_lea.sflag [#allocation4], 1
    %11 = vsyncpa %s10, 0
    %12 = vsyncpa [#allocation5], 0
    %s13 = scalar_lea.sflag [#allocation5], 1
    %14 = vsyncpa %s13, 0
    loop: start=0, step=1, limit=4
    $region2: #{tpu_custom_call.1} parent=1 // loop_pre_header
      _
    $region3: #{tpu_custom_call.1} parent=1 // loop_header
      %s16 = sphi 0, %s20
      %p17 = scmp.ge.s32.totalorder %s16, 4
      %s23 = sphi 0, %s35
      %s24 = sphi 0, %s31
      %s25 = sphi 0, %s23
      %s26 = sphi 0, %s24
      %s27 = sphi 0, %s25
      %s28 = sphi 0, %s26
      %s38 = sphi 0, %s40
      %s41 = sphi 0, %s38
      %s42 = sphi 0, %s41
      %s58 = sphi 0, %s42
      %s66 = sphi 0, %s68
      %s69 = sphi 0, %s66
      %s70 = sphi 0, %s69
      %s86 = sphi 0, %s70
      %s90 = sphi 0, %s90
      %s92 = sphi 0, %s90
      %s93 = sphi 0, %s92
      %s107 = sphi 0, %s93
      %s111 = sphi 0, %s111
      %s113 = sphi 0, %s111
      %s114 = sphi 0, %s113
      %s128 = sphi 0, %s114
      %s136 = sphi 0, %s138
      %s139 = sphi 0, %s136
      %s140 = sphi 0, %s139
      %s156 = sphi 0, %s140
    $region4: #{tpu_custom_call.1} parent=1 // loop_header_branch
      %19 = sbr.rel (%p17) target = $region8
    $region5: #{tpu_custom_call.1} parent=1 // loop_body
      %s21 = ssub.s32 %s16, 1
      %s22 = ssub.s32 %s16, 2
      %s29 = sadd.s32 1, %s24
      %p30 = scmp.ge.s32.totalorder %s29, 1
      %s31 = scalar_select %p30, 0, %s29
      %s32 = sadd.s32 1, %s23
      %s33 = scalar_select %p30, %s32, %s23
      %p34 = scmp.ge.s32.totalorder %s33, 2
      %s35 = scalar_select %p34, 0, %s33
      %s36 = ssub.s32 %s23, %s35
      %p37 = scmp.eq.s32.totalorder %s36, 0
      %s39 = sadd.s32 %s38, 1
      %s40 = scalar_select %p37, %s38, %s39
      %p43 = pneg %p37
      %p44 = scmp.eq.s32.totalorder %s16, 1
      %p45 = por %p43, %p44
      %p46 = scmp.ne.s32.totalorder %s38, %s41
      %p47 = scmp.eq.s32.totalorder %s16, 0
      %p48 = por %p46, %p47
      %p49 = scmp.ne.s32.totalorder %s38, %s41
      %p50 = scmp.eq.s32.totalorder %s21, 1
      %p51 = por %p49, %p50
      %p52 = scmp.ne.s32.totalorder %s41, %s42
      %p53 = scmp.eq.s32.totalorder %s21, 0
      %p54 = por %p52, %p53
      %p55 = scmp.ne.s32.totalorder %s41, %s42
      %p56 = scmp.eq.s32.totalorder %s22, 1
      %p57 = por %p55, %p56
      %p59 = scmp.ne.s32.totalorder %s42, %s58
      %p60 = scmp.eq.s32.totalorder %s22, 0
      %p61 = por %p59, %p60
      %s62 = ssub.s32 %s23, %s35
      %s63 = ssub.s32 %s24, %s31
      %s64 = sor.u32 %s62, %s63
      %p65 = scmp.eq.s32.totalorder %s64, 0
      %s67 = sadd.s32 %s66, 1
      %s68 = scalar_select %p65, %s66, %s67
      %p71 = pneg %p65
      %p72 = scmp.eq.s32.totalorder %s16, 1
      %p73 = por %p71, %p72
      %p74 = scmp.ne.s32.totalorder %s66, %s69
      %p75 = scmp.eq.s32.totalorder %s16, 0
      %p76 = por %p74, %p75
      %p77 = scmp.ne.s32.totalorder %s66, %s69
      %p78 = scmp.eq.s32.totalorder %s21, 1
      %p79 = por %p77, %p78
      %p80 = scmp.ne.s32.totalorder %s69, %s70
      %p81 = scmp.eq.s32.totalorder %s21, 0
      %p82 = por %p80, %p81
      %p83 = scmp.ne.s32.totalorder %s69, %s70
      %p84 = scmp.eq.s32.totalorder %s22, 1
      %p85 = por %p83, %p84
      %p87 = scmp.ne.s32.totalorder %s70, %s86
      %p88 = scmp.eq.s32.totalorder %s22, 0
      %p89 = por %p87, %p88
      %s91 = sadd.s32 %s90, 1
      %p94 = scmp.eq.s32.totalorder %s16, 1
      %p95 = scmp.ne.s32.totalorder %s90, %s92
      %p96 = scmp.eq.s32.totalorder %s16, 0
      %p97 = por %p95, %p96
      %p98 = scmp.ne.s32.totalorder %s90, %s92
      %p99 = scmp.eq.s32.totalorder %s21, 1
      %p100 = por %p98, %p99
      %p101 = scmp.ne.s32.totalorder %s92, %s93
      %p102 = scmp.eq.s32.totalorder %s21, 0
      %p103 = por %p101, %p102
      %p104 = scmp.ne.s32.totalorder %s92, %s93
      %p105 = scmp.eq.s32.totalorder %s22, 1
      %p106 = por %p104, %p105
      %p108 = scmp.ne.s32.totalorder %s93, %s107
      %p109 = scmp.eq.s32.totalorder %s22, 0
      %p110 = por %p108, %p109
      %s112 = sadd.s32 %s111, 1
      %p115 = scmp.eq.s32.totalorder %s16, 1
      %p116 = scmp.ne.s32.totalorder %s111, %s113
      %p117 = scmp.eq.s32.totalorder %s16, 0
      %p118 = por %p116, %p117
      %p119 = scmp.ne.s32.totalorder %s111, %s113
      %p120 = scmp.eq.s32.totalorder %s21, 1
      %p121 = por %p119, %p120
      %p122 = scmp.ne.s32.totalorder %s113, %s114
      %p123 = scmp.eq.s32.totalorder %s21, 0
      %p124 = por %p122, %p123
      %p125 = scmp.ne.s32.totalorder %s113, %s114
      %p126 = scmp.eq.s32.totalorder %s22, 1
      %p127 = por %p125, %p126
      %p129 = scmp.ne.s32.totalorder %s114, %s128
      %p130 = scmp.eq.s32.totalorder %s22, 0
      %p131 = por %p129, %p130
      %s132 = ssub.s32 %s23, %s35
      %s133 = ssub.s32 %s24, %s31
      %s134 = sor.u32 %s132, %s133
      %p135 = scmp.eq.s32.totalorder %s134, 0
      %s137 = sadd.s32 %s136, 1
      %s138 = scalar_select %p135, %s136, %s137
      %p141 = pneg %p135
      %p142 = scmp.eq.s32.totalorder %s16, 1
      %p143 = por %p141, %p142
      %p144 = scmp.ne.s32.totalorder %s136, %s139
      %p145 = scmp.eq.s32.totalorder %s16, 0
      %p146 = por %p144, %p145
      %p147 = scmp.ne.s32.totalorder %s136, %s139
      %p148 = scmp.eq.s32.totalorder %s21, 1
      %p149 = por %p147, %p148
      %p150 = scmp.ne.s32.totalorder %s139, %s140
      %p151 = scmp.eq.s32.totalorder %s21, 0
      %p152 = por %p150, %p151
      %p153 = scmp.ne.s32.totalorder %s139, %s140
      %p154 = scmp.eq.s32.totalorder %s22, 1
      %p155 = por %p153, %p154
      %p157 = scmp.ne.s32.totalorder %s140, %s156
      %p158 = scmp.eq.s32.totalorder %s22, 0
      %p159 = por %p157, %p158
      %p160 = scmp.le.s32.totalorder 1, %s16
      %p161 = scmp.lt.s32.totalorder %s16, 3
      %p162 = pnand %p160, %p161
      %p163 = pneg %p162
      // Predicated region
      $region9: #{tpu_custom_call.1} parent=5 // pred_check
        _
      $region10: #{tpu_custom_call.1} parent=5 // pred_check_branch
        %165 = sbr.rel (%p162) target = $region12
      $region11: #{tpu_custom_call.1} parent=5 // pred_region
        %s166 = ssub.s32 %s16, 1
        // Predicated region
        $region13: #{tpu_custom_call.1} parent=11 // pred_check
          %p167 = pneg %p103
        $region14: #{tpu_custom_call.1} parent=11 // pred_check_branch
          %169 = sbr.rel (%p167) target = $region16
        $region15: #{tpu_custom_call.1} parent=11 // pred_region
          _
        $region16: #{tpu_custom_call.1} parent=11 // pred_fallthru
          _
        // Predicated region
        $region17: #{tpu_custom_call.1} parent=11 // pred_check
          %p170 = pneg %p124
        $region18: #{tpu_custom_call.1} parent=11 // pred_check_branch
          %172 = sbr.rel (%p170) target = $region20
        $region19: #{tpu_custom_call.1} parent=11 // pred_region
          _
        $region20: #{tpu_custom_call.1} parent=11 // pred_fallthru
          _
      $region12: #{tpu_custom_call.1} parent=5 // pred_fallthru
        _
      %p173 = scmp.lt.s32.totalorder %s16, 2
      // Predicated region
      $region21: #{tpu_custom_call.1} parent=5 // pred_check
        %p174 = pneg %p173
      $region22: #{tpu_custom_call.1} parent=5 // pred_check_branch
        %176 = sbr.rel (%p174) target = $region24
      $region23: #{tpu_custom_call.1} parent=5 // pred_region
        // Predicated region
        $region25: #{tpu_custom_call.1} parent=23 // pred_check
          %p177 = pneg %p48
        $region26: #{tpu_custom_call.1} parent=23 // pred_check_branch
          %179 = sbr.rel (%p177) target = $region28
        $region27: #{tpu_custom_call.1} parent=23 // pred_region
          %s180 = sand.u32 %s38, 1
          %s181 = scalar_lea.sflag [#allocation4], %s180
          %s182 = sand.u32 %s38, 1
          %s183 = smul.addr %s182, 36
          %s184 = scalar_lea.vmem [#allocation3], %s183
          %s186 = ssub.s32 576, 576
          %187 = vsyncadd %s181, %s186
          %s188 = smul.addr %s23, 18
          %s189 = smul.addr %s188, 32
          %s190 = scalar_lea.hbm %s0, %s189
          %s191 = sshll.u32 %s184, 4
          %s192 = int_to_ptr.vmem [resolvable:$true] %s191
          %197 = dma.hbm_to_vmem [thread:$0]  %s190, 576, %s192, %s181, 32, 32, 2
        $region28: #{tpu_custom_call.1} parent=23 // pred_fallthru
          _
        // Predicated region
        $region29: #{tpu_custom_call.1} parent=23 // pred_check
          %p198 = pneg %p76
        $region30: #{tpu_custom_call.1} parent=23 // pred_check_branch
          %200 = sbr.rel (%p198) target = $region32
        $region31: #{tpu_custom_call.1} parent=23 // pred_region
          %s201 = smul.u32 2, %s24
          %p202 = scmp.lt.s32.totalorder %s23, 1
          %s203 = scalar_select %p202, %s23, 1
          %p204 = scmp.lt.s32.totalorder %s201, 1
          %s205 = scalar_select %p204, %s201, 1
          %s206 = smul.addr %s203, 4
          %s207 = sadd.s32 %s205, %s206
          %s208 = smul.addr %s207, 4
          %s209 = scalar_lea.vmem %s1, %s208
          %s210 = smul.u32 2, %s24
        $region32: #{tpu_custom_call.1} parent=23 // pred_fallthru
          _
      $region24: #{tpu_custom_call.1} parent=5 // pred_fallthru
        _
      %p211 = scmp.le.s32.totalorder 1, %s16
      %p212 = scmp.lt.s32.totalorder %s16, 3
      %p213 = pnand %p211, %p212
      %p214 = pneg %p213
      // Predicated region
      $region33: #{tpu_custom_call.1} parent=5 // pred_check
        _
      $region34: #{tpu_custom_call.1} parent=5 // pred_check_branch
        %216 = sbr.rel (%p213) target = $region36
      $region35: #{tpu_custom_call.1} parent=5 // pred_region
        %s217 = ssub.s32 %s16, 1
        %s218 = sand.u32 %s41, 1
        %s219 = scalar_lea.sflag [#allocation4], %s218
        %s220 = sand.u32 %s41, 1
        %s221 = smul.addr %s220, 36
        %s222 = scalar_lea.vmem [#allocation3], %s221
        // Predicated region
        $region37: #{tpu_custom_call.1} parent=35 // pred_check
          %p223 = pneg %p54
        $region38: #{tpu_custom_call.1} parent=35 // pred_check_branch
          %225 = sbr.rel (%p223) target = $region40
        $region39: #{tpu_custom_call.1} parent=35 // pred_region
          %226 = dma.done %s219, 576
        $region40: #{tpu_custom_call.1} parent=35 // pred_fallthru
          _
        %s227 = sand.u32 %s41, 1
        %s228 = scalar_lea.sflag [#allocation4], %s227
        %s229 = sand.u32 %s41, 1
        %s230 = smul.addr %s229, 36
        %s231 = scalar_lea.vmem [#allocation3], %s230
        %p232 = pneg %p54
        %p233 = pneg %p51
        %s234 = smul.u32 2, %s26
        %p235 = scmp.lt.s32.totalorder %s25, 1
        %s236 = scalar_select %p235, %s25, 1
        %p237 = scmp.lt.s32.totalorder %s234, 1
        %s238 = scalar_select %p237, %s234, 1
        %s239 = smul.addr %s236, 4
        %s240 = sadd.s32 %s238, %s239
        %s241 = smul.addr %s240, 4
        %s242 = scalar_lea.vmem %s1, %s241
        %p243 = pneg %p82
        %p244 = pneg %p79
        %p245 = pneg %p103
        %p246 = pneg %p100
        %p247 = pneg %p124
        %p248 = pneg %p121
        %p249 = pneg %p152
        %p250 = pneg %p149
        %s251 = sand.u32 %s139, 1
        %s252 = scalar_lea.sflag [#allocation5], %s251
        %s253 = sand.u32 %s139, 1
        %s254 = smul.addr %s253, 8
        %s255 = scalar_lea.vmem [#allocation6], %s254
        %s256 = smul.u32 2, %s26
        %p257 = scmp.lt.s32.totalorder %s25, 1
        %s258 = scalar_select %p257, %s25, 1
        %p259 = scmp.lt.s32.totalorder %s256, 1
        %s260 = scalar_select %p259, %s256, 1
        %s261 = smul.addr %s258, 4
        %s262 = sadd.s32 %s260, %s261
        %s263 = smul.addr %s262, 4
        %s264 = scalar_lea.vmem %s1, %s263
        %s265 = smul.u32 2, %s26
        %s266 = smul.u32 2, %s26
        %s268 = smul.u32 %s26, 16
        %s269 = smul.addr %s268, 2
        %s270 = scalar_lea.vmem %s222, %s269 [#allocation3]
        %v271 = vld [vmem:[%s270] sm:$0x3]
        %vm272 = vcmask 123904
        %273 = vst.msk [vmem:[#allocation2] sm:$0x3] %vm272, %v271
        %v275 = vcombine.low %v271, %v271
        %v277 = vunpack.c.l.s4 1983009808
        %v278 = vunpack.c.0.s8 %v277
        %v279 = vlaneseq
        %v280 = vshrl.u32 %v279, 7
        %v281 = vsub.s32 %v278, %v280
        %v282 = vrot.slane %v275, %v281
        %283 = vrot.lane.b32.xlu0 %v282, 127
        %v284 = vpop.permute.xlu0 %283
        %vm286 = vcmask 125954
        %287 = vst.msk [vmem:[#allocation2] sm:$0xc] %vm286, %v284
        %v289 = vunpack.c.l.s4 1983009808
        %v290 = vunpack.c.0.s8 %v289
        %v291 = vlaneseq
        %v292 = vshrl.u32 %v291, 7
        %v293 = vsub.s32 %v290, %v292
        %v294 = vrot.slane %v271, %v293
        %295 = vrot.lane.b32.xlu0 %v294, 126
        %v296 = vpop.permute.xlu0 %295
        %298 = vst.msk [vmem:[#allocation2 + $0x8] sm:$0x3] %vm272, %v296
        %s299 = sadd.s32 %s268, 1
        %s300 = smul.addr %s299, 2
        %s301 = scalar_lea.vmem %s222, %s300 [#allocation3]
        %v302 = vld [vmem:[%s301] sm:$0x3]
        %v305 = vunpack.c.l.s4 1983009808
        %v306 = vunpack.c.0.s8 %v305
        %v307 = vlaneseq
        %v308 = vshrl.u32 %v307, 7
        %v309 = vsub.s32 %v306, %v308
        %v310 = vrot.slane %v302, %v309
        %311 = vrot.lane.b32.xlu0 %v310, 16
        %v312 = vpop.permute.xlu0 %311
        %vm314 = vcmask 255104
        %315 = vst.msk [vmem:[#allocation2] sm:$0x3] %vm314, %v312
        %v316 = vcombine.low %v302, %v302
        %v318 = vunpack.c.l.s4 1983009808
        %v319 = vunpack.c.0.s8 %v318
        %v320 = vlaneseq
        %v321 = vshrl.u32 %v320, 7
        %v322 = vsub.s32 %v319, %v321
        %v323 = vrot.slane %v316, %v322
        %325 = vst.msk [vmem:[#allocation2 + $0x8] sm:$0xc] %vm286, %v323
        %326 = vrot.lane.b32.xlu0 %v323, 15
        %v327 = vpop.permute.xlu0 %326
        %vm329 = vcmask 257154
        %330 = vst.msk [vmem:[#allocation2] sm:$0xc] %vm329, %v327
        %331 = vrot.lane.b32.xlu0 %v310, 127
        %v332 = vpop.permute.xlu0 %331
        %334 = vst.msk [vmem:[#allocation2 + $0x10] sm:$0x3] %vm272, %v332
        %335 = vrot.lane.b32.xlu0 %v310, 14
        %v336 = vpop.permute.xlu0 %335
        %338 = vst.msk [vmem:[#allocation2 + $0x8] sm:$0x3] %vm314, %v336
        %339 = vrot.lane.b32.xlu0 %v323, 126
        %v340 = vpop.permute.xlu0 %339
        %342 = vst.msk [vmem:[#allocation2 + $0x10] sm:$0xc] %vm286, %v340
        %s343 = sadd.s32 %s268, 2
        %s344 = smul.addr %s343, 2
        %s345 = scalar_lea.vmem %s222, %s344 [#allocation3]
        %v346 = vld [vmem:[%s345] sm:$0x3]
        %v349 = vunpack.c.l.s4 1983009808
        %v350 = vunpack.c.0.s8 %v349
        %v351 = vlaneseq
        %v352 = vshrl.u32 %v351, 7
        %v353 = vsub.s32 %v350, %v352
        %v354 = vrot.slane %v346, %v353
        %355 = vrot.lane.b32.xlu0 %v354, 32
        %v356 = vpop.permute.xlu0 %355
        %vm358 = vcmask 386304
        %359 = vst.msk [vmem:[#allocation2] sm:$0x3] %vm358, %v356
        %v360 = vcombine.low %v346, %v346
        %v362 = vunpack.c.l.s4 1983009808
        %v363 = vunpack.c.0.s8 %v362
        %v364 = vlaneseq
        %v365 = vshrl.u32 %v364, 7
        %v366 = vsub.s32 %v363, %v365
        %v367 = vrot.slane %v360, %v366
        %368 = vrot.lane.b32.xlu0 %v367, 16
        %v369 = vpop.permute.xlu0 %368
        %371 = vst.msk [vmem:[#allocation2 + $0x8] sm:$0xc] %vm329, %v369
        %372 = vst.msk [vmem:[#allocation2 + $0x18] sm:$0x3] %vm272, %v346
        %373 = vrot.lane.b32.xlu0 %v367, 31
        %v374 = vpop.permute.xlu0 %373
        %vm376 = vcmask 388354
        %377 = vst.msk [vmem:[#allocation2] sm:$0xc] %vm376, %v374
        %378 = vrot.lane.b32.xlu0 %v354, 15
        %v379 = vpop.permute.xlu0 %378
        %381 = vst.msk [vmem:[#allocation2 + $0x10] sm:$0x3] %vm314, %v379
        %382 = vrot.lane.b32.xlu0 %v367, 127
        %v383 = vpop.permute.xlu0 %382
        %385 = vst.msk [vmem:[#allocation2 + $0x18] sm:$0xc] %vm286, %v383
        %386 = vrot.lane.b32.xlu0 %v354, 30
        %v387 = vpop.permute.xlu0 %386
        %389 = vst.msk [vmem:[#allocation2 + $0x8] sm:$0x3] %vm358, %v387
        %390 = vrot.lane.b32.xlu0 %v367, 14
        %v391 = vpop.permute.xlu0 %390
        %393 = vst.msk [vmem:[#allocation2 + $0x10] sm:$0xc] %vm329, %v391
        %394 = vrot.lane.b32.xlu0 %v354, 126
        %v395 = vpop.permute.xlu0 %394
        %397 = vst.msk [vmem:[#allocation2 + $0x20] sm:$0x3] %vm272, %v395
        %s398 = sadd.s32 %s268, 3
        %s399 = smul.addr %s398, 2
        %s400 = scalar_lea.vmem %s222, %s399 [#allocation3]
        %v401 = vld [vmem:[%s400] sm:$0x3]
        %v404 = vunpack.c.l.s4 1983009808
        %v405 = vunpack.c.0.s8 %v404
        %v406 = vlaneseq
        %v407 = vshrl.u32 %v406, 7
        %v408 = vsub.s32 %v405, %v407
        %v409 = vrot.slane %v401, %v408
        %410 = vrot.lane.b32.xlu0 %v409, 48
        %v411 = vpop.permute.xlu0 %410
        %vm413 = vcmask 517504
        %414 = vst.msk [vmem:[#allocation2] sm:$0x3] %vm413, %v411
        %v415 = vcombine.low %v401, %v401
        %v417 = vunpack.c.l.s4 1983009808
        %v418 = vunpack.c.0.s8 %v417
        %v419 = vlaneseq
        %v420 = vshrl.u32 %v419, 7
        %v421 = vsub.s32 %v418, %v420
        %v422 = vrot.slane %v415, %v421
        %423 = vrot.lane.b32.xlu0 %v422, 32
        %v424 = vpop.permute.xlu0 %423
        %426 = vst.msk [vmem:[#allocation2 + $0x8] sm:$0xc] %vm376, %v424
        %427 = vrot.lane.b32.xlu0 %v409, 16
        %v428 = vpop.permute.xlu0 %427
        %430 = vst.msk [vmem:[#allocation2 + $0x18] sm:$0x3] %vm314, %v428
        %431 = vrot.lane.b32.xlu0 %v422, 47
        %v432 = vpop.permute.xlu0 %431
        %vm434 = vcmask 519554
        %435 = vst.msk [vmem:[#allocation2] sm:$0xc] %vm434, %v432
        %436 = vrot.lane.b32.xlu0 %v409, 31
        %v437 = vpop.permute.xlu0 %436
        %439 = vst.msk [vmem:[#allocation2 + $0x10] sm:$0x3] %vm358, %v437
        %440 = vrot.lane.b32.xlu0 %v422, 15
        %v441 = vpop.permute.xlu0 %440
        %443 = vst.msk [vmem:[#allocation2 + $0x18] sm:$0xc] %vm329, %v441
        %444 = vrot.lane.b32.xlu0 %v409, 46
        %v445 = vpop.permute.xlu0 %444
        %447 = vst.msk [vmem:[#allocation2 + $0x8] sm:$0x3] %vm413, %v445
        %448 = vrot.lane.b32.xlu0 %v422, 30
        %v449 = vpop.permute.xlu0 %448
        %451 = vst.msk [vmem:[#allocation2 + $0x10] sm:$0xc] %vm376, %v449
        %452 = vrot.lane.b32.xlu0 %v409, 14
        %v453 = vpop.permute.xlu0 %452
        %455 = vst.msk [vmem:[#allocation2 + $0x20] sm:$0x3] %vm314, %v453
        %s456 = sadd.s32 %s268, 4
        %s457 = smul.addr %s456, 2
        %s458 = scalar_lea.vmem %s222, %s457 [#allocation3]
        %v459 = vld [vmem:[%s458] sm:$0x3]
        %v462 = vunpack.c.l.s4 1983009808
        %v463 = vunpack.c.0.s8 %v462
        %v464 = vlaneseq
        %v465 = vshrl.u32 %v464, 7
        %v466 = vsub.s32 %v463, %v465
        %v467 = vrot.slane %v459, %v466
        %468 = vrot.lane.b32.xlu0 %v467, 64
        %v469 = vpop.permute.xlu0 %468
        %vm471 = vcmask 648704
        %472 = vst.msk [vmem:[#allocation2] sm:$0x3] %vm471, %v469
        %v473 = vcombine.low %v459, %v459
        %v475 = vunpack.c.l.s4 1983009808
        %v476 = vunpack.c.0.s8 %v475
        %v477 = vlaneseq
        %v478 = vshrl.u32 %v477, 7
        %v479 = vsub.s32 %v476, %v478
        %v480 = vrot.slane %v473, %v479
        %481 = vrot.lane.b32.xlu0 %v480, 48
        %v482 = vpop.permute.xlu0 %481
        %484 = vst.msk [vmem:[#allocation2 + $0x8] sm:$0xc] %vm434, %v482
        %485 = vrot.lane.b32.xlu0 %v467, 32
        %v486 = vpop.permute.xlu0 %485
        %488 = vst.msk [vmem:[#allocation2 + $0x18] sm:$0x3] %vm358, %v486
        %489 = vrot.lane.b32.xlu0 %v480, 63
        %v490 = vpop.permute.xlu0 %489
        %vm492 = vcmask 650754
        %493 = vst.msk [vmem:[#allocation2] sm:$0xc] %vm492, %v490
        %494 = vrot.lane.b32.xlu0 %v467, 47
        %v495 = vpop.permute.xlu0 %494
        %497 = vst.msk [vmem:[#allocation2 + $0x10] sm:$0x3] %vm413, %v495
        %498 = vrot.lane.b32.xlu0 %v480, 31
        %v499 = vpop.permute.xlu0 %498
        %501 = vst.msk [vmem:[#allocation2 + $0x18] sm:$0xc] %vm376, %v499
        %502 = vrot.lane.b32.xlu0 %v467, 62
        %v503 = vpop.permute.xlu0 %502
        %505 = vst.msk [vmem:[#allocation2 + $0x8] sm:$0x3] %vm471, %v503
        %506 = vrot.lane.b32.xlu0 %v480, 46
        %v507 = vpop.permute.xlu0 %506
        %509 = vst.msk [vmem:[#allocation2 + $0x10] sm:$0xc] %vm434, %v507
        %510 = vrot.lane.b32.xlu0 %v467, 30
        %v511 = vpop.permute.xlu0 %510
        %513 = vst.msk [vmem:[#allocation2 + $0x20] sm:$0x3] %vm358, %v511
        %s514 = sadd.s32 %s268, 5
        %s515 = smul.addr %s514, 2
        %s516 = scalar_lea.vmem %s222, %s515 [#allocation3]
        %v517 = vld [vmem:[%s516] sm:$0x3]
        %v520 = vunpack.c.l.s4 1983009808
        %v521 = vunpack.c.0.s8 %v520
        %v522 = vlaneseq
        %v523 = vshrl.u32 %v522, 7
        %v524 = vsub.s32 %v521, %v523
        %v525 = vrot.slane %v517, %v524
        %526 = vrot.lane.b32.xlu0 %v525, 80
        %v527 = vpop.permute.xlu0 %526
        %vm529 = vcmask 779904
        %530 = vst.msk [vmem:[#allocation2] sm:$0x3] %vm529, %v527
        %v531 = vcombine.low %v517, %v517
        %v533 = vunpack.c.l.s4 1983009808
        %v534 = vunpack.c.0.s8 %v533
        %v535 = vlaneseq
        %v536 = vshrl.u32 %v535, 7
        %v537 = vsub.s32 %v534, %v536
        %v538 = vrot.slane %v531, %v537
        %539 = vrot.lane.b32.xlu0 %v538, 64
        %v540 = vpop.permute.xlu0 %539
        %542 = vst.msk [vmem:[#allocation2 + $0x8] sm:$0xc] %vm492, %v540
        %543 = vrot.lane.b32.xlu0 %v525, 48
        %v544 = vpop.permute.xlu0 %543
        %546 = vst.msk [vmem:[#allocation2 + $0x18] sm:$0x3] %vm413, %v544
        %547 = vrot.lane.b32.xlu0 %v538, 79
        %v548 = vpop.permute.xlu0 %547
        %vm550 = vcmask 781954
        %551 = vst.msk [vmem:[#allocation2] sm:$0xc] %vm550, %v548
        %552 = vrot.lane.b32.xlu0 %v525, 63
        %v553 = vpop.permute.xlu0 %552
        %555 = vst.msk [vmem:[#allocation2 + $0x10] sm:$0x3] %vm471, %v553
        %556 = vrot.lane.b32.xlu0 %v538, 47
        %v557 = vpop.permute.xlu0 %556
        %559 = vst.msk [vmem:[#allocation2 + $0x18] sm:$0xc] %vm434, %v557
        %560 = vrot.lane.b32.xlu0 %v525, 78
        %v561 = vpop.permute.xlu0 %560
        %563 = vst.msk [vmem:[#allocation2 + $0x8] sm:$0x3] %vm529, %v561
        %564 = vrot.lane.b32.xlu0 %v538, 62
        %v565 = vpop.permute.xlu0 %564
        %567 = vst.msk [vmem:[#allocation2 + $0x10] sm:$0xc] %vm492, %v565
        %568 = vrot.lane.b32.xlu0 %v525, 46
        %v569 = vpop.permute.xlu0 %568
        %571 = vst.msk [vmem:[#allocation2 + $0x20] sm:$0x3] %vm413, %v569
        %s572 = sadd.s32 %s268, 6
        %s573 = smul.addr %s572, 2
        %s574 = scalar_lea.vmem %s222, %s573 [#allocation3]
        %v575 = vld [vmem:[%s574] sm:$0x3]
        %v578 = vunpack.c.l.s4 1983009808
        %v579 = vunpack.c.0.s8 %v578
        %v580 = vlaneseq
        %v581 = vshrl.u32 %v580, 7
        %v582 = vsub.s32 %v579, %v581
        %v583 = vrot.slane %v575, %v582
        %584 = vrot.lane.b32.xlu0 %v583, 96
        %v585 = vpop.permute.xlu0 %584
        %vm587 = vcmask 911104
        %588 = vst.msk [vmem:[#allocation2] sm:$0x3] %vm587, %v585
        %v589 = vcombine.low %v575, %v575
        %v591 = vunpack.c.l.s4 1983009808
        %v592 = vunpack.c.0.s8 %v591
        %v593 = vlaneseq
        %v594 = vshrl.u32 %v593, 7
        %v595 = vsub.s32 %v592, %v594
        %v596 = vrot.slane %v589, %v595
        %597 = vrot.lane.b32.xlu0 %v596, 80
        %v598 = vpop.permute.xlu0 %597
        %600 = vst.msk [vmem:[#allocation2 + $0x8] sm:$0xc] %vm550, %v598
        %601 = vrot.lane.b32.xlu0 %v583, 64
        %v602 = vpop.permute.xlu0 %601
        %604 = vst.msk [vmem:[#allocation2 + $0x18] sm:$0x3] %vm471, %v602
        %605 = vrot.lane.b32.xlu0 %v596, 95
        %v606 = vpop.permute.xlu0 %605
        %vm608 = vcmask 913154
        %609 = vst.msk [vmem:[#allocation2] sm:$0xc] %vm608, %v606
        %610 = vrot.lane.b32.xlu0 %v583, 79
        %v611 = vpop.permute.xlu0 %610
        %613 = vst.msk [vmem:[#allocation2 + $0x10] sm:$0x3] %vm529, %v611
        %614 = vrot.lane.b32.xlu0 %v596, 63
        %v615 = vpop.permute.xlu0 %614
        %617 = vst.msk [vmem:[#allocation2 + $0x18] sm:$0xc] %vm492, %v615
        %618 = vrot.lane.b32.xlu0 %v583, 94
        %v619 = vpop.permute.xlu0 %618
        %621 = vst.msk [vmem:[#allocation2 + $0x8] sm:$0x3] %vm587, %v619
        %622 = vrot.lane.b32.xlu0 %v596, 78
        %v623 = vpop.permute.xlu0 %622
        %625 = vst.msk [vmem:[#allocation2 + $0x10] sm:$0xc] %vm550, %v623
        %626 = vrot.lane.b32.xlu0 %v583, 62
        %v627 = vpop.permute.xlu0 %626
        %629 = vst.msk [vmem:[#allocation2 + $0x20] sm:$0x3] %vm471, %v627
        %s630 = sadd.s32 %s268, 7
        %s631 = smul.addr %s630, 2
        %s632 = scalar_lea.vmem %s222, %s631 [#allocation3]
        %v633 = vld [vmem:[%s632] sm:$0x3]
        %v636 = vunpack.c.l.s4 1983009808
        %v637 = vunpack.c.0.s8 %v636
        %v638 = vlaneseq
        %v639 = vshrl.u32 %v638, 7
        %v640 = vsub.s32 %v637, %v639
        %v641 = vrot.slane %v633, %v640
        %642 = vrot.lane.b32.xlu0 %v641, 112
        %v643 = vpop.permute.xlu0 %642
        %vm645 = vcmask 1042304
        %646 = vst.msk [vmem:[#allocation2] sm:$0x3] %vm645, %v643
        %v647 = vcombine.low %v633, %v633
        %v649 = vunpack.c.l.s4 1983009808
        %v650 = vunpack.c.0.s8 %v649
        %v651 = vlaneseq
        %v652 = vshrl.u32 %v651, 7
        %v653 = vsub.s32 %v650, %v652
        %v654 = vrot.slane %v647, %v653
        %655 = vrot.lane.b32.xlu0 %v654, 96
        %v656 = vpop.permute.xlu0 %655
        %658 = vst.msk [vmem:[#allocation2 + $0x8] sm:$0xc] %vm608, %v656
        %659 = vrot.lane.b32.xlu0 %v641, 80
        %v660 = vpop.permute.xlu0 %659
        %662 = vst.msk [vmem:[#allocation2 + $0x18] sm:$0x3] %vm529, %v660
        %663 = vrot.lane.b32.xlu0 %v654, 111
        %v664 = vpop.permute.xlu0 %663
        %vm666 = vcmask 1044354
        %667 = vst.msk [vmem:[#allocation2] sm:$0xc] %vm666, %v664
        %668 = vrot.lane.b32.xlu0 %v641, 95
        %v669 = vpop.permute.xlu0 %668
        %671 = vst.msk [vmem:[#allocation2 + $0x10] sm:$0x3] %vm587, %v669
        %672 = vrot.lane.b32.xlu0 %v654, 79
        %v673 = vpop.permute.xlu0 %672
        %675 = vst.msk [vmem:[#allocation2 + $0x18] sm:$0xc] %vm550, %v673
        %676 = vrot.lane.b32.xlu0 %v641, 110
        %v677 = vpop.permute.xlu0 %676
        %679 = vst.msk [vmem:[#allocation2 + $0x8] sm:$0x3] %vm645, %v677
        %680 = vrot.lane.b32.xlu0 %v654, 94
        %v681 = vpop.permute.xlu0 %680
        %683 = vst.msk [vmem:[#allocation2 + $0x10] sm:$0xc] %vm608, %v681
        %684 = vrot.lane.b32.xlu0 %v641, 78
        %v685 = vpop.permute.xlu0 %684
        %687 = vst.msk [vmem:[#allocation2 + $0x20] sm:$0x3] %vm529, %v685
        %s688 = sadd.s32 %s268, 8
        %s689 = smul.addr %s688, 2
        %s690 = scalar_lea.vmem %s222, %s689 [#allocation3]
        %v691 = vld [vmem:[%s690] sm:$0x3]
        %692 = vst.msk [vmem:[#allocation2 + $0x4] sm:$0x3] %vm272, %v691
        %v694 = vcombine.low %v691, %v691
        %v696 = vunpack.c.l.s4 1983009808
        %v697 = vunpack.c.0.s8 %v696
        %v698 = vlaneseq
        %v699 = vshrl.u32 %v698, 7
        %v700 = vsub.s32 %v697, %v699
        %v701 = vrot.slane %v694, %v700
        %702 = vrot.lane.b32.xlu0 %v701, 112
        %v703 = vpop.permute.xlu0 %702
        %705 = vst.msk [vmem:[#allocation2 + $0x8] sm:$0xc] %vm666, %v703
        %v707 = vunpack.c.l.s4 1983009808
        %v708 = vunpack.c.0.s8 %v707
        %v709 = vlaneseq
        %v710 = vshrl.u32 %v709, 7
        %v711 = vsub.s32 %v708, %v710
        %v712 = vrot.slane %v691, %v711
        %713 = vrot.lane.b32.xlu0 %v712, 96
        %v714 = vpop.permute.xlu0 %713
        %716 = vst.msk [vmem:[#allocation2 + $0x18] sm:$0x3] %vm587, %v714
        %717 = vrot.lane.b32.xlu0 %v701, 127
        %v718 = vpop.permute.xlu0 %717
        %720 = vst.msk [vmem:[#allocation2 + $0x4] sm:$0xc] %vm286, %v718
        %721 = vrot.lane.b32.xlu0 %v712, 111
        %v722 = vpop.permute.xlu0 %721
        %724 = vst.msk [vmem:[#allocation2 + $0x10] sm:$0x3] %vm645, %v722
        %725 = vrot.lane.b32.xlu0 %v701, 95
        %v726 = vpop.permute.xlu0 %725
        %728 = vst.msk [vmem:[#allocation2 + $0x18] sm:$0xc] %vm608, %v726
        %729 = vrot.lane.b32.xlu0 %v712, 126
        %v730 = vpop.permute.xlu0 %729
        %732 = vst.msk [vmem:[#allocation2 + $0xc] sm:$0x3] %vm272, %v730
        %733 = vrot.lane.b32.xlu0 %v701, 110
        %v734 = vpop.permute.xlu0 %733
        %736 = vst.msk [vmem:[#allocation2 + $0x10] sm:$0xc] %vm666, %v734
        %737 = vrot.lane.b32.xlu0 %v712, 94
        %v738 = vpop.permute.xlu0 %737
        %740 = vst.msk [vmem:[#allocation2 + $0x20] sm:$0x3] %vm587, %v738
        %s741 = sadd.s32 %s268, 9
        %s742 = smul.addr %s741, 2
        %s743 = scalar_lea.vmem %s222, %s742 [#allocation3]
        %v744 = vld [vmem:[%s743] sm:$0x3]
        %v747 = vunpack.c.l.s4 1983009808
        %v748 = vunpack.c.0.s8 %v747
        %v749 = vlaneseq
        %v750 = vshrl.u32 %v749, 7
        %v751 = vsub.s32 %v748, %v750
        %v752 = vrot.slane %v744, %v751
        %753 = vrot.lane.b32.xlu0 %v752, 16
        %v754 = vpop.permute.xlu0 %753
        %756 = vst.msk [vmem:[#allocation2 + $0x4] sm:$0x3] %vm314, %v754
        %v757 = vcombine.low %v744, %v744
        %v759 = vunpack.c.l.s4 1983009808
        %v760 = vunpack.c.0.s8 %v759
        %v761 = vlaneseq
        %v762 = vshrl.u32 %v761, 7
        %v763 = vsub.s32 %v760, %v762
        %v764 = vrot.slane %v757, %v763
        %766 = vst.msk [vmem:[#allocation2 + $0xc] sm:$0xc] %vm286, %v764
        %767 = vrot.lane.b32.xlu0 %v752, 112
        %v768 = vpop.permute.xlu0 %767
        %770 = vst.msk [vmem:[#allocation2 + $0x18] sm:$0x3] %vm645, %v768
        %771 = vrot.lane.b32.xlu0 %v764, 15
        %v772 = vpop.permute.xlu0 %771
        %774 = vst.msk [vmem:[#allocation2 + $0x4] sm:$0xc] %vm329, %v772
        %775 = vrot.lane.b32.xlu0 %v752, 127
        %v776 = vpop.permute.xlu0 %775
        %778 = vst.msk [vmem:[#allocation2 + $0x14] sm:$0x3] %vm272, %v776
        %779 = vrot.lane.b32.xlu0 %v764, 111
        %v780 = vpop.permute.xlu0 %779
        %782 = vst.msk [vmem:[#allocation2 + $0x18] sm:$0xc] %vm666, %v780
        %783 = vrot.lane.b32.xlu0 %v752, 14
        %v784 = vpop.permute.xlu0 %783
        %786 = vst.msk [vmem:[#allocation2 + $0xc] sm:$0x3] %vm314, %v784
        %787 = vrot.lane.b32.xlu0 %v764, 126
        %v788 = vpop.permute.xlu0 %787
        %790 = vst.msk [vmem:[#allocation2 + $0x14] sm:$0xc] %vm286, %v788
        %791 = vrot.lane.b32.xlu0 %v752, 110
        %v792 = vpop.permute.xlu0 %791
        %794 = vst.msk [vmem:[#allocation2 + $0x20] sm:$0x3] %vm645, %v792
        %s795 = sadd.s32 %s268, 10
        %s796 = smul.addr %s795, 2
        %s797 = scalar_lea.vmem %s222, %s796 [#allocation3]
        %v798 = vld [vmem:[%s797] sm:$0x3]
        %v801 = vunpack.c.l.s4 1983009808
        %v802 = vunpack.c.0.s8 %v801
        %v803 = vlaneseq
        %v804 = vshrl.u32 %v803, 7
        %v805 = vsub.s32 %v802, %v804
        %v806 = vrot.slane %v798, %v805
        %807 = vrot.lane.b32.xlu0 %v806, 32
        %v808 = vpop.permute.xlu0 %807
        %810 = vst.msk [vmem:[#allocation2 + $0x4] sm:$0x3] %vm358, %v808
        %v811 = vcombine.low %v798, %v798
        %v813 = vunpack.c.l.s4 1983009808
        %v814 = vunpack.c.0.s8 %v813
        %v815 = vlaneseq
        %v816 = vshrl.u32 %v815, 7
        %v817 = vsub.s32 %v814, %v816
        %v818 = vrot.slane %v811, %v817
        %819 = vrot.lane.b32.xlu0 %v818, 16
        %v820 = vpop.permute.xlu0 %819
        %822 = vst.msk [vmem:[#allocation2 + $0xc] sm:$0xc] %vm329, %v820
        %823 = vst.msk [vmem:[#allocation2 + $0x1c] sm:$0x3] %vm272, %v798
        %824 = vrot.lane.b32.xlu0 %v818, 31
        %v825 = vpop.permute.xlu0 %824
        %827 = vst.msk [vmem:[#allocation2 + $0x4] sm:$0xc] %vm376, %v825
        %828 = vrot.lane.b32.xlu0 %v806, 15
        %v829 = vpop.permute.xlu0 %828
        %831 = vst.msk [vmem:[#allocation2 + $0x14] sm:$0x3] %vm314, %v829
        %832 = vrot.lane.b32.xlu0 %v818, 127
        %v833 = vpop.permute.xlu0 %832
        %835 = vst.msk [vmem:[#allocation2 + $0x1c] sm:$0xc] %vm286, %v833
        %836 = vrot.lane.b32.xlu0 %v806, 30
        %v837 = vpop.permute.xlu0 %836
        %839 = vst.msk [vmem:[#allocation2 + $0xc] sm:$0x3] %vm358, %v837
        %840 = vrot.lane.b32.xlu0 %v818, 14
        %v841 = vpop.permute.xlu0 %840
        %843 = vst.msk [vmem:[#allocation2 + $0x14] sm:$0xc] %vm329, %v841
        %844 = vrot.lane.b32.xlu0 %v806, 126
        %v845 = vpop.permute.xlu0 %844
        %847 = vst.msk [vmem:[#allocation2 + $0x24] sm:$0x3] %vm272, %v845
        %s848 = sadd.s32 %s268, 11
        %s849 = smul.addr %s848, 2
        %s850 = scalar_lea.vmem %s222, %s849 [#allocation3]
        %v851 = vld [vmem:[%s850] sm:$0x3]
        %v854 = vunpack.c.l.s4 1983009808
        %v855 = vunpack.c.0.s8 %v854
        %v856 = vlaneseq
        %v857 = vshrl.u32 %v856, 7
        %v858 = vsub.s32 %v855, %v857
        %v859 = vrot.slane %v851, %v858
        %860 = vrot.lane.b32.xlu0 %v859, 48
        %v861 = vpop.permute.xlu0 %860
        %863 = vst.msk [vmem:[#allocation2 + $0x4] sm:$0x3] %vm413, %v861
        %v864 = vcombine.low %v851, %v851
        %v866 = vunpack.c.l.s4 1983009808
        %v867 = vunpack.c.0.s8 %v866
        %v868 = vlaneseq
        %v869 = vshrl.u32 %v868, 7
        %v870 = vsub.s32 %v867, %v869
        %v871 = vrot.slane %v864, %v870
        %872 = vrot.lane.b32.xlu0 %v871, 32
        %v873 = vpop.permute.xlu0 %872
        %875 = vst.msk [vmem:[#allocation2 + $0xc] sm:$0xc] %vm376, %v873
        %876 = vrot.lane.b32.xlu0 %v859, 16
        %v877 = vpop.permute.xlu0 %876
        %879 = vst.msk [vmem:[#allocation2 + $0x1c] sm:$0x3] %vm314, %v877
        %880 = vrot.lane.b32.xlu0 %v871, 47
        %v881 = vpop.permute.xlu0 %880
        %883 = vst.msk [vmem:[#allocation2 + $0x4] sm:$0xc] %vm434, %v881
        %884 = vrot.lane.b32.xlu0 %v859, 31
        %v885 = vpop.permute.xlu0 %884
        %887 = vst.msk [vmem:[#allocation2 + $0x14] sm:$0x3] %vm358, %v885
        %888 = vrot.lane.b32.xlu0 %v871, 15
        %v889 = vpop.permute.xlu0 %888
        %891 = vst.msk [vmem:[#allocation2 + $0x1c] sm:$0xc] %vm329, %v889
        %892 = vrot.lane.b32.xlu0 %v859, 46
        %v893 = vpop.permute.xlu0 %892
        %895 = vst.msk [vmem:[#allocation2 + $0xc] sm:$0x3] %vm413, %v893
        %896 = vrot.lane.b32.xlu0 %v871, 30
        %v897 = vpop.permute.xlu0 %896
        %899 = vst.msk [vmem:[#allocation2 + $0x14] sm:$0xc] %vm376, %v897
        %900 = vrot.lane.b32.xlu0 %v859, 14
        %v901 = vpop.permute.xlu0 %900
        %903 = vst.msk [vmem:[#allocation2 + $0x24] sm:$0x3] %vm314, %v901
        %s904 = sadd.s32 %s268, 12
        %s905 = smul.addr %s904, 2
        %s906 = scalar_lea.vmem %s222, %s905 [#allocation3]
        %v907 = vld [vmem:[%s906] sm:$0x3]
        %v910 = vunpack.c.l.s4 1983009808
        %v911 = vunpack.c.0.s8 %v910
        %v912 = vlaneseq
        %v913 = vshrl.u32 %v912, 7
        %v914 = vsub.s32 %v911, %v913
        %v915 = vrot.slane %v907, %v914
        %916 = vrot.lane.b32.xlu0 %v915, 64
        %v917 = vpop.permute.xlu0 %916
        %919 = vst.msk [vmem:[#allocation2 + $0x4] sm:$0x3] %vm471, %v917
        %v920 = vcombine.low %v907, %v907
        %v922 = vunpack.c.l.s4 1983009808
        %v923 = vunpack.c.0.s8 %v922
        %v924 = vlaneseq
        %v925 = vshrl.u32 %v924, 7
        %v926 = vsub.s32 %v923, %v925
        %v927 = vrot.slane %v920, %v926
        %928 = vrot.lane.b32.xlu0 %v927, 48
        %v929 = vpop.permute.xlu0 %928
        %931 = vst.msk [vmem:[#allocation2 + $0xc] sm:$0xc] %vm434, %v929
        %932 = vrot.lane.b32.xlu0 %v915, 32
        %v933 = vpop.permute.xlu0 %932
        %935 = vst.msk [vmem:[#allocation2 + $0x1c] sm:$0x3] %vm358, %v933
        %936 = vrot.lane.b32.xlu0 %v927, 63
        %v937 = vpop.permute.xlu0 %936
        %939 = vst.msk [vmem:[#allocation2 + $0x4] sm:$0xc] %vm492, %v937
        %940 = vrot.lane.b32.xlu0 %v915, 47
        %v941 = vpop.permute.xlu0 %940
        %943 = vst.msk [vmem:[#allocation2 + $0x14] sm:$0x3] %vm413, %v941
        %944 = vrot.lane.b32.xlu0 %v927, 31
        %v945 = vpop.permute.xlu0 %944
        %947 = vst.msk [vmem:[#allocation2 + $0x1c] sm:$0xc] %vm376, %v945
        %948 = vrot.lane.b32.xlu0 %v915, 62
        %v949 = vpop.permute.xlu0 %948
        %951 = vst.msk [vmem:[#allocation2 + $0xc] sm:$0x3] %vm471, %v949
        %952 = vrot.lane.b32.xlu0 %v927, 46
        %v953 = vpop.permute.xlu0 %952
        %955 = vst.msk [vmem:[#allocation2 + $0x14] sm:$0xc] %vm434, %v953
        %956 = vrot.lane.b32.xlu0 %v915, 30
        %v957 = vpop.permute.xlu0 %956
        %959 = vst.msk [vmem:[#allocation2 + $0x24] sm:$0x3] %vm358, %v957
        %s960 = sadd.s32 %s268, 13
        %s961 = smul.addr %s960, 2
        %s962 = scalar_lea.vmem %s222, %s961 [#allocation3]
        %v963 = vld [vmem:[%s962] sm:$0x3]
        %v966 = vunpack.c.l.s4 1983009808
        %v967 = vunpack.c.0.s8 %v966
        %v968 = vlaneseq
        %v969 = vshrl.u32 %v968, 7
        %v970 = vsub.s32 %v967, %v969
        %v971 = vrot.slane %v963, %v970
        %972 = vrot.lane.b32.xlu0 %v971, 80
        %v973 = vpop.permute.xlu0 %972
        %975 = vst.msk [vmem:[#allocation2 + $0x4] sm:$0x3] %vm529, %v973
        %v976 = vcombine.low %v963, %v963
        %v978 = vunpack.c.l.s4 1983009808
        %v979 = vunpack.c.0.s8 %v978
        %v980 = vlaneseq
        %v981 = vshrl.u32 %v980, 7
        %v982 = vsub.s32 %v979, %v981
        %v983 = vrot.slane %v976, %v982
        %984 = vrot.lane.b32.xlu0 %v983, 64
        %v985 = vpop.permute.xlu0 %984
        %987 = vst.msk [vmem:[#allocation2 + $0xc] sm:$0xc] %vm492, %v985
        %988 = vrot.lane.b32.xlu0 %v971, 48
        %v989 = vpop.permute.xlu0 %988
        %991 = vst.msk [vmem:[#allocation2 + $0x1c] sm:$0x3] %vm413, %v989
        %992 = vrot.lane.b32.xlu0 %v983, 79
        %v993 = vpop.permute.xlu0 %992
        %995 = vst.msk [vmem:[#allocation2 + $0x4] sm:$0xc] %vm550, %v993
        %996 = vrot.lane.b32.xlu0 %v971, 63
        %v997 = vpop.permute.xlu0 %996
        %999 = vst.msk [vmem:[#allocation2 + $0x14] sm:$0x3] %vm471, %v997
        %1000 = vrot.lane.b32.xlu0 %v983, 47
        %v1001 = vpop.permute.xlu0 %1000
        %1003 = vst.msk [vmem:[#allocation2 + $0x1c] sm:$0xc] %vm434, %v1001
        %1004 = vrot.lane.b32.xlu0 %v971, 78
        %v1005 = vpop.permute.xlu0 %1004
        %1007 = vst.msk [vmem:[#allocation2 + $0xc] sm:$0x3] %vm529, %v1005
        %1008 = vrot.lane.b32.xlu0 %v983, 62
        %v1009 = vpop.permute.xlu0 %1008
        %1011 = vst.msk [vmem:[#allocation2 + $0x14] sm:$0xc] %vm492, %v1009
        %1012 = vrot.lane.b32.xlu0 %v971, 46
        %v1013 = vpop.permute.xlu0 %1012
        %1015 = vst.msk [vmem:[#allocation2 + $0x24] sm:$0x3] %vm413, %v1013
        %s1016 = sadd.s32 %s268, 14
        %s1017 = smul.addr %s1016, 2
        %s1018 = scalar_lea.vmem %s222, %s1017 [#allocation3]
        %v1019 = vld [vmem:[%s1018] sm:$0x3]
        %v1022 = vunpack.c.l.s4 1983009808
        %v1023 = vunpack.c.0.s8 %v1022
        %v1024 = vlaneseq
        %v1025 = vshrl.u32 %v1024, 7
        %v1026 = vsub.s32 %v1023, %v1025
        %v1027 = vrot.slane %v1019, %v1026
        %1028 = vrot.lane.b32.xlu0 %v1027, 96
        %v1029 = vpop.permute.xlu0 %1028
        %1031 = vst.msk [vmem:[#allocation2 + $0x4] sm:$0x3] %vm587, %v1029
        %v1032 = vcombine.low %v1019, %v1019
        %v1034 = vunpack.c.l.s4 1983009808
        %v1035 = vunpack.c.0.s8 %v1034
        %v1036 = vlaneseq
        %v1037 = vshrl.u32 %v1036, 7
        %v1038 = vsub.s32 %v1035, %v1037
        %v1039 = vrot.slane %v1032, %v1038
        %1040 = vrot.lane.b32.xlu0 %v1039, 80
        %v1041 = vpop.permute.xlu0 %1040
        %1043 = vst.msk [vmem:[#allocation2 + $0xc] sm:$0xc] %vm550, %v1041
        %1044 = vrot.lane.b32.xlu0 %v1027, 64
        %v1045 = vpop.permute.xlu0 %1044
        %1047 = vst.msk [vmem:[#allocation2 + $0x1c] sm:$0x3] %vm471, %v1045
        %1048 = vrot.lane.b32.xlu0 %v1039, 95
        %v1049 = vpop.permute.xlu0 %1048
        %1051 = vst.msk [vmem:[#allocation2 + $0x4] sm:$0xc] %vm608, %v1049
        %1052 = vrot.lane.b32.xlu0 %v1027, 79
        %v1053 = vpop.permute.xlu0 %1052
        %1055 = vst.msk [vmem:[#allocation2 + $0x14] sm:$0x3] %vm529, %v1053
        %1056 = vrot.lane.b32.xlu0 %v1039, 63
        %v1057 = vpop.permute.xlu0 %1056
        %1059 = vst.msk [vmem:[#allocation2 + $0x1c] sm:$0xc] %vm492, %v1057
        %1060 = vrot.lane.b32.xlu0 %v1027, 94
        %v1061 = vpop.permute.xlu0 %1060
        %1063 = vst.msk [vmem:[#allocation2 + $0xc] sm:$0x3] %vm587, %v1061
        %1064 = vrot.lane.b32.xlu0 %v1039, 78
        %v1065 = vpop.permute.xlu0 %1064
        %1067 = vst.msk [vmem:[#allocation2 + $0x14] sm:$0xc] %vm550, %v1065
        %1068 = vrot.lane.b32.xlu0 %v1027, 62
        %v1069 = vpop.permute.xlu0 %1068
        %1071 = vst.msk [vmem:[#allocation2 + $0x24] sm:$0x3] %vm471, %v1069
        %s1072 = sadd.s32 %s268, 15
        %s1073 = smul.addr %s1072, 2
        %s1074 = scalar_lea.vmem %s222, %s1073 [#allocation3]
        %v1075 = vld [vmem:[%s1074] sm:$0x3]
        %v1078 = vunpack.c.l.s4 1983009808
        %v1079 = vunpack.c.0.s8 %v1078
        %v1080 = vlaneseq
        %v1081 = vshrl.u32 %v1080, 7
        %v1082 = vsub.s32 %v1079, %v1081
        %v1083 = vrot.slane %v1075, %v1082
        %1084 = vrot.lane.b32.xlu0 %v1083, 112
        %v1085 = vpop.permute.xlu0 %1084
        %1087 = vst.msk [vmem:[#allocation2 + $0x4] sm:$0x3] %vm645, %v1085
        %v1088 = vcombine.low %v1075, %v1075
        %v1090 = vunpack.c.l.s4 1983009808
        %v1091 = vunpack.c.0.s8 %v1090
        %v1092 = vlaneseq
        %v1093 = vshrl.u32 %v1092, 7
        %v1094 = vsub.s32 %v1091, %v1093
        %v1095 = vrot.slane %v1088, %v1094
        %1096 = vrot.lane.b32.xlu0 %v1095, 96
        %v1097 = vpop.permute.xlu0 %1096
        %1099 = vst.msk [vmem:[#allocation2 + $0xc] sm:$0xc] %vm608, %v1097
        %1100 = vrot.lane.b32.xlu0 %v1083, 80
        %v1101 = vpop.permute.xlu0 %1100
        %1103 = vst.msk [vmem:[#allocation2 + $0x1c] sm:$0x3] %vm529, %v1101
        %1104 = vrot.lane.b32.xlu0 %v1095, 111
        %v1105 = vpop.permute.xlu0 %1104
        %1107 = vst.msk [vmem:[#allocation2 + $0x4] sm:$0xc] %vm666, %v1105
        %1108 = vrot.lane.b32.xlu0 %v1083, 95
        %v1109 = vpop.permute.xlu0 %1108
        %1111 = vst.msk [vmem:[#allocation2 + $0x14] sm:$0x3] %vm587, %v1109
        %1112 = vrot.lane.b32.xlu0 %v1095, 79
        %v1113 = vpop.permute.xlu0 %1112
        %1115 = vst.msk [vmem:[#allocation2 + $0x1c] sm:$0xc] %vm550, %v1113
        %1116 = vrot.lane.b32.xlu0 %v1083, 110
        %v1117 = vpop.permute.xlu0 %1116
        %1119 = vst.msk [vmem:[#allocation2 + $0xc] sm:$0x3] %vm645, %v1117
        %1120 = vrot.lane.b32.xlu0 %v1095, 94
        %v1121 = vpop.permute.xlu0 %1120
        %1123 = vst.msk [vmem:[#allocation2 + $0x14] sm:$0xc] %vm608, %v1121
        %1124 = vrot.lane.b32.xlu0 %v1083, 78
        %v1125 = vpop.permute.xlu0 %1124
        %1127 = vst.msk [vmem:[#allocation2 + $0x24] sm:$0x3] %vm529, %v1125
        %s1128 = sadd.s32 %s268, 16
        %s1129 = smul.addr %s1128, 2
        %s1130 = scalar_lea.vmem %s222, %s1129 [#allocation3]
        %v1131 = vld [vmem:[%s1130] sm:$0x3]
        %v1133 = vcombine.low %v1131, %v1131
        %v1135 = vunpack.c.l.s4 1983009808
        %v1136 = vunpack.c.0.s8 %v1135
        %v1137 = vlaneseq
        %v1138 = vshrl.u32 %v1137, 7
        %v1139 = vsub.s32 %v1136, %v1138
        %v1140 = vrot.slane %v1133, %v1139
        %1141 = vrot.lane.b32.xlu0 %v1140, 112
        %v1142 = vpop.permute.xlu0 %1141
        %1144 = vst.msk [vmem:[#allocation2 + $0xc] sm:$0xc] %vm666, %v1142
        %v1146 = vunpack.c.l.s4 1983009808
        %v1147 = vunpack.c.0.s8 %v1146
        %v1148 = vlaneseq
        %v1149 = vshrl.u32 %v1148, 7
        %v1150 = vsub.s32 %v1147, %v1149
        %v1151 = vrot.slane %v1131, %v1150
        %1152 = vrot.lane.b32.xlu0 %v1151, 96
        %v1153 = vpop.permute.xlu0 %1152
        %1155 = vst.msk [vmem:[#allocation2 + $0x1c] sm:$0x3] %vm587, %v1153
        %1156 = vrot.lane.b32.xlu0 %v1151, 111
        %v1157 = vpop.permute.xlu0 %1156
        %1159 = vst.msk [vmem:[#allocation2 + $0x14] sm:$0x3] %vm645, %v1157
        %1160 = vrot.lane.b32.xlu0 %v1140, 95
        %v1161 = vpop.permute.xlu0 %1160
        %1163 = vst.msk [vmem:[#allocation2 + $0x1c] sm:$0xc] %vm608, %v1161
        %1164 = vrot.lane.b32.xlu0 %v1140, 110
        %v1165 = vpop.permute.xlu0 %1164
        %1167 = vst.msk [vmem:[#allocation2 + $0x14] sm:$0xc] %vm666, %v1165
        %1168 = vrot.lane.b32.xlu0 %v1151, 94
        %v1169 = vpop.permute.xlu0 %1168
        %1171 = vst.msk [vmem:[#allocation2 + $0x24] sm:$0x3] %vm587, %v1169
        %s1172 = sadd.s32 %s268, 17
        %s1173 = smul.addr %s1172, 2
        %s1174 = scalar_lea.vmem %s222, %s1173 [#allocation3]
        %v1175 = vld [vmem:[%s1174] sm:$0x3]
        %v1178 = vunpack.c.l.s4 1983009808
        %v1179 = vunpack.c.0.s8 %v1178
        %v1180 = vlaneseq
        %v1181 = vshrl.u32 %v1180, 7
        %v1182 = vsub.s32 %v1179, %v1181
        %v1183 = vrot.slane %v1175, %v1182
        %1184 = vrot.lane.b32.xlu0 %v1183, 112
        %v1185 = vpop.permute.xlu0 %1184
        %1187 = vst.msk [vmem:[#allocation2 + $0x1c] sm:$0x3] %vm645, %v1185
        %v1188 = vcombine.low %v1175, %v1175
        %v1190 = vunpack.c.l.s4 1983009808
        %v1191 = vunpack.c.0.s8 %v1190
        %v1192 = vlaneseq
        %v1193 = vshrl.u32 %v1192, 7
        %v1194 = vsub.s32 %v1191, %v1193
        %v1195 = vrot.slane %v1188, %v1194
        %1196 = vrot.lane.b32.xlu0 %v1195, 111
        %v1197 = vpop.permute.xlu0 %1196
        %1199 = vst.msk [vmem:[#allocation2 + $0x1c] sm:$0xc] %vm666, %v1197
        %1200 = vrot.lane.b32.xlu0 %v1183, 110
        %v1201 = vpop.permute.xlu0 %1200
        %1203 = vst.msk [vmem:[#allocation2 + $0x24] sm:$0x3] %vm645, %v1201
        %v1204 = vld [vmem:[%s264] sm:$0x11]
        %v1205 = vunpack.c.l.bf16 %v1204
        %v1206 = vunpack.c.h.bf16 %v1204
        %v1207 = vld [vmem:[#allocation2] sm:$0x33]
        %v1208 = vunpack.c.l.bf16 %v1207
        %v1209 = vunpack.c.h.bf16 %v1207
        %v1210 = vlaneseq
        %v1211 = vshrl.u32 %v1210, 7
        %v1212 = vsub.s32 0, %v1211
        %v1213 = vrot.slane %v1205, %v1212
        %v1214 = vlaneseq
        %v1215 = vshrl.u32 %v1214, 7
        %v1216 = vsub.s32 0, %v1215
        %v1217 = vrot.slane %v1206, %v1216
        %v1218 = vmul.f32 %v1208, %v1213
        %v1219 = vmul.f32 %v1209, %v1217
        %v1220 = vld [vmem:[#allocation2] sm:$0xcc]
        %v1221 = vunpack.c.l.bf16 %v1220
        %v1222 = vunpack.c.h.bf16 %v1220
        %v1223 = vlaneseq
        %v1224 = vshrl.u32 %v1223, 7
        %v1225 = vsub.s32 1, %v1224
        %v1226 = vrot.slane %v1205, %v1225
        %v1227 = vlaneseq
        %v1228 = vshrl.u32 %v1227, 7
        %v1229 = vsub.s32 1, %v1228
        %v1230 = vrot.slane %v1206, %v1229
        %v1231 = vmul.f32 %v1221, %v1226
        %v1232 = vmul.f32 %v1222, %v1230
        %v1235 = vrot.slane %v1231, 4
        %v1236 = vrot.slane %v1232, 4
        %v1239 = vadd.f32 %v1218, %v1235
        %v1240 = vadd.f32 %v1219, %v1236
        %v1243 = vrot.slane %v1205, 1
        %v1244 = vrot.slane %v1206, 1
        %v1247 = vadd.f32 %v1205, %v1243
        %v1248 = vadd.f32 %v1206, %v1244
        %v1249 = vld [vmem:[%s264] sm:$0x22]
        %v1250 = vunpack.c.l.bf16 %v1249
        %v1251 = vunpack.c.h.bf16 %v1249
        %v1252 = vld [vmem:[#allocation2 + $0x8] sm:$0x33]
        %v1253 = vunpack.c.l.bf16 %v1252
        %v1254 = vunpack.c.h.bf16 %v1252
        %v1255 = vlaneseq
        %v1256 = vshrl.u32 %v1255, 7
        %v1257 = vsub.s32 2, %v1256
        %v1258 = vrot.slane %v1250, %v1257
        %v1259 = vlaneseq
        %v1260 = vshrl.u32 %v1259, 7
        %v1261 = vsub.s32 2, %v1260
        %v1262 = vrot.slane %v1251, %v1261
        %v1263 = vmul.f32 %v1253, %v1258
        %v1264 = vmul.f32 %v1254, %v1262
        %v1265 = vadd.f32 %v1239, %v1263
        %v1266 = vadd.f32 %v1240, %v1264
        %v1269 = vrot.slane %v1250, 2
        %v1270 = vrot.slane %v1251, 2
        %v1273 = vadd.f32 %v1247, %v1269
        %v1274 = vadd.f32 %v1248, %v1270
        %v1275 = vld [vmem:[#allocation2 + $0x8] sm:$0xcc]
        %v1276 = vunpack.c.l.bf16 %v1275
        %v1277 = vunpack.c.h.bf16 %v1275
        %v1278 = vlaneseq
        %v1279 = vshrl.u32 %v1278, 7
        %v1280 = vsub.s32 3, %v1279
        %v1281 = vrot.slane %v1250, %v1280
        %v1282 = vlaneseq
        %v1283 = vshrl.u32 %v1282, 7
        %v1284 = vsub.s32 3, %v1283
        %v1285 = vrot.slane %v1251, %v1284
        %v1286 = vmul.f32 %v1276, %v1281
        %v1287 = vmul.f32 %v1277, %v1285
        %v1290 = vrot.slane %v1286, 4
        %v1291 = vrot.slane %v1287, 4
        %v1294 = vadd.f32 %v1265, %v1290
        %v1295 = vadd.f32 %v1266, %v1291
        %v1296 = vrot.slane %v1250, 3
        %v1297 = vrot.slane %v1251, 3
        %v1300 = vadd.f32 %v1273, %v1296
        %v1301 = vadd.f32 %v1274, %v1297
        %v1302 = vld [vmem:[%s264] sm:$0x44]
        %v1303 = vunpack.c.l.bf16 %v1302
        %v1304 = vunpack.c.h.bf16 %v1302
        %v1305 = vld [vmem:[#allocation2 + $0x10] sm:$0x33]
        %v1306 = vunpack.c.l.bf16 %v1305
        %v1307 = vunpack.c.h.bf16 %v1305
        %v1308 = vlaneseq
        %v1309 = vshrl.u32 %v1308, 7
        %v1310 = vsub.s32 4, %v1309
        %v1311 = vrot.slane %v1303, %v1310
        %v1312 = vlaneseq
        %v1313 = vshrl.u32 %v1312, 7
        %v1314 = vsub.s32 4, %v1313
        %v1315 = vrot.slane %v1304, %v1314
        %v1316 = vmul.f32 %v1306, %v1311
        %v1317 = vmul.f32 %v1307, %v1315
        %v1318 = vadd.f32 %v1294, %v1316
        %v1319 = vadd.f32 %v1295, %v1317
        %v1322 = vrot.slane %v1303, 4
        %v1323 = vrot.slane %v1304, 4
        %v1326 = vadd.f32 %v1300, %v1322
        %v1327 = vadd.f32 %v1301, %v1323
        %v1328 = vld [vmem:[#allocation2 + $0x10] sm:$0xcc]
        %v1329 = vunpack.c.l.bf16 %v1328
        %v1330 = vunpack.c.h.bf16 %v1328
        %v1331 = vlaneseq
        %v1332 = vshrl.u32 %v1331, 7
        %v1333 = vsub.s32 5, %v1332
        %v1334 = vrot.slane %v1303, %v1333
        %v1335 = vlaneseq
        %v1336 = vshrl.u32 %v1335, 7
        %v1337 = vsub.s32 5, %v1336
        %v1338 = vrot.slane %v1304, %v1337
        %v1339 = vmul.f32 %v1329, %v1334
        %v1340 = vmul.f32 %v1330, %v1338
        %v1343 = vrot.slane %v1339, 4
        %v1344 = vrot.slane %v1340, 4
        %v1347 = vadd.f32 %v1318, %v1343
        %v1348 = vadd.f32 %v1319, %v1344
        %v1349 = vrot.slane %v1303, 5
        %v1350 = vrot.slane %v1304, 5
        %v1353 = vadd.f32 %v1326, %v1349
        %v1354 = vadd.f32 %v1327, %v1350
        %v1355 = vld [vmem:[%s264] sm:$0x88]
        %v1356 = vunpack.c.l.bf16 %v1355
        %v1357 = vunpack.c.h.bf16 %v1355
        %v1358 = vld [vmem:[#allocation2 + $0x18] sm:$0x33]
        %v1359 = vunpack.c.l.bf16 %v1358
        %v1360 = vunpack.c.h.bf16 %v1358
        %v1361 = vlaneseq
        %v1362 = vshrl.u32 %v1361, 7
        %v1363 = vsub.s32 6, %v1362
        %v1364 = vrot.slane %v1356, %v1363
        %v1365 = vlaneseq
        %v1366 = vshrl.u32 %v1365, 7
        %v1367 = vsub.s32 6, %v1366
        %v1368 = vrot.slane %v1357, %v1367
        %v1369 = vmul.f32 %v1359, %v1364
        %v1370 = vmul.f32 %v1360, %v1368
        %v1371 = vadd.f32 %v1347, %v1369
        %v1372 = vadd.f32 %v1348, %v1370
        %v1375 = vrot.slane %v1356, 6
        %v1376 = vrot.slane %v1357, 6
        %v1379 = vadd.f32 %v1353, %v1375
        %v1380 = vadd.f32 %v1354, %v1376
        %v1381 = vld [vmem:[#allocation2 + $0x18] sm:$0xcc]
        %v1382 = vunpack.c.l.bf16 %v1381
        %v1383 = vunpack.c.h.bf16 %v1381
        %v1384 = vlaneseq
        %v1385 = vshrl.u32 %v1384, 7
        %v1386 = vsub.s32 7, %v1385
        %v1387 = vrot.slane %v1356, %v1386
        %v1388 = vlaneseq
        %v1389 = vshrl.u32 %v1388, 7
        %v1390 = vsub.s32 7, %v1389
        %v1391 = vrot.slane %v1357, %v1390
        %v1392 = vmul.f32 %v1382, %v1387
        %v1393 = vmul.f32 %v1383, %v1391
        %v1396 = vrot.slane %v1392, 4
        %v1397 = vrot.slane %v1393, 4
        %v1400 = vadd.f32 %v1371, %v1396
        %v1401 = vadd.f32 %v1372, %v1397
        %v1402 = vrot.slane %v1356, 7
        %v1403 = vrot.slane %v1357, 7
        %v1406 = vadd.f32 %v1379, %v1402
        %v1407 = vadd.f32 %v1380, %v1403
        %v1408 = vld [vmem:[%s264 + $0x8] sm:$0x11]
        %v1409 = vunpack.c.l.bf16 %v1408
        %v1410 = vunpack.c.h.bf16 %v1408
        %v1411 = vld [vmem:[#allocation2 + $0x20] sm:$0x33]
        %v1412 = vunpack.c.l.bf16 %v1411
        %v1413 = vunpack.c.h.bf16 %v1411
        %v1414 = vlaneseq
        %v1415 = vshrl.u32 %v1414, 7
        %v1416 = vsub.s32 0, %v1415
        %v1417 = vrot.slane %v1409, %v1416
        %v1418 = vlaneseq
        %v1419 = vshrl.u32 %v1418, 7
        %v1420 = vsub.s32 0, %v1419
        %v1421 = vrot.slane %v1410, %v1420
        %v1422 = vmul.f32 %v1412, %v1417
        %v1423 = vmul.f32 %v1413, %v1421
        %v1424 = vadd.f32 %v1400, %v1422
        %v1425 = vadd.f32 %v1401, %v1423
        %v1426 = vadd.f32 %v1406, %v1409
        %v1427 = vadd.f32 %v1407, %v1410
        %v1428 = vrcp.pop %v1426
        %v1429 = vrcp.pop %v1427
        %v1430 = vlaneseq
        %v1431 = vshrl.u32 %v1430, 7
        %v1432 = vsub.s32 0, %v1431
        %v1433 = vrot.slane %v1428, %v1432
        %v1434 = vlaneseq
        %v1435 = vshrl.u32 %v1434, 7
        %v1436 = vsub.s32 0, %v1435
        %v1437 = vrot.slane %v1429, %v1436
        %v1438 = vmul.f32 %v1424, %v1433
        %v1439 = vmul.f32 %v1425, %v1437
        %v1440 = vsub.f32 1.0, %v1205
        %v1441 = vsub.f32 1.0, %v1206
        %v1442 = vlaneseq
        %v1443 = vshrl.u32 %v1442, 7
        %v1444 = vsub.s32 0, %v1443
        %v1445 = vrot.slane %v1440, %v1444
        %v1446 = vlaneseq
        %v1447 = vshrl.u32 %v1446, 7
        %v1448 = vsub.s32 0, %v1447
        %v1449 = vrot.slane %v1441, %v1448
        %v1450 = vmul.f32 %v1438, %v1445
        %v1451 = vmul.f32 %v1439, %v1449
        %v1452 = vadd.f32 %v1218, %v1450
        %v1453 = vadd.f32 %v1219, %v1451
        %v1454 = vpack.c.bf16 %v1452, %v1452
        %v1455 = vpack.c.bf16 %v1453, %v1453
        %v1458 = vunpack.c.l.b16 %v1454
        %v1459 = vunpack.c.l.b16 %v1455
        %v1460 = vpack.c.b16 %v1459, %v1458
        %1462 = vst [vmem:[#allocation2] sm:$0x33] %v1460
        %v1463 = vlaneseq
        %v1464 = vshrl.u32 %v1463, 7
        %v1465 = vsub.s32 1, %v1464
        %v1466 = vrot.slane %v1440, %v1465
        %v1467 = vlaneseq
        %v1468 = vshrl.u32 %v1467, 7
        %v1469 = vsub.s32 1, %v1468
        %v1470 = vrot.slane %v1441, %v1469
        %v1471 = vmul.f32 %v1438, %v1466
        %v1472 = vmul.f32 %v1439, %v1470
        %v1475 = vrot.slane %v1471, 4
        %v1476 = vrot.slane %v1472, 4
        %v1479 = vadd.f32 %v1231, %v1475
        %v1480 = vadd.f32 %v1232, %v1476
        %v1481 = vpack.c.bf16 %v1479, %v1479
        %v1482 = vpack.c.bf16 %v1480, %v1480
        %v1485 = vunpack.c.l.b16 %v1481
        %v1486 = vunpack.c.l.b16 %v1482
        %v1487 = vpack.c.b16 %v1486, %v1485
        %1489 = vst [vmem:[#allocation2] sm:$0xcc] %v1487
        %v1490 = vsub.f32 1.0, %v1250
        %v1491 = vsub.f32 1.0, %v1251
        %v1492 = vlaneseq
        %v1493 = vshrl.u32 %v1492, 7
        %v1494 = vsub.s32 2, %v1493
        %v1495 = vrot.slane %v1490, %v1494
        %v1496 = vlaneseq
        %v1497 = vshrl.u32 %v1496, 7
        %v1498 = vsub.s32 2, %v1497
        %v1499 = vrot.slane %v1491, %v1498
        %v1500 = vmul.f32 %v1438, %v1495
        %v1501 = vmul.f32 %v1439, %v1499
        %v1502 = vadd.f32 %v1263, %v1500
        %v1503 = vadd.f32 %v1264, %v1501
        %v1504 = vpack.c.bf16 %v1502, %v1502
        %v1505 = vpack.c.bf16 %v1503, %v1503
        %v1508 = vunpack.c.l.b16 %v1504
        %v1509 = vunpack.c.l.b16 %v1505
        %v1510 = vpack.c.b16 %v1509, %v1508
        %1512 = vst [vmem:[#allocation2 + $0x8] sm:$0x33] %v1510
        %v1513 = vlaneseq
        %v1514 = vshrl.u32 %v1513, 7
        %v1515 = vsub.s32 3, %v1514
        %v1516 = vrot.slane %v1490, %v1515
        %v1517 = vlaneseq
        %v1518 = vshrl.u32 %v1517, 7
        %v1519 = vsub.s32 3, %v1518
        %v1520 = vrot.slane %v1491, %v1519
        %v1521 = vmul.f32 %v1438, %v1516
        %v1522 = vmul.f32 %v1439, %v1520
        %v1525 = vrot.slane %v1521, 4
        %v1526 = vrot.slane %v1522, 4
        %v1529 = vadd.f32 %v1286, %v1525
        %v1530 = vadd.f32 %v1287, %v1526
        %v1531 = vpack.c.bf16 %v1529, %v1529
        %v1532 = vpack.c.bf16 %v1530, %v1530
        %v1535 = vunpack.c.l.b16 %v1531
        %v1536 = vunpack.c.l.b16 %v1532
        %v1537 = vpack.c.b16 %v1536, %v1535
        %1539 = vst [vmem:[#allocation2 + $0x8] sm:$0xcc] %v1537
        %v1540 = vsub.f32 1.0, %v1303
        %v1541 = vsub.f32 1.0, %v1304
        %v1542 = vlaneseq
        %v1543 = vshrl.u32 %v1542, 7
        %v1544 = vsub.s32 4, %v1543
        %v1545 = vrot.slane %v1540, %v1544
        %v1546 = vlaneseq
        %v1547 = vshrl.u32 %v1546, 7
        %v1548 = vsub.s32 4, %v1547
        %v1549 = vrot.slane %v1541, %v1548
        %v1550 = vmul.f32 %v1438, %v1545
        %v1551 = vmul.f32 %v1439, %v1549
        %v1552 = vadd.f32 %v1316, %v1550
        %v1553 = vadd.f32 %v1317, %v1551
        %v1554 = vpack.c.bf16 %v1552, %v1552
        %v1555 = vpack.c.bf16 %v1553, %v1553
        %v1558 = vunpack.c.l.b16 %v1554
        %v1559 = vunpack.c.l.b16 %v1555
        %v1560 = vpack.c.b16 %v1559, %v1558
        %1562 = vst [vmem:[#allocation2 + $0x10] sm:$0x33] %v1560
        %v1563 = vlaneseq
        %v1564 = vshrl.u32 %v1563, 7
        %v1565 = vsub.s32 5, %v1564
        %v1566 = vrot.slane %v1540, %v1565
        %v1567 = vlaneseq
        %v1568 = vshrl.u32 %v1567, 7
        %v1569 = vsub.s32 5, %v1568
        %v1570 = vrot.slane %v1541, %v1569
        %v1571 = vmul.f32 %v1438, %v1566
        %v1572 = vmul.f32 %v1439, %v1570
        %v1575 = vrot.slane %v1571, 4
        %v1576 = vrot.slane %v1572, 4
        %v1579 = vadd.f32 %v1339, %v1575
        %v1580 = vadd.f32 %v1340, %v1576
        %v1581 = vpack.c.bf16 %v1579, %v1579
        %v1582 = vpack.c.bf16 %v1580, %v1580
        %v1585 = vunpack.c.l.b16 %v1581
        %v1586 = vunpack.c.l.b16 %v1582
        %v1587 = vpack.c.b16 %v1586, %v1585
        %1589 = vst [vmem:[#allocation2 + $0x10] sm:$0xcc] %v1587
        %v1590 = vsub.f32 1.0, %v1356
        %v1591 = vsub.f32 1.0, %v1357
        %v1592 = vlaneseq
        %v1593 = vshrl.u32 %v1592, 7
        %v1594 = vsub.s32 6, %v1593
        %v1595 = vrot.slane %v1590, %v1594
        %v1596 = vlaneseq
        %v1597 = vshrl.u32 %v1596, 7
        %v1598 = vsub.s32 6, %v1597
        %v1599 = vrot.slane %v1591, %v1598
        %v1600 = vmul.f32 %v1438, %v1595
        %v1601 = vmul.f32 %v1439, %v1599
        %v1602 = vadd.f32 %v1369, %v1600
        %v1603 = vadd.f32 %v1370, %v1601
        %v1604 = vpack.c.bf16 %v1602, %v1602
        %v1605 = vpack.c.bf16 %v1603, %v1603
        %v1608 = vunpack.c.l.b16 %v1604
        %v1609 = vunpack.c.l.b16 %v1605
        %v1610 = vpack.c.b16 %v1609, %v1608
        %1612 = vst [vmem:[#allocation2 + $0x18] sm:$0x33] %v1610
        %v1613 = vlaneseq
        %v1614 = vshrl.u32 %v1613, 7
        %v1615 = vsub.s32 7, %v1614
        %v1616 = vrot.slane %v1590, %v1615
        %v1617 = vlaneseq
        %v1618 = vshrl.u32 %v1617, 7
        %v1619 = vsub.s32 7, %v1618
        %v1620 = vrot.slane %v1591, %v1619
        %v1621 = vmul.f32 %v1438, %v1616
        %v1622 = vmul.f32 %v1439, %v1620
        %v1625 = vrot.slane %v1621, 4
        %v1626 = vrot.slane %v1622, 4
        %v1629 = vadd.f32 %v1392, %v1625
        %v1630 = vadd.f32 %v1393, %v1626
        %v1631 = vpack.c.bf16 %v1629, %v1629
        %v1632 = vpack.c.bf16 %v1630, %v1630
        %v1635 = vunpack.c.l.b16 %v1631
        %v1636 = vunpack.c.l.b16 %v1632
        %v1637 = vpack.c.b16 %v1636, %v1635
        %1639 = vst [vmem:[#allocation2 + $0x18] sm:$0xcc] %v1637
        %v1640 = vsub.f32 1.0, %v1409
        %v1641 = vsub.f32 1.0, %v1410
        %v1642 = vlaneseq
        %v1643 = vshrl.u32 %v1642, 7
        %v1644 = vsub.s32 0, %v1643
        %v1645 = vrot.slane %v1640, %v1644
        %v1646 = vlaneseq
        %v1647 = vshrl.u32 %v1646, 7
        %v1648 = vsub.s32 0, %v1647
        %v1649 = vrot.slane %v1641, %v1648
        %v1650 = vmul.f32 %v1438, %v1645
        %v1651 = vmul.f32 %v1439, %v1649
        %v1652 = vadd.f32 %v1422, %v1650
        %v1653 = vadd.f32 %v1423, %v1651
        %v1654 = vpack.c.bf16 %v1652, %v1652
        %v1655 = vpack.c.bf16 %v1653, %v1653
        %v1658 = vunpack.c.l.b16 %v1654
        %v1659 = vunpack.c.l.b16 %v1655
        %v1660 = vpack.c.b16 %v1659, %v1658
        %1662 = vst [vmem:[#allocation2 + $0x20] sm:$0x33] %v1660
        %v1663 = vld [vmem:[%s2] sm:$0xf]
        %v1664 = vld [vmem:[#allocation2] sm:$0xff]
        %v1665 = vld [vmem:[#allocation2 + $0x8] sm:$0xff]
        %v1666 = vld [vmem:[#allocation2 + $0x10] sm:$0xff]
        %v1667 = vld [vmem:[#allocation2 + $0x18] sm:$0xff]
        %v1668 = vld [vmem:[#allocation2 + $0x20] sm:$0x33]
        %v1669 = vld [vmem:[%s3] sm:$0xff]
        %1671 = vset.pattern.permute.xlu0 0
        %1672 = vperm.xlu0 %1671, %v1669
        %v1673 = vpop.permute.xlu0 %1672
        %v1680 = vunpack.c.l.b16 %v1664
        %v1681 = vunpack.c.h.b16 %v1664
        %v1682 = vunpack.c.l.b16 %v1665
        %v1683 = vunpack.c.h.b16 %v1665
        %v1684 = vunpack.c.l.b16 %v1666
        %v1685 = vunpack.c.h.b16 %v1666
        %v1686 = vunpack.c.l.b16 %v1667
        %v1687 = vunpack.c.h.b16 %v1667
        %v1688 = vunpack.c.l.b16 %v1668
        %v1689 = vunpack.c.h.b16 %v1668
        %v1690 = vpack.c.b16 %v1682, %v1680
        %v1691 = vpack.c.b16 %v1683, %v1681
        %v1692 = vpack.c.b16 %v1686, %v1684
        %v1693 = vpack.c.b16 %v1687, %v1685
        %v1694 = vpack.c.b16 %v1688, %v1688
        %v1695 = vpack.c.b16 %v1689, %v1689
        %vm1700 = vcmask 293888
        %v1702 = vsel %vm1700, %v1663, 0
        %vm1704 = vcmask 1041408
        %v1706 = vsel %vm1704, %v1694, 0
        %v1709 = vsel %vm1704, %v1695, 0
        %1711 = vmatprep.subr.bf16.mxu0 %v1691
        %1712 = vmatpush1.bf16.msra.mxu0 %v1690
        %1713 = vmatprep.subr.bf16.mxu0 %v1693
        %1714 = vmatpush1.bf16.msra.mxu0 %v1692
        %1715 = vmatprep.subr.bf16.mxu0 %v1709
        %1716 = vmatpush1.bf16.msra.mxu0 %v1706
        %1717 = vmatprep.subr.bf16.mxu0 0
        %1718 = vmatpush1.bf16.msra.mxu0 0
        %1719 = vmatprep.subr.bf16.mxu0 0
        %1720 = vmatpush1.bf16.msra.mxu0 0
        %1721 = vmatprep.subr.bf16.mxu0 0
        %1722 = vmatpush1.bf16.msra.mxu0 0
        %1723 = vmatprep.subr.bf16.mxu0 0
        %1724 = vmatpush1.bf16.msra.mxu0 0
        %1725 = vmatprep.subr.bf16.mxu0 0
        %1726 = vmatpush1.bf16.msra.mxu0 0
        %1727 = vmatprep.subr.bf16.mxu0 0
        %1728 = vmatpush1.bf16.msra.mxu0 0
        %1729 = vmatprep.subr.bf16.mxu0 0
        %1730 = vmatpush1.bf16.msra.mxu0 0
        %1731 = vmatprep.subr.bf16.mxu0 0
        %1732 = vmatpush1.bf16.msra.mxu0 0
        %1733 = vmatprep.subr.bf16.mxu0 0
        %1734 = vmatpush1.bf16.msra.mxu0 0
        %1735 = vmatprep.subr.bf16.mxu0 0
        %1736 = vmatpush1.bf16.msra.mxu0 0
        %1737 = vmatprep.subr.bf16.mxu0 0
        %1738 = vmatpush1.bf16.msra.mxu0 0
        %1739 = vmatprep.subr.bf16.mxu0 0
        %1740 = vmatpush1.bf16.msra.mxu0 0
        %1741 = vmatprep.subr.bf16.mxu0 0
        %1742 = vmatpush1.bf16.msra.mxu0 0
        %1743 = vmatprep.mubr.bf16.mxu0 0
        %1744 = vmatmul.mubr.bf16.gmra.mrb[0].mxu0 %v1702
        %v1745 = vpop.f32.mrb[0].mxu0
        %v1746 = vadd.f32 %v1673, %v1745
        %v1747 = vpop.f32.mrb[0].mxu0
        %v1748 = vadd.f32 %v1673, %v1747
        %v1749 = vpop.f32.mrb[0].mxu0
        %v1750 = vpop.f32.mrb[0].mxu0
        %1751 = vdwg.mxu0
        %v1752 = vpack.c.bf16 %v1746, %v1746
        %v1753 = vpack.c.bf16 %v1748, %v1748
        %v1756 = vunpack.c.l.b16 %v1752
        %v1757 = vunpack.c.l.b16 %v1753
        %v1758 = vpack.c.b16 %v1757, %v1756
        %1760 = vst [vmem:[%s255] sm:$0xff] %v1758
        %s1761 = sand.u32 %s139, 1
        %s1762 = scalar_lea.sflag [#allocation5], %s1761
        %s1763 = sand.u32 %s139, 1
        %s1764 = smul.addr %s1763, 8
        %s1765 = scalar_lea.vmem [#allocation6], %s1764
        // Predicated region
        $region41: #{tpu_custom_call.1} parent=35 // pred_check
          %p1766 = pneg %p149
        $region42: #{tpu_custom_call.1} parent=35 // pred_check_branch
          %1768 = sbr.rel (%p1766) target = $region44
        $region43: #{tpu_custom_call.1} parent=35 // pred_region
          %s1769 = smul.u32 2, %s26
          %s1771 = ssub.s32 128, 128
          %1772 = vsyncadd %s1762, %s1771
          %s1773 = smul.addr %s25, 2
          %s1774 = sadd.s32 %s1769, %s1773
          %s1775 = smul.addr %s1774, 64
          %s1776 = scalar_lea.hbm %s4, %s1775
          %s1778 = sshll.u32 %s1765, 4
          %s1779 = int_to_ptr.vmem [resolvable:$true] %s1778
          %1781 = dma.vmem_to_hbm [thread:$0]  %s1779, 128, %s1776, %s1762
        $region44: #{tpu_custom_call.1} parent=35 // pred_fallthru
          _
      $region36: #{tpu_custom_call.1} parent=5 // pred_fallthru
        _
      %p1782 = scmp.le.s32.totalorder 2, %s16
      // Predicated region
      $region45: #{tpu_custom_call.1} parent=5 // pred_check
        %p1783 = pneg %p1782
      $region46: #{tpu_custom_call.1} parent=5 // pred_check_branch
        %1785 = sbr.rel (%p1783) target = $region48
      $region47: #{tpu_custom_call.1} parent=5 // pred_region
        %s1786 = ssub.s32 %s16, 2
        // Predicated region
        $region49: #{tpu_custom_call.1} parent=47 // pred_check
          %p1787 = pneg %p155
        $region50: #{tpu_custom_call.1} parent=47 // pred_check_branch
          %1789 = sbr.rel (%p1787) target = $region52
        $region51: #{tpu_custom_call.1} parent=47 // pred_region
          %s1790 = sand.u32 %s140, 1
          %s1791 = scalar_lea.sflag [#allocation5], %s1790
          %s1792 = sand.u32 %s140, 1
          %s1793 = smul.addr %s1792, 8
          %s1794 = scalar_lea.vmem [#allocation6], %s1793
          %1795 = dma.done %s1791, 128
        $region52: #{tpu_custom_call.1} parent=47 // pred_fallthru
          _
      $region48: #{tpu_custom_call.1} parent=5 // pred_fallthru
        _
    $region6: #{tpu_custom_call.1} parent=1 // loop_footer
      %s20 = sadd.s32 1, %s16
    $region7: #{tpu_custom_call.1} parent=1 // loop_footer_branch
      %15 = sbr.rel target = $region3
    $region8: #{tpu_custom_call.1} parent=1 // loop_exit
      _
    %1796 = vsyncpa [#allocation4], 1
    %s1797 = scalar_lea.sflag [#allocation4], 1
    %1798 = vsyncpa %s1797, 1
    %1799 = vsyncpa [#allocation5], 1
    %s1800 = scalar_lea.sflag [#allocation5], 1
    %1801 = vsyncpa %s1800, 1

</llo_original>
